<compile_context>
chip_gen: v7x
topology: tpu7x:2x2x1
jax: 0.10.0
libtpu: 0.0.40
codegen_flags: <defaults>
</compile_context>

<pallas_src>
import jax
import jax.numpy as jnp
import numpy as np
from jax.experimental import pallas as pl
from jax.experimental.pallas import tpu as pltpu


# --------------------------------------------------------------------------------------
# Packed small-weight slab layout
# --------------------------------------------------------------------------------------
def _ru8(v):
    return (v + 7) // 8 * 8


def _layout(num_features, edge_in, dim):
    F1, A1 = num_features + 1, edge_in + 1
    lay = {}
    lay["w0"] = 0                        # lin0 (bias-augmented)        [F1, d]
    lay["w1"] = _ru8(F1)                 # edge-nn layer0 (augmented)   [A1, 128]
    lay["gru"] = lay["w1"] + _ru8(A1)    # fused GRU weights            [2d, 4d]
    lay["lstm"] = lay["gru"] + 2 * dim   # fused Set2Set LSTM weights   [3d, 4d]
    lay["bias"] = lay["lstm"] + 3 * dim  # gru_bias / lstm_bias / conv_bias rows
    lay["rows"] = _ru8(lay["bias"] + 3)
    lay["lanes"] = max(128, 4 * dim)
    return lay


# --------------------------------------------------------------------------------------
# Pallas kernel
# --------------------------------------------------------------------------------------
def make_sup_encoder_kernel(num_features, edge_in, dim, num_conv_iters=3, set2set_steps=3):
    d = dim
    F1, A1 = num_features + 1, edge_in + 1
    lay = _layout(num_features, edge_in, dim)
    r_w0, r_w1, r_gru, r_lstm, r_b = lay["w0"], lay["w1"], lay["gru"], lay["lstm"], lay["bias"]
    f32, bf16 = jnp.float32, jnp.bfloat16

    def kernel(x_ref, ea_ref, srcoh_ref, dstT_ref, boh_ref, bohT_ref,
               ws_ref, wb_ref, rexp_ref, out_ref, feat_ref, h_s, agg_s):
        it = pl.program_id(0)          # conv iteration (0..2)
        et = pl.program_id(1)          # edge tile
        n_it = pl.num_programs(0)
        n_et = pl.num_programs(1)

        dot = lambda a, b: jnp.dot(a, b, preferred_element_type=f32)
        bdot = lambda a, b: jnp.dot(a.astype(bf16), b.astype(bf16), preferred_element_type=f32)
        relu = lambda v: jnp.maximum(v, 0.0)
        sig = jax.nn.sigmoid

        # ---- unpack the resident weight slabs (static slices) ----
        ws = ws_ref[...]
        w0 = ws[r_w0:r_w0 + F1, 0:d]
        w1 = ws[r_w1:r_w1 + A1, 0:128]
        gru_w = ws[r_gru:r_gru + 2 * d, 0:4 * d]
        lstm_w = ws[r_lstm:r_lstm + 3 * d, 0:4 * d]
        gru_b = ws[r_b:r_b + 1, 0:4 * d]
        lstm_b = ws[r_b + 1:r_b + 2, 0:4 * d]
        conv_b = ws[r_b + 2:r_b + 3, 0:d]
        w2 = wb_ref[0:128, :]                     # [128, d*d]
        b2 = wb_ref[128:129, :]                   # [1, d*d]

        # ---- lin0 + ReLU: initialize node state on the very first grid step ----
        @pl.when(jnp.logical_and(it == 0, et == 0))
        def _():
            h_s[...] = relu(dot(x_ref[...], w0))

        # ---- zero the scatter-mean accumulator at the start of each conv iteration ----
        @pl.when(et == 0)
        def _():
            agg_s[...] = jnp.zeros_like(agg_s)

        # ---- NNConv partial for this edge tile (aggr='mean', root_weight=False) ----
        e1 = relu(dot(ea_ref[...], w1))           # edge-nn layer0        [tE, 128]
        wflat = dot(e1, w2) + b2                  # per-edge W_e (i*d+k)  [tE, d*d]

        out_cur = h_s[...]                        # current node features [N, d]
        x_src = bdot(srcoh_ref[...], out_cur)     # gather x_j            [tE, d]
        x_exp = bdot(x_src, rexp_ref[...])        # lane-expand           [tE, d*d]
        prod = x_exp * wflat                      # per-edge products     [tE, d*d]

        # reduce over i (stride-d groups) with log2(d) VPU fold-adds (no rsum matmul)
        width = d * d
        while width > d and width % 2 == 0 and (width // 2) % d == 0:
            half = width // 2
            prod = prod[:, 0:half] + prod[:, half:width]
            width = half
        msg = prod[:, 0:d]
        for i in range(1, width // d):
            msg = msg + prod[:, i * d:(i + 1) * d]

        agg_s[...] += bdot(dstT_ref[...], msg)    # scatter-mean (deg_inv pre-folded)

        # ---- end of conv iteration: fused single-dot GRU cell ----
        @pl.when(et == n_et - 1)
        def _():
            m = relu(agg_s[...] + conv_b)
            h_prev = h_s[...]
            # gate lanes: [r_sum | z_sum | gi_n | gh_n]  (4d = 128 lanes)
            g = dot(jnp.concatenate([m, h_prev], axis=-1), gru_w) + gru_b
            r = sig(g[:, 0:d])
            z = sig(g[:, d:2 * d])
            n = jnp.tanh(g[:, 2 * d:3 * d] + r * g[:, 3 * d:4 * d])
            h_s[...] = (1.0 - z) * n + z * h_prev

        # ---- very last grid step: feature map + Set2Set ----
        @pl.when(jnp.logical_and(it == n_it - 1, et == n_et - 1))
        def _():
            outn = h_s[...]
            feat_ref[...] = outn
            boh = boh_ref[...]                                        # f32, VPU-side masks
            B = boh.shape[1]
            q = jnp.zeros((B, d), f32)
            rstar = jnp.zeros((B, d), f32)
            hl = jnp.zeros((B, d), f32)
            cl = jnp.zeros((B, d), f32)
            for step in range(set2set_steps):
                if step == 0:
                    g = jnp.broadcast_to(lstm_b, (B, 4 * d))          # q, rstar, hl all zero
                else:
                    g = dot(jnp.concatenate([q, rstar, hl], axis=-1), lstm_w) + lstm_b
                i_g = sig(g[:, 0:d])
                f_g = sig(g[:, d:2 * d])
                g_g = jnp.tanh(g[:, 2 * d:3 * d])
                o_g = sig(g[:, 3 * d:4 * d])
                cl = f_g * cl + i_g * g_g
                hl = o_g * jnp.tanh(cl)
                q = hl                                                # [B, d]

                q_nodes = dot(boh, q)                                 # q[batch]   [N, d]
                e = jnp.sum(outn * q_nodes, axis=-1, keepdims=True)   # [N, 1]
                masked = jnp.where(boh > 0, e, -1e30)                 # [N, B]
                seg_max = jnp.max(masked, axis=0, keepdims=True)      # [1, B]
                node_max = jnp.sum(boh * seg_max, axis=1, keepdims=True)
                ex = jnp.exp(e - node_max)                            # [N, 1]
                seg_sum = jnp.sum(boh * ex, axis=0, keepdims=True)    # [1, B]
                node_sum = jnp.sum(boh * seg_sum, axis=1, keepdims=True)
                a = ex / node_sum
                rstar = bdot(bohT_ref[...], a * outn)                 # scatter_add [B, d]
            out_ref[...] = jnp.concatenate([q, rstar], axis=-1)       # q_star [B, 2d]

    return kernel


# --------------------------------------------------------------------------------------
# Parameters (deterministic, PyTorch layouts per SUPEncoder.__init__ shapes)
# --------------------------------------------------------------------------------------
def init_params(key, num_features, dim):
    def nrm(k, shape, scale):
        return scale * jax.random.normal(k, shape, jnp.float32)

    ks = jax.random.split(key, 16)
    return {
        "lin0_w": nrm(ks[0], (dim, num_features), 0.3),     # Linear(num_features, dim)
        "lin0_b": nrm(ks[1], (dim,), 0.1),
        "nn0_w": nrm(ks[2], (128, 5), 0.3),                 # Linear(5, 128)
        "nn0_b": nrm(ks[3], (128,), 0.1),
        "nn2_w": nrm(ks[4], (dim * dim, 128), 0.08),        # Linear(128, dim*dim)
        "nn2_b": nrm(ks[5], (dim * dim,), 0.05),
        "conv_b": nrm(ks[6], (dim,), 0.05),                 # NNConv bias
        "gru_wih": nrm(ks[7], (3 * dim, dim), 0.15),        # GRU(dim, dim)
        "gru_whh": nrm(ks[8], (3 * dim, dim), 0.15),
        "gru_bih": nrm(ks[9], (3 * dim,), 0.05),
        "gru_bhh": nrm(ks[10], (3 * dim,), 0.05),
        "lstm_wih": nrm(ks[11], (4 * dim, 2 * dim), 0.15),  # Set2Set LSTM(2*dim, dim)
        "lstm_whh": nrm(ks[12], (4 * dim, dim), 0.15),
        "lstm_bih": nrm(ks[13], (4 * dim,), 0.05),
        "lstm_bhh": nrm(ks[14], (4 * dim,), 0.05),
    }


# --------------------------------------------------------------------------------------
# Host-side packing of kernel operands
# --------------------------------------------------------------------------------------
def _kernel_args(x, edge_index, batch, edge_attr, params, num_graphs, dim, tile_e):
    x = np.asarray(x, np.float32)
    edge_index = np.asarray(edge_index)
    batch = np.asarray(batch)
    edge_attr = np.asarray(edge_attr, np.float32)
    N, F = x.shape
    E, edge_in = edge_attr.shape
    B, d = num_graphs, dim
    p = {k: np.asarray(v, np.float32) for k, v in params.items()}
    lay = _layout(F, edge_in, d)

    assert tile_e % 128 == 0, "edge tile must be a multiple of 128 lanes"
    Epad = -(-E // tile_e) * tile_e
    n_et = Epad // tile_e

    src, dst = edge_index[0], edge_index[1]

    src_oh = np.zeros((Epad, N), np.float32)                 # zero rows for padded edges
    src_oh[np.arange(E), src] = 1.0
    dst_oh = np.zeros((E, N), np.float32)
    dst_oh[np.arange(E), dst] = 1.0
    deg = dst_oh.sum(axis=0)
    deg_inv = np.where(deg > 0, 1.0 / np.maximum(deg, 1.0), 0.0)
    dstT_scaled = np.zeros((N, Epad), np.float32)
    dstT_scaled[:, :E] = dst_oh.T * deg_inv[:, None]         # scatter-mean folded in

    boh = np.zeros((N, B), np.float32)
    boh[np.arange(N), batch] = 1.0
    bohT = boh.T

    x_aug = np.concatenate([x, np.ones((N, 1), np.float32)], axis=1)
    ea_pad = np.zeros((Epad, edge_in + 1), np.float32)
    ea_pad[:E, :edge_in] = edge_attr
    ea_pad[:E, edge_in] = 1.0

    # --- small weight slab [rows, 128] ---
    ws = np.zeros((lay["rows"], lay["lanes"]), np.float32)
    ws[lay["w0"]:lay["w0"] + F + 1, 0:d] = np.concatenate(
        [p["lin0_w"].T, p["lin0_b"][None, :]], axis=0)
    ws[lay["w1"]:lay["w1"] + edge_in + 1, 0:128] = np.concatenate(
        [p["nn0_w"].T, p["nn0_b"][None, :]], axis=0)

    gih, ghh, gbih, gbhh = p["gru_wih"], p["gru_whh"], p["gru_bih"], p["gru_bhh"]
    gru_f = np.zeros((2 * d, 4 * d), np.float32)             # lanes: r | z | gi_n | gh_n
    gru_f[0:d, 0:d] = gih[0:d].T
    gru_f[0:d, d:2 * d] = gih[d:2 * d].T
    gru_f[0:d, 2 * d:3 * d] = gih[2 * d:3 * d].T
    gru_f[d:2 * d, 0:d] = ghh[0:d].T
    gru_f[d:2 * d, d:2 * d] = ghh[d:2 * d].T
    gru_f[d:2 * d, 3 * d:4 * d] = ghh[2 * d:3 * d].T
    gru_bias = np.concatenate([gbih[0:d] + gbhh[0:d], gbih[d:2 * d] + gbhh[d:2 * d],
                               gbih[2 * d:3 * d], gbhh[2 * d:3 * d]])
    ws[lay["gru"]:lay["gru"] + 2 * d, 0:4 * d] = gru_f

    lwih, lwhh = p["lstm_wih"], p["lstm_whh"]                # gates i, f, g, o
    lstm_f = np.zeros((3 * d, 4 * d), np.float32)
    lstm_f[0:d] = lwih[:, 0:d].T                             # q half
    lstm_f[d:2 * d] = lwih[:, d:2 * d].T                     # r half
    lstm_f[2 * d:3 * d] = lwhh.T
    ws[lay["lstm"]:lay["lstm"] + 3 * d, 0:4 * d] = lstm_f

    ws[lay["bias"], 0:4 * d] = gru_bias
    ws[lay["bias"] + 1, 0:4 * d] = p["lstm_bih"] + p["lstm_bhh"]
    ws[lay["bias"] + 2, 0:d] = p["conv_b"]

    # --- edge-nn second layer slab (f32): W2 rows 0:128, b2 row 128 ---
    wb = np.zeros((_ru8(129), d * d), np.float32)
    wb[0:128, :] = p["nn2_w"].T
    wb[128, :] = p["nn2_b"]

    # --- lane expander (0/1, exact in bf16): rexp[i, i*d+k] = 1 ---
    cols = np.arange(d * d)
    rexp = (cols[None, :] // d == np.arange(d)[:, None]).astype(np.float32)

    args = [jnp.asarray(x_aug), jnp.asarray(ea_pad),
            jnp.asarray(src_oh, dtype=jnp.bfloat16),
            jnp.asarray(dstT_scaled, dtype=jnp.bfloat16),
            jnp.asarray(boh),
            jnp.asarray(bohT, dtype=jnp.bfloat16),
            jnp.asarray(ws), jnp.asarray(wb),
            jnp.asarray(rexp, dtype=jnp.bfloat16)]
    return args, n_et


def sup_encoder_forward(x, edge_index, batch, edge_attr, params, num_graphs, dim,
                        tile_e=128, num_conv_iters=3, set2set_steps=3):
    N, F = x.shape
    edge_in = edge_attr.shape[1]
    B, d = num_graphs, dim
    F1, A1 = F + 1, edge_in + 1
    lay = _layout(F, edge_in, d)
    wb_rows = _ru8(129)
    args, n_et = _kernel_args(x, edge_index, batch, edge_attr, params, num_graphs, dim, tile_e)

    in_specs = [
        pl.BlockSpec((N, F1), lambda it, et: (0, 0)),               # x_aug (resident)
        pl.BlockSpec((tile_e, A1), lambda it, et: (et, 0)),         # edge_attr tile (streamed)
        pl.BlockSpec((tile_e, N), lambda it, et: (et, 0)),          # src one-hot tile (bf16)
        pl.BlockSpec((N, tile_e), lambda it, et: (0, et)),          # deg-scaled dst^T tile (bf16)
        pl.BlockSpec((N, B), lambda it, et: (0, 0)),                # batch one-hot (f32)
        pl.BlockSpec((B, N), lambda it, et: (0, 0)),                # batch one-hot^T (bf16)
        pl.BlockSpec((lay["rows"], lay["lanes"]), lambda it, et: (0, 0)),   # small weights
        pl.BlockSpec((wb_rows, d * d), lambda it, et: (0, 0)),              # edge-nn layer1
        pl.BlockSpec((d, d * d), lambda it, et: (0, 0)),                    # lane expander
    ]
    out_specs = (pl.BlockSpec((B, 2 * d), lambda it, et: (0, 0)),
                 pl.BlockSpec((N, d), lambda it, et: (0, 0)))
    out_shape = (jax.ShapeDtypeStruct((B, 2 * d), jnp.float32),
                 jax.ShapeDtypeStruct((N, d), jnp.float32))

    return pl.pallas_call(
        make_sup_encoder_kernel(F, edge_in, d, num_conv_iters, set2set_steps),
        grid=(num_conv_iters, n_et),
        in_specs=in_specs,
        out_specs=out_specs,
        out_shape=out_shape,
        scratch_shapes=[pltpu.VMEM((N, d), jnp.float32),    # node state out/h (persistent)
                        pltpu.VMEM((N, d), jnp.float32)],   # scatter-mean accumulator
        compiler_params=pltpu.CompilerParams(
            dimension_semantics=("arbitrary", "arbitrary"),
            vmem_limit_bytes=48 * 1024 * 1024),
    )(*args)


# --------------------------------------------------------------------------------------
# Pure-JAX reference (mirrors PyTorch semantics) for a correctness check
# --------------------------------------------------------------------------------------
def sup_encoder_reference(x, edge_index, batch, edge_attr, p, num_graphs, dim):
    hp = jax.lax.Precision.HIGHEST
    dot = lambda a, b: jnp.dot(a, b, precision=hp)
    relu = lambda v: jnp.maximum(v, 0.0)
    sig = jax.nn.sigmoid
    N = x.shape[0]
    src, dst = edge_index[0], edge_index[1]

    out = relu(dot(x, p["lin0_w"].T) + p["lin0_b"])
    h = out
    e1 = relu(dot(edge_attr, p["nn0_w"].T) + p["nn0_b"])
    W = (dot(e1, p["nn2_w"].T) + p["nn2_b"]).reshape(-1, dim, dim)
    deg = jax.ops.segment_sum(jnp.ones_like(dst, jnp.float32), dst, N)
    deg_inv = jnp.where(deg > 0, 1.0 / deg, 0.0)

    wih, whh, bih, bhh = p["gru_wih"], p["gru_whh"], p["gru_bih"], p["gru_bhh"]
    for _ in range(3):
        x_src = out[src]
        msg = jnp.einsum("ed,edk->ek", x_src, W, precision=hp)
        agg = jax.ops.segment_sum(msg, dst, N) * deg_inv[:, None]
        m = relu(agg + p["conv_b"])
        gi = dot(m, wih.T) + bih
        gh = dot(h, whh.T) + bhh
        r = sig(gi[:, :dim] + gh[:, :dim])
        z = sig(gi[:, dim:2 * dim] + gh[:, dim:2 * dim])
        n = jnp.tanh(gi[:, 2 * dim:] + r * gh[:, 2 * dim:])
        h = (1.0 - z) * n + z * h
        out = h
    feat = out

    B = num_graphs
    lwih, lwhh, lbih, lbhh = p["lstm_wih"], p["lstm_whh"], p["lstm_bih"], p["lstm_bhh"]
    q_star = jnp.zeros((B, 2 * dim), jnp.float32)
    hl = jnp.zeros((B, dim), jnp.float32)
    cl = jnp.zeros((B, dim), jnp.float32)
    for _ in range(3):
        g = dot(q_star, lwih.T) + lbih + dot(hl, lwhh.T) + lbhh
        i_g = sig(g[:, :dim]); f_g = sig(g[:, dim:2 * dim])
        g_g = jnp.tanh(g[:, 2 * dim:3 * dim]); o_g = sig(g[:, 3 * dim:])
        cl = f_g * cl + i_g * g_g
        hl = o_g * jnp.tanh(cl)
        q = hl
        e = jnp.sum(out * q[batch], axis=-1)
        seg_max = jax.ops.segment_max(e, batch, B)
        ex = jnp.exp(e - seg_max[batch])
        seg_sum = jax.ops.segment_sum(ex, batch, B)
        a = ex / seg_sum[batch]
        r_read = jax.ops.segment_sum(a[:, None] * out, batch, B)
        q_star = jnp.concatenate([q, r_read], axis=-1)
    return q_star, feat


# --------------------------------------------------------------------------------------
if __name__ == "__main__":
    num_features, dim = 6, 32
    N, E, B = 8, 200, 2          # 200 edges -> padded to 256 -> 2 edge tiles of 128

    key = jax.random.PRNGKey(0)
    kx, ke, ks, kd, kp = jax.random.split(key, 5)
    x = jax.random.normal(kx, (N, num_features), jnp.float32)
    edge_attr = jax.random.normal(ke, (E, 5), jnp.float32)    # edge-nn input dim is fixed to 5

    # two graphs: nodes 0..3 in graph 0, nodes 4..7 in graph 1; edges stay inside graphs
    graph_of_edge = jnp.repeat(jnp.arange(B), E // B)
    src = jax.random.randint(ks, (E,), 0, N // B) + graph_of_edge * (N // B)
    dst = jax.random.randint(kd, (E,), 0, N // B) + graph_of_edge * (N // B)
    edge_index = jnp.stack([src, dst])
    batch = jnp.repeat(jnp.arange(B), N // B)

    params = init_params(kp, num_features, dim)

    out, feat = sup_encoder_forward(x, edge_index, batch, edge_attr, params, B, dim)
    jax.block_until_ready((out, feat))
    assert out.shape == (B, 2 * dim) and feat.shape == (N, dim)

    ref_out, ref_feat = sup_encoder_reference(x, edge_index, batch, edge_attr, params, B, dim)
    # tolerance relaxed slightly vs. the all-f32 version: gather/scatter/expander matmuls are bf16
    np.testing.assert_allclose(np.asarray(out), np.asarray(ref_out), atol=4e-2, rtol=4e-2)
    np.testing.assert_allclose(np.asarray(feat), np.asarray(ref_feat), atol=4e-2, rtol=4e-2)

    print("KERNEL_OK")
</pallas_src>

<mosaic_0001>
module attributes {stable_mosaic.version = 11 : i64} {
  func.func @kernel(%arg0: i32, %arg1: i32, %arg2: memref<8x7xf32, #tpu.memory_space<vmem>>, %arg3: memref<128x6xf32, #tpu.memory_space<vmem>>, %arg4: memref<128x8xbf16, #tpu.memory_space<vmem>>, %arg5: memref<8x128xbf16, #tpu.memory_space<vmem>>, %arg6: memref<8x2xf32, #tpu.memory_space<vmem>>, %arg7: memref<2x8xbf16, #tpu.memory_space<vmem>>, %arg8: memref<184x128xf32, #tpu.memory_space<vmem>>, %arg9: memref<136x1024xf32, #tpu.memory_space<vmem>>, %arg10: memref<32x1024xbf16, #tpu.memory_space<vmem>>, %arg11: memref<2x64xf32, #tpu.memory_space<vmem>>, %arg12: memref<8x32xf32, #tpu.memory_space<vmem>>, %arg13: memref<8x32xf32, #tpu.memory_space<vmem>>, %arg14: memref<8x32xf32, #tpu.memory_space<vmem>>) attributes {dimension_semantics = [#tpu.dimension_semantics<arbitrary>, #tpu.dimension_semantics<arbitrary>], iteration_bounds = array<i64: 3, 2>, scalar_prefetch = 0 : i64, scratch_operands = 2 : i64, tpu.core_type = #tpu.core_type<tc>, window_params = [{pipeline_mode = #tpu.pipeline_mode<synchronous>, transform_indices = @transform_0, window_bounds = array<i64: 8, 7>}, {transform_indices = @transform_1, window_bounds = array<i64: 128, 6>}, {transform_indices = @transform_2, window_bounds = array<i64: 128, 8>}, {transform_indices = @transform_3, window_bounds = array<i64: 8, 128>}, {pipeline_mode = #tpu.pipeline_mode<synchronous>, transform_indices = @transform_4, window_bounds = array<i64: 8, 2>}, {pipeline_mode = #tpu.pipeline_mode<synchronous>, transform_indices = @transform_5, window_bounds = array<i64: 2, 8>}, {pipeline_mode = #tpu.pipeline_mode<synchronous>, transform_indices = @transform_6, window_bounds = array<i64: 184, 128>}, {pipeline_mode = #tpu.pipeline_mode<synchronous>, transform_indices = @transform_7, window_bounds = array<i64: 136, 1024>}, {pipeline_mode = #tpu.pipeline_mode<synchronous>, transform_indices = @transform_8, window_bounds = array<i64: 32, 1024>}, {pipeline_mode = #tpu.pipeline_mode<synchronous>, transform_indices = @transform_9, window_bounds = array<i64: 2, 64>}, {pipeline_mode = #tpu.pipeline_mode<synchronous>, transform_indices = @transform_10, window_bounds = array<i64: 8, 32>}]} {
    %c0 = arith.constant 0 : index
    %c0_0 = arith.constant 0 : index
    %0 = vector.load %arg8[%c0, %c0_0] : memref<184x128xf32, #tpu.memory_space<vmem>>, vector<184x128xf32>
    %1 = vector.extract_strided_slice %0 {offsets = [0, 0], sizes = [7, 32], strides = [1, 1]} : vector<184x128xf32> to vector<7x32xf32>
    %2 = vector.extract_strided_slice %0 {offsets = [8, 0], sizes = [6, 128], strides = [1, 1]} : vector<184x128xf32> to vector<6x128xf32>
    %3 = vector.extract_strided_slice %0 {offsets = [16, 0], sizes = [64, 128], strides = [1, 1]} : vector<184x128xf32> to vector<64x128xf32>
    %4 = vector.extract_strided_slice %0 {offsets = [80, 0], sizes = [96, 128], strides = [1, 1]} : vector<184x128xf32> to vector<96x128xf32>
    %5 = vector.extract_strided_slice %0 {offsets = [176, 0], sizes = [1, 128], strides = [1, 1]} : vector<184x128xf32> to vector<1x128xf32>
    %6 = vector.extract_strided_slice %0 {offsets = [177, 0], sizes = [1, 128], strides = [1, 1]} : vector<184x128xf32> to vector<1x128xf32>
    %7 = vector.extract_strided_slice %0 {offsets = [178, 0], sizes = [1, 32], strides = [1, 1]} : vector<184x128xf32> to vector<1x32xf32>
    %c0_1 = arith.constant 0 : index
    %c0_2 = arith.constant 0 : index
    %8 = vector.load %arg9[%c0_1, %c0_2] : memref<136x1024xf32, #tpu.memory_space<vmem>>, vector<128x1024xf32>
    %c128 = arith.constant 128 : index
    %c0_3 = arith.constant 0 : index
    %9 = vector.load %arg9[%c128, %c0_3] : memref<136x1024xf32, #tpu.memory_space<vmem>>, vector<1x1024xf32>
    %c0_i32 = arith.constant 0 : i32
    %10 = arith.cmpi eq, %arg0, %c0_i32 : i32
    %c0_i32_4 = arith.constant 0 : i32
    %11 = arith.cmpi eq, %arg1, %c0_i32_4 : i32
    %12 = arith.andi %10, %11 : i1
    %13 = arith.extui %12 : i1 to i32
    %c0_i32_5 = arith.constant 0 : i32
    %14 = arith.cmpi ne, %13, %c0_i32_5 : i32
    scf.if %14 {
      %c0_30 = arith.constant 0 : index
      %c0_31 = arith.constant 0 : index
      %62 = vector.load %arg2[%c0_30, %c0_31] : memref<8x7xf32, #tpu.memory_space<vmem>>, vector<8x7xf32>
      %cst_32 = arith.constant dense<0.000000e+00> : vector<8x32xf32>
      %63 = tpu.matmul %62, %1, %cst_32 {dimension_numbers = #tpu.dot_dimension_numbers<[1], [0], [0], [1], [0, 0, 1, 1], [], []>} : vector<8x7xf32>, vector<7x32xf32>, vector<8x32xf32> -> vector<8x32xf32>
      %cst_33 = arith.constant 0.000000e+00 : f32
      %64 = vector.broadcast %cst_33 : f32 to vector<8x32xf32>
      %65 = arith.maximumf %63, %64 : vector<8x32xf32>
      %c0_34 = arith.constant 0 : index
      %c0_35 = arith.constant 0 : index
      %66 = vector.load %arg13[%c0_34, %c0_35] : memref<8x32xf32, #tpu.memory_space<vmem>>, vector<8x32xf32>
      tpu.vector_store %arg13[%c0_34, %c0_35], %65 {strides = array<i32>} : memref<8x32xf32, #tpu.memory_space<vmem>>, vector<8x32xf32>,
    } else {
    }
    %c0_i32_6 = arith.constant 0 : i32
    %15 = arith.cmpi eq, %arg1, %c0_i32_6 : i32
    %16 = arith.extui %15 : i1 to i32
    %c0_i32_7 = arith.constant 0 : i32
    %17 = arith.cmpi ne, %16, %c0_i32_7 : i32
    scf.if %17 {
      %cst_30 = arith.constant 0.000000e+00 : f32
      %62 = vector.broadcast %cst_30 : f32 to vector<8x32xf32>
      %c0_31 = arith.constant 0 : index
      %c0_32 = arith.constant 0 : index
      %63 = vector.load %arg14[%c0_31, %c0_32] : memref<8x32xf32, #tpu.memory_space<vmem>>, vector<8x32xf32>
      tpu.vector_store %arg14[%c0_31, %c0_32], %62 {strides = array<i32>} : memref<8x32xf32, #tpu.memory_space<vmem>>, vector<8x32xf32>,
    } else {
    }
    %c0_8 = arith.constant 0 : index
    %c0_9 = arith.constant 0 : index
    %18 = vector.load %arg3[%c0_8, %c0_9] : memref<128x6xf32, #tpu.memory_space<vmem>>, vector<128x6xf32>
    %cst = arith.constant dense<0.000000e+00> : vector<128x128xf32>
    %19 = tpu.matmul %18, %2, %cst {dimension_numbers = #tpu.dot_dimension_numbers<[1], [0], [0], [1], [0, 0, 1, 1], [], []>} : vector<128x6xf32>, vector<6x128xf32>, vector<128x128xf32> -> vector<128x128xf32>
    %cst_10 = arith.constant 0.000000e+00 : f32
    %20 = vector.broadcast %cst_10 : f32 to vector<128x128xf32>
    %21 = arith.maximumf %19, %20 : vector<128x128xf32>
    %cst_11 = arith.constant dense<0.000000e+00> : vector<128x1024xf32>
    %22 = tpu.matmul %21, %8, %cst_11 {dimension_numbers = #tpu.dot_dimension_numbers<[1], [0], [0], [1], [0, 0, 1, 1], [], []>} : vector<128x128xf32>, vector<128x1024xf32>, vector<128x1024xf32> -> vector<128x1024xf32>
    %23 = vector.broadcast %9 : vector<1x1024xf32> to vector<128x1024xf32>
    %24 = arith.addf %22, %23 : vector<128x1024xf32>
    %c0_12 = arith.constant 0 : index
    %c0_13 = arith.constant 0 : index
    %25 = vector.load %arg13[%c0_12, %c0_13] : memref<8x32xf32, #tpu.memory_space<vmem>>, vector<8x32xf32>
    %c0_14 = arith.constant 0 : index
    %c0_15 = arith.constant 0 : index
    %26 = vector.load %arg4[%c0_14, %c0_15] : memref<128x8xbf16, #tpu.memory_space<vmem>>, vector<128x8xbf16>
    %27 = arith.truncf %25 : vector<8x32xf32> to vector<8x32xbf16>
    %cst_16 = arith.constant dense<0.000000e+00> : vector<128x32xf32>
    %28 = tpu.matmul %26, %27, %cst_16 {dimension_numbers = #tpu.dot_dimension_numbers<[1], [0], [0], [1], [0, 0, 1, 1], [], []>} : vector<128x8xbf16>, vector<8x32xbf16>, vector<128x32xf32> -> vector<128x32xf32>
    %c0_17 = arith.constant 0 : index
    %c0_18 = arith.constant 0 : index
    %29 = vector.load %arg10[%c0_17, %c0_18] : memref<32x1024xbf16, #tpu.memory_space<vmem>>, vector<32x1024xbf16>
    %30 = arith.truncf %28 : vector<128x32xf32> to vector<128x32xbf16>
    %cst_19 = arith.constant dense<0.000000e+00> : vector<128x1024xf32>
    %31 = tpu.matmul %30, %29, %cst_19 {dimension_numbers = #tpu.dot_dimension_numbers<[1], [0], [0], [1], [0, 0, 1, 1], [], []>} : vector<128x32xbf16>, vector<32x1024xbf16>, vector<128x1024xf32> -> vector<128x1024xf32>
    %32 = arith.mulf %31, %24 : vector<128x1024xf32>
    %33 = vector.extract_strided_slice %32 {offsets = [0, 0], sizes = [128, 512], strides = [1, 1]} : vector<128x1024xf32> to vector<128x512xf32>
    %34 = vector.extract_strided_slice %32 {offsets = [0, 512], sizes = [128, 512], strides = [1, 1]} : vector<128x1024xf32> to vector<128x512xf32>
    %35 = arith.addf %33, %34 : vector<128x512xf32>
    %36 = vector.extract_strided_slice %35 {offsets = [0, 0], sizes = [128, 256], strides = [1, 1]} : vector<128x512xf32> to vector<128x256xf32>
    %37 = vector.extract_strided_slice %35 {offsets = [0, 256], sizes = [128, 256], strides = [1, 1]} : vector<128x512xf32> to vector<128x256xf32>
    %38 = arith.addf %36, %37 : vector<128x256xf32>
    %39 = vector.extract_strided_slice %38 {offsets = [0, 0], sizes = [128, 128], strides = [1, 1]} : vector<128x256xf32> to vector<128x128xf32>
    %40 = vector.extract_strided_slice %38 {offsets = [0, 128], sizes = [128, 128], strides = [1, 1]} : vector<128x256xf32> to vector<128x128xf32>
    %41 = arith.addf %39, %40 : vector<128x128xf32>
    %42 = vector.extract_strided_slice %41 {offsets = [0, 0], sizes = [128, 64], strides = [1, 1]} : vector<128x128xf32> to vector<128x64xf32>
    %43 = vector.extract_strided_slice %41 {offsets = [0, 64], sizes = [128, 64], strides = [1, 1]} : vector<128x128xf32> to vector<128x64xf32>
    %44 = arith.addf %42, %43 : vector<128x64xf32>
    %45 = vector.extract_strided_slice %44 {offsets = [0, 0], sizes = [128, 32], strides = [1, 1]} : vector<128x64xf32> to vector<128x32xf32>
    %46 = vector.extract_strided_slice %44 {offsets = [0, 32], sizes = [128, 32], strides = [1, 1]} : vector<128x64xf32> to vector<128x32xf32>
    %47 = arith.addf %45, %46 : vector<128x32xf32>
    %c0_20 = arith.constant 0 : index
    %c0_21 = arith.constant 0 : index
    %48 = vector.load %arg14[%c0_20, %c0_21] : memref<8x32xf32, #tpu.memory_space<vmem>>, vector<8x32xf32>
    %c0_22 = arith.constant 0 : index
    %c0_23 = arith.constant 0 : index
    %49 = vector.load %arg5[%c0_22, %c0_23] : memref<8x128xbf16, #tpu.memory_space<vmem>>, vector<8x128xbf16>
    %50 = arith.truncf %47 : vector<128x32xf32> to vector<128x32xbf16>
    %cst_24 = arith.constant dense<0.000000e+00> : vector<8x32xf32>
    %51 = tpu.matmul %49, %50, %cst_24 {dimension_numbers = #tpu.dot_dimension_numbers<[1], [0], [0], [1], [0, 0, 1, 1], [], []>} : vector<8x128xbf16>, vector<128x32xbf16>, vector<8x32xf32> -> vector<8x32xf32>
    %52 = arith.addf %48, %51 : vector<8x32xf32>
    %c0_25 = arith.constant 0 : index
    %c0_26 = arith.constant 0 : index
    %53 = vector.load %arg14[%c0_25, %c0_26] : memref<8x32xf32, #tpu.memory_space<vmem>>, vector<8x32xf32>
    tpu.vector_store %arg14[%c0_25, %c0_26], %52 {strides = array<i32>} : memref<8x32xf32, #tpu.memory_space<vmem>>, vector<8x32xf32>,
    %c1_i32 = arith.constant 1 : i32
    %54 = arith.cmpi eq, %arg1, %c1_i32 : i32
    %55 = arith.extui %54 : i1 to i32
    %c0_i32_27 = arith.constant 0 : i32
    %56 = arith.cmpi ne, %55, %c0_i32_27 : i32
    scf.if %56 {
      %c0_30 = arith.constant 0 : index
      %c0_31 = arith.constant 0 : index
      %62 = vector.load %arg14[%c0_30, %c0_31] : memref<8x32xf32, #tpu.memory_space<vmem>>, vector<8x32xf32>
      %63 = vector.broadcast %7 : vector<1x32xf32> to vector<8x32xf32>
      %64 = arith.addf %62, %63 : vector<8x32xf32>
      %cst_32 = arith.constant 0.000000e+00 : f32
      %65 = vector.broadcast %cst_32 : f32 to vector<8x32xf32>
      %66 = arith.maximumf %64, %65 : vector<8x32xf32>
      %c0_33 = arith.constant 0 : index
      %c0_34 = arith.constant 0 : index
      %67 = vector.load %arg13[%c0_33, %c0_34] : memref<8x32xf32, #tpu.memory_space<vmem>>, vector<8x32xf32>
      %68 = tpu.concatenate %66, %67 in 1 : vector<8x32xf32>, vector<8x32xf32> -> vector<8x64xf32>
      %cst_35 = arith.constant dense<0.000000e+00> : vector<8x128xf32>
      %69 = tpu.matmul %68, %3, %cst_35 {dimension_numbers = #tpu.dot_dimension_numbers<[1], [0], [0], [1], [0, 0, 1, 1], [], []>} : vector<8x64xf32>, vector<64x128xf32>, vector<8x128xf32> -> vector<8x128xf32>
      %70 = vector.broadcast %5 : vector<1x128xf32> to vector<8x128xf32>
      %71 = arith.addf %69, %70 : vector<8x128xf32>
      %72 = vector.extract_strided_slice %71 {offsets = [0, 0], sizes = [8, 32], strides = [1, 1]} : vector<8x128xf32> to vector<8x32xf32>
      %73 = arith.negf %72 : vector<8x32xf32>
      %74 = math.exp %73 : vector<8x32xf32>
      %cst_36 = arith.constant 1.000000e+00 : f32
      %75 = vector.broadcast %cst_36 : f32 to vector<8x32xf32>
      %76 = arith.addf %75, %74 : vector<8x32xf32>
      %77 = arith.divf %75, %76 : vector<8x32xf32>
      %78 = vector.extract_strided_slice %71 {offsets = [0, 32], sizes = [8, 32], strides = [1, 1]} : vector<8x128xf32> to vector<8x32xf32>
      %79 = arith.negf %78 : vector<8x32xf32>
      %80 = math.exp %79 : vector<8x32xf32>
      %cst_37 = arith.constant 1.000000e+00 : f32
      %81 = vector.broadcast %cst_37 : f32 to vector<8x32xf32>
      %82 = arith.addf %81, %80 : vector<8x32xf32>
      %83 = arith.divf %81, %82 : vector<8x32xf32>
      %84 = vector.extract_strided_slice %71 {offsets = [0, 64], sizes = [8, 32], strides = [1, 1]} : vector<8x128xf32> to vector<8x32xf32>
      %85 = vector.extract_strided_slice %71 {offsets = [0, 96], sizes = [8, 32], strides = [1, 1]} : vector<8x128xf32> to vector<8x32xf32>
      %86 = arith.mulf %77, %85 : vector<8x32xf32>
      %87 = arith.addf %84, %86 : vector<8x32xf32>
      %88 = math.tanh %87 : vector<8x32xf32>
      %cst_38 = arith.constant 1.000000e+00 : f32
      %89 = vector.broadcast %cst_38 : f32 to vector<8x32xf32>
      %90 = arith.subf %89, %83 : vector<8x32xf32>
      %91 = arith.mulf %90, %88 : vector<8x32xf32>
      %92 = arith.mulf %83, %67 : vector<8x32xf32>
      %93 = arith.addf %91, %92 : vector<8x32xf32>
      %c0_39 = arith.constant 0 : index
      %c0_40 = arith.constant 0 : index
      %94 = vector.load %arg13[%c0_39, %c0_40] : memref<8x32xf32, #tpu.memory_space<vmem>>, vector<8x32xf32>
      tpu.vector_store %arg13[%c0_39, %c0_40], %93 {strides = array<i32>} : memref<8x32xf32, #tpu.memory_space<vmem>>, vector<8x32xf32>,
    } else {
    }
    %c2_i32 = arith.constant 2 : i32
    %57 = arith.cmpi eq, %arg0, %c2_i32 : i32
    %c1_i32_28 = arith.constant 1 : i32
    %58 = arith.cmpi eq, %arg1, %c1_i32_28 : i32
    %59 = arith.andi %57, %58 : i1
    %60 = arith.extui %59 : i1 to i32
    %c0_i32_29 = arith.constant 0 : i32
    %61 = arith.cmpi ne, %60, %c0_i32_29 : i32
    scf.if %61 {
      %c0_30 = arith.constant 0 : index
      %c0_31 = arith.constant 0 : index
      %62 = vector.load %arg13[%c0_30, %c0_31] : memref<8x32xf32, #tpu.memory_space<vmem>>, vector<8x32xf32>
      %c0_32 = arith.constant 0 : index
      %c0_33 = arith.constant 0 : index
      %63 = vector.load %arg12[%c0_32, %c0_33] : memref<8x32xf32, #tpu.memory_space<vmem>>, vector<8x32xf32>
      tpu.vector_store %arg12[%c0_32, %c0_33], %62 {strides = array<i32>} : memref<8x32xf32, #tpu.memory_space<vmem>>, vector<8x32xf32>,
      %c0_34 = arith.constant 0 : index
      %c0_35 = arith.constant 0 : index
      %64 = vector.load %arg6[%c0_34, %c0_35] : memref<8x2xf32, #tpu.memory_space<vmem>>, vector<8x2xf32>
      %cst_36 = arith.constant 0.000000e+00 : f32
      %65 = vector.broadcast %cst_36 : f32 to vector<2x32xf32>
      %66 = vector.shape_cast %6 : vector<1x128xf32> to vector<1x128xf32>
      %67 = vector.broadcast %66 : vector<1x128xf32> to vector<2x128xf32>
      %68 = vector.extract_strided_slice %67 {offsets = [0, 0], sizes = [2, 32], strides = [1, 1]} : vector<2x128xf32> to vector<2x32xf32>
      %69 = arith.negf %68 : vector<2x32xf32>
      %70 = math.exp %69 : vector<2x32xf32>
      %cst_37 = arith.constant 1.000000e+00 : f32
      %71 = vector.broadcast %cst_37 : f32 to vector<2x32xf32>
      %72 = arith.addf %71, %70 : vector<2x32xf32>
      %73 = arith.divf %71, %72 : vector<2x32xf32>
      %74 = vector.extract_strided_slice %67 {offsets = [0, 32], sizes = [2, 32], strides = [1, 1]} : vector<2x128xf32> to vector<2x32xf32>
      %75 = arith.negf %74 : vector<2x32xf32>
      %76 = math.exp %75 : vector<2x32xf32>
      %cst_38 = arith.constant 1.000000e+00 : f32
      %77 = vector.broadcast %cst_38 : f32 to vector<2x32xf32>
      %78 = arith.addf %77, %76 : vector<2x32xf32>
      %79 = arith.divf %77, %78 : vector<2x32xf32>
      %80 = vector.extract_strided_slice %67 {offsets = [0, 64], sizes = [2, 32], strides = [1, 1]} : vector<2x128xf32> to vector<2x32xf32>
      %81 = math.tanh %80 : vector<2x32xf32>
      %82 = vector.extract_strided_slice %67 {offsets = [0, 96], sizes = [2, 32], strides = [1, 1]} : vector<2x128xf32> to vector<2x32xf32>
      %83 = arith.negf %82 : vector<2x32xf32>
      %84 = math.exp %83 : vector<2x32xf32>
      %cst_39 = arith.constant 1.000000e+00 : f32
      %85 = vector.broadcast %cst_39 : f32 to vector<2x32xf32>
      %86 = arith.addf %85, %84 : vector<2x32xf32>
      %87 = arith.divf %85, %86 : vector<2x32xf32>
      %88 = arith.mulf %79, %65 : vector<2x32xf32>
      %89 = arith.mulf %73, %81 : vector<2x32xf32>
      %90 = arith.addf %88, %89 : vector<2x32xf32>
      %91 = math.tanh %90 : vector<2x32xf32>
      %92 = arith.mulf %87, %91 : vector<2x32xf32>
      %cst_40 = arith.constant dense<0.000000e+00> : vector<8x32xf32>
      %93 = tpu.matmul %64, %92, %cst_40 {dimension_numbers = #tpu.dot_dimension_numbers<[1], [0], [0], [1], [0, 0, 1, 1], [], []>} : vector<8x2xf32>, vector<2x32xf32>, vector<8x32xf32> -> vector<8x32xf32>
      %94 = arith.mulf %62, %93 : vector<8x32xf32>
      %cst_41 = arith.constant dense<0.000000e+00> : vector<8xf32>
      %95 = vector.multi_reduction <add>, %94, %cst_41 [1] : vector<8x32xf32> to vector<8xf32>
      %96 = vector.shape_cast %95 : vector<8xf32> to vector<8x1xf32>
      %cst_42 = arith.constant 0.000000e+00 : f32
      %97 = vector.broadcast %cst_42 : f32 to vector<8x2xf32>
      %98 = arith.cmpf ogt, %64, %97 : vector<8x2xf32>
      %cst_43 = arith.constant -1.000000e+30 : f32
      %99 = vector.shape_cast %96 : vector<8x1xf32> to vector<8x1xf32>
      %100 = vector.broadcast %99 : vector<8x1xf32> to vector<8x2xf32>
      %101 = vector.broadcast %cst_43 : f32 to vector<8x2xf32>
      %102 = arith.select %98, %100, %101 : vector<8x2xi1>, vector<8x2xf32>
      %cst_44 = arith.constant dense<0xFF800000> : vector<2xf32>
      %103 = vector.multi_reduction <maximumf>, %102, %cst_44 [0] : vector<8x2xf32> to vector<2xf32>
      %104 = vector.shape_cast %103 : vector<2xf32> to vector<1x2xf32>
      %105 = vector.broadcast %104 : vector<1x2xf32> to vector<8x2xf32>
      %106 = arith.mulf %64, %105 : vector<8x2xf32>
      %cst_45 = arith.constant dense<0.000000e+00> : vector<8xf32>
      %107 = vector.multi_reduction <add>, %106, %cst_45 [1] : vector<8x2xf32> to vector<8xf32>
      %108 = vector.shape_cast %107 : vector<8xf32> to vector<8x1xf32>
      %109 = arith.subf %96, %108 : vector<8x1xf32>
      %110 = math.exp %109 : vector<8x1xf32>
      %111 = vector.broadcast %110 : vector<8x1xf32> to vector<8x2xf32>
      %112 = arith.mulf %64, %111 : vector<8x2xf32>
      %cst_46 = arith.constant dense<0.000000e+00> : vector<2xf32>
      %113 = vector.multi_reduction <add>, %112, %cst_46 [0] : vector<8x2xf32> to vector<2xf32>
      %114 = vector.shape_cast %113 : vector<2xf32> to vector<1x2xf32>
      %115 = vector.broadcast %114 : vector<1x2xf32> to vector<8x2xf32>
      %116 = arith.mulf %64, %115 : vector<8x2xf32>
      %cst_47 = arith.constant dense<0.000000e+00> : vector<8xf32>
      %117 = vector.multi_reduction <add>, %116, %cst_47 [1] : vector<8x2xf32> to vector<8xf32>
      %118 = vector.shape_cast %117 : vector<8xf32> to vector<8x1xf32>
      %119 = arith.divf %110, %118 : vector<8x1xf32>
      %c0_48 = arith.constant 0 : index
      %c0_49 = arith.constant 0 : index
      %120 = vector.load %arg7[%c0_48, %c0_49] : memref<2x8xbf16, #tpu.memory_space<vmem>>, vector<2x8xbf16>
      %121 = vector.broadcast %119 : vector<8x1xf32> to vector<8x32xf32>
      %122 = arith.mulf %121, %62 : vector<8x32xf32>
      %123 = arith.truncf %122 : vector<8x32xf32> to vector<8x32xbf16>
      %cst_50 = arith.constant dense<0.000000e+00> : vector<2x32xf32>
      %124 = tpu.matmul %120, %123, %cst_50 {dimension_numbers = #tpu.dot_dimension_numbers<[1], [0], [0], [1], [0, 0, 1, 1], [], []>} : vector<2x8xbf16>, vector<8x32xbf16>, vector<2x32xf32> -> vector<2x32xf32>
      %125 = tpu.concatenate %92, %124, %92 in 1 : vector<2x32xf32>, vector<2x32xf32>, vector<2x32xf32> -> vector<2x96xf32>
      %cst_51 = arith.constant dense<0.000000e+00> : vector<2x128xf32>
      %126 = tpu.matmul %125, %4, %cst_51 {dimension_numbers = #tpu.dot_dimension_numbers<[1], [0], [0], [1], [0, 0, 1, 1], [], []>} : vector<2x96xf32>, vector<96x128xf32>, vector<2x128xf32> -> vector<2x128xf32>
      %127 = vector.broadcast %6 : vector<1x128xf32> to vector<2x128xf32>
      %128 = arith.addf %126, %127 : vector<2x128xf32>
      %129 = vector.extract_strided_slice %128 {offsets = [0, 0], sizes = [2, 32], strides = [1, 1]} : vector<2x128xf32> to vector<2x32xf32>
      %130 = arith.negf %129 : vector<2x32xf32>
      %131 = math.exp %130 : vector<2x32xf32>
      %cst_52 = arith.constant 1.000000e+00 : f32
      %132 = vector.broadcast %cst_52 : f32 to vector<2x32xf32>
      %133 = arith.addf %132, %131 : vector<2x32xf32>
      %134 = arith.divf %132, %133 : vector<2x32xf32>
      %135 = vector.extract_strided_slice %128 {offsets = [0, 32], sizes = [2, 32], strides = [1, 1]} : vector<2x128xf32> to vector<2x32xf32>
      %136 = arith.negf %135 : vector<2x32xf32>
      %137 = math.exp %136 : vector<2x32xf32>
      %cst_53 = arith.constant 1.000000e+00 : f32
      %138 = vector.broadcast %cst_53 : f32 to vector<2x32xf32>
      %139 = arith.addf %138, %137 : vector<2x32xf32>
      %140 = arith.divf %138, %139 : vector<2x32xf32>
      %141 = vector.extract_strided_slice %128 {offsets = [0, 64], sizes = [2, 32], strides = [1, 1]} : vector<2x128xf32> to vector<2x32xf32>
      %142 = math.tanh %141 : vector<2x32xf32>
      %143 = vector.extract_strided_slice %128 {offsets = [0, 96], sizes = [2, 32], strides = [1, 1]} : vector<2x128xf32> to vector<2x32xf32>
      %144 = arith.negf %143 : vector<2x32xf32>
      %145 = math.exp %144 : vector<2x32xf32>
      %cst_54 = arith.constant 1.000000e+00 : f32
      %146 = vector.broadcast %cst_54 : f32 to vector<2x32xf32>
      %147 = arith.addf %146, %145 : vector<2x32xf32>
      %148 = arith.divf %146, %147 : vector<2x32xf32>
      %149 = arith.mulf %140, %90 : vector<2x32xf32>
      %150 = arith.mulf %134, %142 : vector<2x32xf32>
      %151 = arith.addf %149, %150 : vector<2x32xf32>
      %152 = math.tanh %151 : vector<2x32xf32>
      %153 = arith.mulf %148, %152 : vector<2x32xf32>
      %cst_55 = arith.constant dense<0.000000e+00> : vector<8x32xf32>
      %154 = tpu.matmul %64, %153, %cst_55 {dimension_numbers = #tpu.dot_dimension_numbers<[1], [0], [0], [1], [0, 0, 1, 1], [], []>} : vector<8x2xf32>, vector<2x32xf32>, vector<8x32xf32> -> vector<8x32xf32>
      %155 = arith.mulf %62, %154 : vector<8x32xf32>
      %cst_56 = arith.constant dense<0.000000e+00> : vector<8xf32>
      %156 = vector.multi_reduction <add>, %155, %cst_56 [1] : vector<8x32xf32> to vector<8xf32>
      %157 = vector.shape_cast %156 : vector<8xf32> to vector<8x1xf32>
      %cst_57 = arith.constant 0.000000e+00 : f32
      %158 = vector.broadcast %cst_57 : f32 to vector<8x2xf32>
      %159 = arith.cmpf ogt, %64, %158 : vector<8x2xf32>
      %cst_58 = arith.constant -1.000000e+30 : f32
      %160 = vector.shape_cast %157 : vector<8x1xf32> to vector<8x1xf32>
      %161 = vector.broadcast %160 : vector<8x1xf32> to vector<8x2xf32>
      %162 = vector.broadcast %cst_58 : f32 to vector<8x2xf32>
      %163 = arith.select %159, %161, %162 : vector<8x2xi1>, vector<8x2xf32>
      %cst_59 = arith.constant dense<0xFF800000> : vector<2xf32>
      %164 = vector.multi_reduction <maximumf>, %163, %cst_59 [0] : vector<8x2xf32> to vector<2xf32>
      %165 = vector.shape_cast %164 : vector<2xf32> to vector<1x2xf32>
      %166 = vector.broadcast %165 : vector<1x2xf32> to vector<8x2xf32>
      %167 = arith.mulf %64, %166 : vector<8x2xf32>
      %cst_60 = arith.constant dense<0.000000e+00> : vector<8xf32>
      %168 = vector.multi_reduction <add>, %167, %cst_60 [1] : vector<8x2xf32> to vector<8xf32>
      %169 = vector.shape_cast %168 : vector<8xf32> to vector<8x1xf32>
      %170 = arith.subf %157, %169 : vector<8x1xf32>
      %171 = math.exp %170 : vector<8x1xf32>
      %172 = vector.broadcast %171 : vector<8x1xf32> to vector<8x2xf32>
      %173 = arith.mulf %64, %172 : vector<8x2xf32>
      %cst_61 = arith.constant dense<0.000000e+00> : vector<2xf32>
      %174 = vector.multi_reduction <add>, %173, %cst_61 [0] : vector<8x2xf32> to vector<2xf32>
      %175 = vector.shape_cast %174 : vector<2xf32> to vector<1x2xf32>
      %176 = vector.broadcast %175 : vector<1x2xf32> to vector<8x2xf32>
      %177 = arith.mulf %64, %176 : vector<8x2xf32>
      %cst_62 = arith.constant dense<0.000000e+00> : vector<8xf32>
      %178 = vector.multi_reduction <add>, %177, %cst_62 [1] : vector<8x2xf32> to vector<8xf32>
      %179 = vector.shape_cast %178 : vector<8xf32> to vector<8x1xf32>
      %180 = arith.divf %171, %179 : vector<8x1xf32>
      %c0_63 = arith.constant 0 : index
      %c0_64 = arith.constant 0 : index
      %181 = vector.load %arg7[%c0_63, %c0_64] : memref<2x8xbf16, #tpu.memory_space<vmem>>, vector<2x8xbf16>
      %182 = vector.broadcast %180 : vector<8x1xf32> to vector<8x32xf32>
      %183 = arith.mulf %182, %62 : vector<8x32xf32>
      %184 = arith.truncf %183 : vector<8x32xf32> to vector<8x32xbf16>
      %cst_65 = arith.constant dense<0.000000e+00> : vector<2x32xf32>
      %185 = tpu.matmul %181, %184, %cst_65 {dimension_numbers = #tpu.dot_dimension_numbers<[1], [0], [0], [1], [0, 0, 1, 1], [], []>} : vector<2x8xbf16>, vector<8x32xbf16>, vector<2x32xf32> -> vector<2x32xf32>
      %186 = tpu.concatenate %153, %185, %153 in 1 : vector<2x32xf32>, vector<2x32xf32>, vector<2x32xf32> -> vector<2x96xf32>
      %cst_66 = arith.constant dense<0.000000e+00> : vector<2x128xf32>
      %187 = tpu.matmul %186, %4, %cst_66 {dimension_numbers = #tpu.dot_dimension_numbers<[1], [0], [0], [1], [0, 0, 1, 1], [], []>} : vector<2x96xf32>, vector<96x128xf32>, vector<2x128xf32> -> vector<2x128xf32>
      %188 = vector.broadcast %6 : vector<1x128xf32> to vector<2x128xf32>
      %189 = arith.addf %187, %188 : vector<2x128xf32>
      %190 = vector.extract_strided_slice %189 {offsets = [0, 0], sizes = [2, 32], strides = [1, 1]} : vector<2x128xf32> to vector<2x32xf32>
      %191 = arith.negf %190 : vector<2x32xf32>
      %192 = math.exp %191 : vector<2x32xf32>
      %cst_67 = arith.constant 1.000000e+00 : f32
      %193 = vector.broadcast %cst_67 : f32 to vector<2x32xf32>
      %194 = arith.addf %193, %192 : vector<2x32xf32>
      %195 = arith.divf %193, %194 : vector<2x32xf32>
      %196 = vector.extract_strided_slice %189 {offsets = [0, 32], sizes = [2, 32], strides = [1, 1]} : vector<2x128xf32> to vector<2x32xf32>
      %197 = arith.negf %196 : vector<2x32xf32>
      %198 = math.exp %197 : vector<2x32xf32>
      %cst_68 = arith.constant 1.000000e+00 : f32
      %199 = vector.broadcast %cst_68 : f32 to vector<2x32xf32>
      %200 = arith.addf %199, %198 : vector<2x32xf32>
      %201 = arith.divf %199, %200 : vector<2x32xf32>
      %202 = vector.extract_strided_slice %189 {offsets = [0, 64], sizes = [2, 32], strides = [1, 1]} : vector<2x128xf32> to vector<2x32xf32>
      %203 = math.tanh %202 : vector<2x32xf32>
      %204 = vector.extract_strided_slice %189 {offsets = [0, 96], sizes = [2, 32], strides = [1, 1]} : vector<2x128xf32> to vector<2x32xf32>
      %205 = arith.negf %204 : vector<2x32xf32>
      %206 = math.exp %205 : vector<2x32xf32>
      %cst_69 = arith.constant 1.000000e+00 : f32
      %207 = vector.broadcast %cst_69 : f32 to vector<2x32xf32>
      %208 = arith.addf %207, %206 : vector<2x32xf32>
      %209 = arith.divf %207, %208 : vector<2x32xf32>
      %210 = arith.mulf %201, %151 : vector<2x32xf32>
      %211 = arith.mulf %195, %203 : vector<2x32xf32>
      %212 = arith.addf %210, %211 : vector<2x32xf32>
      %213 = math.tanh %212 : vector<2x32xf32>
      %214 = arith.mulf %209, %213 : vector<2x32xf32>
      %cst_70 = arith.constant dense<0.000000e+00> : vector<8x32xf32>
      %215 = tpu.matmul %64, %214, %cst_70 {dimension_numbers = #tpu.dot_dimension_numbers<[1], [0], [0], [1], [0, 0, 1, 1], [], []>} : vector<8x2xf32>, vector<2x32xf32>, vector<8x32xf32> -> vector<8x32xf32>
      %216 = arith.mulf %62, %215 : vector<8x32xf32>
      %cst_71 = arith.constant dense<0.000000e+00> : vector<8xf32>
      %217 = vector.multi_reduction <add>, %216, %cst_71 [1] : vector<8x32xf32> to vector<8xf32>
      %218 = vector.shape_cast %217 : vector<8xf32> to vector<8x1xf32>
      %cst_72 = arith.constant 0.000000e+00 : f32
      %219 = vector.broadcast %cst_72 : f32 to vector<8x2xf32>
      %220 = arith.cmpf ogt, %64, %219 : vector<8x2xf32>
      %cst_73 = arith.constant -1.000000e+30 : f32
      %221 = vector.shape_cast %218 : vector<8x1xf32> to vector<8x1xf32>
      %222 = vector.broadcast %221 : vector<8x1xf32> to vector<8x2xf32>
      %223 = vector.broadcast %cst_73 : f32 to vector<8x2xf32>
      %224 = arith.select %220, %222, %223 : vector<8x2xi1>, vector<8x2xf32>
      %cst_74 = arith.constant dense<0xFF800000> : vector<2xf32>
      %225 = vector.multi_reduction <maximumf>, %224, %cst_74 [0] : vector<8x2xf32> to vector<2xf32>
      %226 = vector.shape_cast %225 : vector<2xf32> to vector<1x2xf32>
      %227 = vector.broadcast %226 : vector<1x2xf32> to vector<8x2xf32>
      %228 = arith.mulf %64, %227 : vector<8x2xf32>
      %cst_75 = arith.constant dense<0.000000e+00> : vector<8xf32>
      %229 = vector.multi_reduction <add>, %228, %cst_75 [1] : vector<8x2xf32> to vector<8xf32>
      %230 = vector.shape_cast %229 : vector<8xf32> to vector<8x1xf32>
      %231 = arith.subf %218, %230 : vector<8x1xf32>
      %232 = math.exp %231 : vector<8x1xf32>
      %233 = vector.broadcast %232 : vector<8x1xf32> to vector<8x2xf32>
      %234 = arith.mulf %64, %233 : vector<8x2xf32>
      %cst_76 = arith.constant dense<0.000000e+00> : vector<2xf32>
      %235 = vector.multi_reduction <add>, %234, %cst_76 [0] : vector<8x2xf32> to vector<2xf32>
      %236 = vector.shape_cast %235 : vector<2xf32> to vector<1x2xf32>
      %237 = vector.broadcast %236 : vector<1x2xf32> to vector<8x2xf32>
      %238 = arith.mulf %64, %237 : vector<8x2xf32>
      %cst_77 = arith.constant dense<0.000000e+00> : vector<8xf32>
      %239 = vector.multi_reduction <add>, %238, %cst_77 [1] : vector<8x2xf32> to vector<8xf32>
      %240 = vector.shape_cast %239 : vector<8xf32> to vector<8x1xf32>
      %241 = arith.divf %232, %240 : vector<8x1xf32>
      %c0_78 = arith.constant 0 : index
      %c0_79 = arith.constant 0 : index
      %242 = vector.load %arg7[%c0_78, %c0_79] : memref<2x8xbf16, #tpu.memory_space<vmem>>, vector<2x8xbf16>
      %243 = vector.broadcast %241 : vector<8x1xf32> to vector<8x32xf32>
      %244 = arith.mulf %243, %62 : vector<8x32xf32>
      %245 = arith.truncf %244 : vector<8x32xf32> to vector<8x32xbf16>
      %cst_80 = arith.constant dense<0.000000e+00> : vector<2x32xf32>
      %246 = tpu.matmul %242, %245, %cst_80 {dimension_numbers = #tpu.dot_dimension_numbers<[1], [0], [0], [1], [0, 0, 1, 1], [], []>} : vector<2x8xbf16>, vector<8x32xbf16>, vector<2x32xf32> -> vector<2x32xf32>
      %247 = tpu.concatenate %214, %246 in 1 : vector<2x32xf32>, vector<2x32xf32> -> vector<2x64xf32>
      %c0_81 = arith.constant 0 : index
      %c0_82 = arith.constant 0 : index
      %248 = vector.load %arg11[%c0_81, %c0_82] : memref<2x64xf32, #tpu.memory_space<vmem>>, vector<2x64xf32>
      tpu.vector_store %arg11[%c0_81, %c0_82], %247 {strides = array<i32>} : memref<2x64xf32, #tpu.memory_space<vmem>>, vector<2x64xf32>,
    } else {
    }
    return
  }
  func.func @transform_0(%arg0: i32, %arg1: i32) -> (i32, i32) {
    %c0_i32 = arith.constant 0 : i32
    %c0_i32_0 = arith.constant 0 : i32
    %c0_i32_1 = arith.constant 0 : i32
    return %c0_i32, %c0_i32_0 : i32, i32
  }
  func.func @transform_1(%arg0: i32, %arg1: i32) -> (i32, i32) {
    %c0_i32 = arith.constant 0 : i32
    %c0_i32_0 = arith.constant 0 : i32
    return %arg1, %c0_i32 : i32, i32
  }
  func.func @transform_2(%arg0: i32, %arg1: i32) -> (i32, i32) {
    %c0_i32 = arith.constant 0 : i32
    %c0_i32_0 = arith.constant 0 : i32
    return %arg1, %c0_i32 : i32, i32
  }
  func.func @transform_3(%arg0: i32, %arg1: i32) -> (i32, i32) {
    %c0_i32 = arith.constant 0 : i32
    %c0_i32_0 = arith.constant 0 : i32
    return %c0_i32, %arg1 : i32, i32
  }
  func.func @transform_4(%arg0: i32, %arg1: i32) -> (i32, i32) {
    %c0_i32 = arith.constant 0 : i32
    %c0_i32_0 = arith.constant 0 : i32
    %c0_i32_1 = arith.constant 0 : i32
    return %c0_i32, %c0_i32_0 : i32, i32
  }
  func.func @transform_5(%arg0: i32, %arg1: i32) -> (i32, i32) {
    %c0_i32 = arith.constant 0 : i32
    %c0_i32_0 = arith.constant 0 : i32
    %c0_i32_1 = arith.constant 0 : i32
    return %c0_i32, %c0_i32_0 : i32, i32
  }
  func.func @transform_6(%arg0: i32, %arg1: i32) -> (i32, i32) {
    %c0_i32 = arith.constant 0 : i32
    %c0_i32_0 = arith.constant 0 : i32
    %c0_i32_1 = arith.constant 0 : i32
    return %c0_i32, %c0_i32_0 : i32, i32
  }
  func.func @transform_7(%arg0: i32, %arg1: i32) -> (i32, i32) {
    %c0_i32 = arith.constant 0 : i32
    %c0_i32_0 = arith.constant 0 : i32
    %c0_i32_1 = arith.constant 0 : i32
    return %c0_i32, %c0_i32_0 : i32, i32
  }
  func.func @transform_8(%arg0: i32, %arg1: i32) -> (i32, i32) {
    %c0_i32 = arith.constant 0 : i32
    %c0_i32_0 = arith.constant 0 : i32
    %c0_i32_1 = arith.constant 0 : i32
    return %c0_i32, %c0_i32_0 : i32, i32
  }
  func.func @transform_9(%arg0: i32, %arg1: i32) -> (i32, i32) {
    %c0_i32 = arith.constant 0 : i32
    %c0_i32_0 = arith.constant 0 : i32
    %c0_i32_1 = arith.constant 0 : i32
    return %c0_i32, %c0_i32_0 : i32, i32
  }
  func.func @transform_10(%arg0: i32, %arg1: i32) -> (i32, i32) {
    %c0_i32 = arith.constant 0 : i32
    %c0_i32_0 = arith.constant 0 : i32
    %c0_i32_1 = arith.constant 0 : i32
    return %c0_i32, %c0_i32_0 : i32, i32
  }
}

</mosaic_0001>

<llo_original>
// kernel: tpu_custom_call.1
$region0: #{tpu_custom_call.1}
  #allocation0 [shape = 'u32[]', space=smem, size = 0x4, offset = 0x4, fixed_abs, tag = 'smem constant byte address 0x4 - core index']
  #allocation1 [shape = 'u32[144,128]{1,0:T(1,128)}', space=vmem, size = 0x12000, scoped, tag = 'internal scratch']
  #allocation2 [shape = 'f32[8,32]{1,0:T(8,128)}', space=vmem, size = 0x1000, scoped, tag = 'scratch operand']
  #allocation3 [shape = 'f32[8,32]{1,0:T(8,128)}', space=vmem, size = 0x1000, scoped, tag = 'scratch operand']
  %s0 = inlined_call_operand.vmem [shape: f32[8,7], index: 0, kind: input, shape index: {}]
  %s1 = inlined_call_operand.vmem [shape: f32[256,6], index: 1, kind: input, shape index: {}]
  %s2 = inlined_call_operand.vmem [shape: bf16[256,8], index: 2, kind: input, shape index: {}]
  %s3 = inlined_call_operand.vmem [shape: bf16[8,256], index: 3, kind: input, shape index: {}]
  %s4 = inlined_call_operand.vmem [shape: f32[8,2], index: 4, kind: input, shape index: {}]
  %s5 = inlined_call_operand.vmem [shape: bf16[2,8], index: 5, kind: input, shape index: {}]
  %s6 = inlined_call_operand.vmem [shape: f32[184,128], index: 6, kind: input, shape index: {}]
  %s7 = inlined_call_operand.hbm [shape: f32[136,1024], index: 7, kind: input, shape index: {}]
  %s8 = inlined_call_operand.vmem [shape: bf16[32,1024], index: 8, kind: input, shape index: {}]
  %s9 = inlined_call_operand.hbm [shape: f32[2,64], index: 9, kind: output, shape index: {0}]
  %s10 = inlined_call_operand.hbm [shape: f32[8,32], index: 10, kind: output, shape index: {1}]
  %11 = xla_tuple %s9, %s10
  %s12 = sld [smem:[#allocation0]]
  $region97: #{tpu_custom_call.1} parent=0
    _
  %s14 = ssub.s32 1, %s12
  %s15 = scalar_select 0, %s14, %s12
  $region1: #{tpu_custom_call.1} parent=0
    #allocation4 [shape = 'u8[557056]{0}', space=vmem, size = 0x88000, scoped, tag = 'input window, operand 7, single buffered']
    #allocation5 [shape = 's32[2]{0}', space=sflag, size = 0x8, scoped, tag = 'scoped memory for tpu_custom_call.1']
    #allocation6 [shape = 's32[2]{0}', space=sflag, size = 0x8, scoped, tag = 'scoped memory for tpu_custom_call.1']
    #allocation7 [shape = 'u8[1024]{0}', space=vmem, size = 0x400, scoped, tag = 'output window, operand 0, single buffered']
    #allocation8 [shape = 'u8[4096]{0}', space=vmem, size = 0x1000, scoped, tag = 'output window, operand 1, single buffered']
    #allocation9 [shape = 's32[1]{0}', space=sflag, size = 0x4, scoped, tag = 'scoped memory for tpu_custom_call.1']
    %16 = vsyncpa [#allocation5], 0
    %17 = vsyncpa [#allocation6], 0
    %18 = vsyncpa [#allocation9], 0
    loop: start=0, step=1, limit=8
    $region2: #{tpu_custom_call.1} parent=1 // loop_pre_header
      _
    $region3: #{tpu_custom_call.1} parent=1 // loop_header
      %s20 = sphi 0, %s24
      %p21 = scmp.ge.s32.totalorder %s20, 8
      %s27 = sphi 0, %s39
      %s28 = sphi 0, %s35
      %s29 = sphi 0, %s27
      %s30 = sphi 0, %s28
      %s31 = sphi 0, %s29
      %s32 = sphi 0, %s30
      %s40 = sphi 0, %s40
      %s42 = sphi 0, %s40
      %s43 = sphi 0, %s42
      %s57 = sphi 0, %s43
      %s63 = sphi 0, %s65
      %s66 = sphi 0, %s63
      %s67 = sphi 0, %s66
      %s83 = sphi 0, %s67
      %s89 = sphi 0, %s91
      %s92 = sphi 0, %s89
      %s93 = sphi 0, %s92
      %s109 = sphi 0, %s93
      %s115 = sphi 0, %s117
      %s118 = sphi 0, %s115
      %s119 = sphi 0, %s118
      %s135 = sphi 0, %s119
      %s139 = sphi 0, %s139
      %s141 = sphi 0, %s139
      %s142 = sphi 0, %s141
      %s156 = sphi 0, %s142
      %s160 = sphi 0, %s160
      %s162 = sphi 0, %s160
      %s163 = sphi 0, %s162
      %s177 = sphi 0, %s163
      %s181 = sphi 0, %s181
      %s183 = sphi 0, %s181
      %s184 = sphi 0, %s183
      %s198 = sphi 0, %s184
      %s202 = sphi 0, %s202
      %s204 = sphi 0, %s202
      %s205 = sphi 0, %s204
      %s219 = sphi 0, %s205
      %s223 = sphi 0, %s223
      %s225 = sphi 0, %s223
      %s226 = sphi 0, %s225
      %s240 = sphi 0, %s226
      %s244 = sphi 0, %s244
      %s246 = sphi 0, %s244
      %s247 = sphi 0, %s246
      %s261 = sphi 0, %s247
      %s265 = sphi 0, %s265
      %s267 = sphi 0, %s265
      %s268 = sphi 0, %s267
      %s282 = sphi 0, %s268
    $region4: #{tpu_custom_call.1} parent=1 // loop_header_branch
      %23 = sbr.rel (%p21) target = $region8
    $region5: #{tpu_custom_call.1} parent=1 // loop_body
      %s25 = ssub.s32 %s20, 1
      %s26 = ssub.s32 %s20, 2
      %s33 = sadd.s32 1, %s28
      %p34 = scmp.ge.s32.totalorder %s33, 2
      %s35 = scalar_select %p34, 0, %s33
      %s36 = sadd.s32 1, %s27
      %s37 = scalar_select %p34, %s36, %s27
      %p38 = scmp.ge.s32.totalorder %s37, 3
      %s39 = scalar_select %p38, 0, %s37
      %s41 = sadd.s32 %s40, 1
      %p44 = scmp.eq.s32.totalorder %s20, 5
      %p45 = scmp.ne.s32.totalorder %s40, %s42
      %p46 = scmp.eq.s32.totalorder %s20, 0
      %p47 = por %p45, %p46
      %p48 = scmp.ne.s32.totalorder %s40, %s42
      %p49 = scmp.eq.s32.totalorder %s25, 5
      %p50 = por %p48, %p49
      %p51 = scmp.ne.s32.totalorder %s42, %s43
      %p52 = scmp.eq.s32.totalorder %s25, 0
      %p53 = por %p51, %p52
      %p54 = scmp.ne.s32.totalorder %s42, %s43
      %p55 = scmp.eq.s32.totalorder %s26, 5
      %p56 = por %p54, %p55
      %p58 = scmp.ne.s32.totalorder %s43, %s57
      %p59 = scmp.eq.s32.totalorder %s26, 0
      %p60 = por %p58, %p59
      %s61 = ssub.s32 %s28, %s35
      %p62 = scmp.eq.s32.totalorder %s61, 0
      %s64 = sadd.s32 %s63, 1
      %s65 = scalar_select %p62, %s63, %s64
      %p68 = pneg %p62
      %p69 = scmp.eq.s32.totalorder %s20, 5
      %p70 = por %p68, %p69
      %p71 = scmp.ne.s32.totalorder %s63, %s66
      %p72 = scmp.eq.s32.totalorder %s20, 0
      %p73 = por %p71, %p72
      %p74 = scmp.ne.s32.totalorder %s63, %s66
      %p75 = scmp.eq.s32.totalorder %s25, 5
      %p76 = por %p74, %p75
      %p77 = scmp.ne.s32.totalorder %s66, %s67
      %p78 = scmp.eq.s32.totalorder %s25, 0
      %p79 = por %p77, %p78
      %p80 = scmp.ne.s32.totalorder %s66, %s67
      %p81 = scmp.eq.s32.totalorder %s26, 5
      %p82 = por %p80, %p81
      %p84 = scmp.ne.s32.totalorder %s67, %s83
      %p85 = scmp.eq.s32.totalorder %s26, 0
      %p86 = por %p84, %p85
      %s87 = ssub.s32 %s28, %s35
      %p88 = scmp.eq.s32.totalorder %s87, 0
      %s90 = sadd.s32 %s89, 1
      %s91 = scalar_select %p88, %s89, %s90
      %p94 = pneg %p88
      %p95 = scmp.eq.s32.totalorder %s20, 5
      %p96 = por %p94, %p95
      %p97 = scmp.ne.s32.totalorder %s89, %s92
      %p98 = scmp.eq.s32.totalorder %s20, 0
      %p99 = por %p97, %p98
      %p100 = scmp.ne.s32.totalorder %s89, %s92
      %p101 = scmp.eq.s32.totalorder %s25, 5
      %p102 = por %p100, %p101
      %p103 = scmp.ne.s32.totalorder %s92, %s93
      %p104 = scmp.eq.s32.totalorder %s25, 0
      %p105 = por %p103, %p104
      %p106 = scmp.ne.s32.totalorder %s92, %s93
      %p107 = scmp.eq.s32.totalorder %s26, 5
      %p108 = por %p106, %p107
      %p110 = scmp.ne.s32.totalorder %s93, %s109
      %p111 = scmp.eq.s32.totalorder %s26, 0
      %p112 = por %p110, %p111
      %s113 = ssub.s32 %s28, %s35
      %p114 = scmp.eq.s32.totalorder %s113, 0
      %s116 = sadd.s32 %s115, 1
      %s117 = scalar_select %p114, %s115, %s116
      %p120 = pneg %p114
      %p121 = scmp.eq.s32.totalorder %s20, 5
      %p122 = por %p120, %p121
      %p123 = scmp.ne.s32.totalorder %s115, %s118
      %p124 = scmp.eq.s32.totalorder %s20, 0
      %p125 = por %p123, %p124
      %p126 = scmp.ne.s32.totalorder %s115, %s118
      %p127 = scmp.eq.s32.totalorder %s25, 5
      %p128 = por %p126, %p127
      %p129 = scmp.ne.s32.totalorder %s118, %s119
      %p130 = scmp.eq.s32.totalorder %s25, 0
      %p131 = por %p129, %p130
      %p132 = scmp.ne.s32.totalorder %s118, %s119
      %p133 = scmp.eq.s32.totalorder %s26, 5
      %p134 = por %p132, %p133
      %p136 = scmp.ne.s32.totalorder %s119, %s135
      %p137 = scmp.eq.s32.totalorder %s26, 0
      %p138 = por %p136, %p137
      %s140 = sadd.s32 %s139, 1
      %p143 = scmp.eq.s32.totalorder %s20, 5
      %p144 = scmp.ne.s32.totalorder %s139, %s141
      %p145 = scmp.eq.s32.totalorder %s20, 0
      %p146 = por %p144, %p145
      %p147 = scmp.ne.s32.totalorder %s139, %s141
      %p148 = scmp.eq.s32.totalorder %s25, 5
      %p149 = por %p147, %p148
      %p150 = scmp.ne.s32.totalorder %s141, %s142
      %p151 = scmp.eq.s32.totalorder %s25, 0
      %p152 = por %p150, %p151
      %p153 = scmp.ne.s32.totalorder %s141, %s142
      %p154 = scmp.eq.s32.totalorder %s26, 5
      %p155 = por %p153, %p154
      %p157 = scmp.ne.s32.totalorder %s142, %s156
      %p158 = scmp.eq.s32.totalorder %s26, 0
      %p159 = por %p157, %p158
      %s161 = sadd.s32 %s160, 1
      %p164 = scmp.eq.s32.totalorder %s20, 5
      %p165 = scmp.ne.s32.totalorder %s160, %s162
      %p166 = scmp.eq.s32.totalorder %s20, 0
      %p167 = por %p165, %p166
      %p168 = scmp.ne.s32.totalorder %s160, %s162
      %p169 = scmp.eq.s32.totalorder %s25, 5
      %p170 = por %p168, %p169
      %p171 = scmp.ne.s32.totalorder %s162, %s163
      %p172 = scmp.eq.s32.totalorder %s25, 0
      %p173 = por %p171, %p172
      %p174 = scmp.ne.s32.totalorder %s162, %s163
      %p175 = scmp.eq.s32.totalorder %s26, 5
      %p176 = por %p174, %p175
      %p178 = scmp.ne.s32.totalorder %s163, %s177
      %p179 = scmp.eq.s32.totalorder %s26, 0
      %p180 = por %p178, %p179
      %s182 = sadd.s32 %s181, 1
      %p185 = scmp.eq.s32.totalorder %s20, 5
      %p186 = scmp.ne.s32.totalorder %s181, %s183
      %p187 = scmp.eq.s32.totalorder %s20, 0
      %p188 = por %p186, %p187
      %p189 = scmp.ne.s32.totalorder %s181, %s183
      %p190 = scmp.eq.s32.totalorder %s25, 5
      %p191 = por %p189, %p190
      %p192 = scmp.ne.s32.totalorder %s183, %s184
      %p193 = scmp.eq.s32.totalorder %s25, 0
      %p194 = por %p192, %p193
      %p195 = scmp.ne.s32.totalorder %s183, %s184
      %p196 = scmp.eq.s32.totalorder %s26, 5
      %p197 = por %p195, %p196
      %p199 = scmp.ne.s32.totalorder %s184, %s198
      %p200 = scmp.eq.s32.totalorder %s26, 0
      %p201 = por %p199, %p200
      %s203 = sadd.s32 %s202, 1
      %p206 = scmp.eq.s32.totalorder %s20, 5
      %p207 = scmp.ne.s32.totalorder %s202, %s204
      %p208 = scmp.eq.s32.totalorder %s20, 0
      %p209 = por %p207, %p208
      %p210 = scmp.ne.s32.totalorder %s202, %s204
      %p211 = scmp.eq.s32.totalorder %s25, 5
      %p212 = por %p210, %p211
      %p213 = scmp.ne.s32.totalorder %s204, %s205
      %p214 = scmp.eq.s32.totalorder %s25, 0
      %p215 = por %p213, %p214
      %p216 = scmp.ne.s32.totalorder %s204, %s205
      %p217 = scmp.eq.s32.totalorder %s26, 5
      %p218 = por %p216, %p217
      %p220 = scmp.ne.s32.totalorder %s205, %s219
      %p221 = scmp.eq.s32.totalorder %s26, 0
      %p222 = por %p220, %p221
      %s224 = sadd.s32 %s223, 1
      %p227 = scmp.eq.s32.totalorder %s20, 5
      %p228 = scmp.ne.s32.totalorder %s223, %s225
      %p229 = scmp.eq.s32.totalorder %s20, 0
      %p230 = por %p228, %p229
      %p231 = scmp.ne.s32.totalorder %s223, %s225
      %p232 = scmp.eq.s32.totalorder %s25, 5
      %p233 = por %p231, %p232
      %p234 = scmp.ne.s32.totalorder %s225, %s226
      %p235 = scmp.eq.s32.totalorder %s25, 0
      %p236 = por %p234, %p235
      %p237 = scmp.ne.s32.totalorder %s225, %s226
      %p238 = scmp.eq.s32.totalorder %s26, 5
      %p239 = por %p237, %p238
      %p241 = scmp.ne.s32.totalorder %s226, %s240
      %p242 = scmp.eq.s32.totalorder %s26, 0
      %p243 = por %p241, %p242
      %s245 = sadd.s32 %s244, 1
      %p248 = scmp.eq.s32.totalorder %s20, 5
      %p249 = scmp.ne.s32.totalorder %s244, %s246
      %p250 = scmp.eq.s32.totalorder %s20, 0
      %p251 = por %p249, %p250
      %p252 = scmp.ne.s32.totalorder %s244, %s246
      %p253 = scmp.eq.s32.totalorder %s25, 5
      %p254 = por %p252, %p253
      %p255 = scmp.ne.s32.totalorder %s246, %s247
      %p256 = scmp.eq.s32.totalorder %s25, 0
      %p257 = por %p255, %p256
      %p258 = scmp.ne.s32.totalorder %s246, %s247
      %p259 = scmp.eq.s32.totalorder %s26, 5
      %p260 = por %p258, %p259
      %p262 = scmp.ne.s32.totalorder %s247, %s261
      %p263 = scmp.eq.s32.totalorder %s26, 0
      %p264 = por %p262, %p263
      %s266 = sadd.s32 %s265, 1
      %p269 = scmp.eq.s32.totalorder %s20, 5
      %p270 = scmp.ne.s32.totalorder %s265, %s267
      %p271 = scmp.eq.s32.totalorder %s20, 0
      %p272 = por %p270, %p271
      %p273 = scmp.ne.s32.totalorder %s265, %s267
      %p274 = scmp.eq.s32.totalorder %s25, 5
      %p275 = por %p273, %p274
      %p276 = scmp.ne.s32.totalorder %s267, %s268
      %p277 = scmp.eq.s32.totalorder %s25, 0
      %p278 = por %p276, %p277
      %p279 = scmp.ne.s32.totalorder %s267, %s268
      %p280 = scmp.eq.s32.totalorder %s26, 5
      %p281 = por %p279, %p280
      %p283 = scmp.ne.s32.totalorder %s268, %s282
      %p284 = scmp.eq.s32.totalorder %s26, 0
      %p285 = por %p283, %p284
      %p286 = scmp.le.s32.totalorder 1, %s20
      %p287 = scmp.lt.s32.totalorder %s20, 7
      %p288 = pnand %p286, %p287
      %p289 = pneg %p288
      // Predicated region
      $region9: #{tpu_custom_call.1} parent=5 // pred_check
        _
      $region10: #{tpu_custom_call.1} parent=5 // pred_check_branch
        %291 = sbr.rel (%p288) target = $region12
      $region11: #{tpu_custom_call.1} parent=5 // pred_region
        %s292 = ssub.s32 %s20, 1
        // Predicated region
        $region13: #{tpu_custom_call.1} parent=11 // pred_check
          %p293 = pneg %p53
        $region14: #{tpu_custom_call.1} parent=11 // pred_check_branch
          %295 = sbr.rel (%p293) target = $region16
        $region15: #{tpu_custom_call.1} parent=11 // pred_region
          _
        $region16: #{tpu_custom_call.1} parent=11 // pred_fallthru
          _
        // Predicated region
        $region17: #{tpu_custom_call.1} parent=11 // pred_check
          %p296 = pneg %p152
        $region18: #{tpu_custom_call.1} parent=11 // pred_check_branch
          %298 = sbr.rel (%p296) target = $region20
        $region19: #{tpu_custom_call.1} parent=11 // pred_region
          _
        $region20: #{tpu_custom_call.1} parent=11 // pred_fallthru
          _
        // Predicated region
        $region21: #{tpu_custom_call.1} parent=11 // pred_check
          %p299 = pneg %p173
        $region22: #{tpu_custom_call.1} parent=11 // pred_check_branch
          %301 = sbr.rel (%p299) target = $region24
        $region23: #{tpu_custom_call.1} parent=11 // pred_region
          _
        $region24: #{tpu_custom_call.1} parent=11 // pred_fallthru
          _
        // Predicated region
        $region25: #{tpu_custom_call.1} parent=11 // pred_check
          %p302 = pneg %p194
        $region26: #{tpu_custom_call.1} parent=11 // pred_check_branch
          %304 = sbr.rel (%p302) target = $region28
        $region27: #{tpu_custom_call.1} parent=11 // pred_region
          _
        $region28: #{tpu_custom_call.1} parent=11 // pred_fallthru
          _
        // Predicated region
        $region29: #{tpu_custom_call.1} parent=11 // pred_check
          %p305 = pneg %p215
        $region30: #{tpu_custom_call.1} parent=11 // pred_check_branch
          %307 = sbr.rel (%p305) target = $region32
        $region31: #{tpu_custom_call.1} parent=11 // pred_region
          %s309 = ssub.s32 17408, 17408
          %310 = vsyncadd [#allocation5], %s309
          %s311 = sshll.u32 [#allocation4], 4
          %s312 = int_to_ptr.vmem [resolvable:$true] %s311
          %317 = dma.hbm_to_vmem [thread:$0]  %s7, 17408, %s312, [#allocation5], 1024, 1024, 64
        $region32: #{tpu_custom_call.1} parent=11 // pred_fallthru
          _
        // Predicated region
        $region33: #{tpu_custom_call.1} parent=11 // pred_check
          %p318 = pneg %p236
        $region34: #{tpu_custom_call.1} parent=11 // pred_check_branch
          %320 = sbr.rel (%p318) target = $region36
        $region35: #{tpu_custom_call.1} parent=11 // pred_region
          _
        $region36: #{tpu_custom_call.1} parent=11 // pred_fallthru
          _
      $region12: #{tpu_custom_call.1} parent=5 // pred_fallthru
        _
      %p321 = scmp.lt.s32.totalorder %s20, 6
      // Predicated region
      $region37: #{tpu_custom_call.1} parent=5 // pred_check
        %p322 = pneg %p321
      $region38: #{tpu_custom_call.1} parent=5 // pred_check_branch
        %324 = sbr.rel (%p322) target = $region40
      $region39: #{tpu_custom_call.1} parent=5 // pred_region
        // Predicated region
        $region41: #{tpu_custom_call.1} parent=39 // pred_check
          %p325 = pneg %p73
        $region42: #{tpu_custom_call.1} parent=39 // pred_check_branch
          %327 = sbr.rel (%p325) target = $region44
        $region43: #{tpu_custom_call.1} parent=39 // pred_region
          %s328 = smul.u32 16, %s28
          %p329 = scmp.lt.s32.totalorder %s328, 31
          %s330 = scalar_select %p329, %s328, 31
          %s331 = smul.addr %s330, 8
          %s332 = scalar_lea.vmem %s1, %s331
          %s333 = smul.u32 16, %s28
        $region44: #{tpu_custom_call.1} parent=39 // pred_fallthru
          _
        // Predicated region
        $region45: #{tpu_custom_call.1} parent=39 // pred_check
          %p334 = pneg %p99
        $region46: #{tpu_custom_call.1} parent=39 // pred_check_branch
          %336 = sbr.rel (%p334) target = $region48
        $region47: #{tpu_custom_call.1} parent=39 // pred_region
          %s337 = smul.u32 16, %s28
          %p338 = scmp.lt.s32.totalorder %s337, 31
          %s339 = scalar_select %p338, %s337, 31
          %s340 = smul.addr %s339, 4
          %s341 = scalar_lea.vmem %s2, %s340
          %s342 = smul.u32 16, %s28
        $region48: #{tpu_custom_call.1} parent=39 // pred_fallthru
          _
        // Predicated region
        $region49: #{tpu_custom_call.1} parent=39 // pred_check
          %p343 = pneg %p125
        $region50: #{tpu_custom_call.1} parent=39 // pred_check_branch
          %345 = sbr.rel (%p343) target = $region52
        $region51: #{tpu_custom_call.1} parent=39 // pred_region
          %p346 = scmp.lt.s32.totalorder %s28, 1
          %s347 = scalar_select %p346, %s28, 1
          %s348 = smul.addr %s347, 4
          %s349 = scalar_lea.vmem %s3, %s348
        $region52: #{tpu_custom_call.1} parent=39 // pred_fallthru
          _
      $region40: #{tpu_custom_call.1} parent=5 // pred_fallthru
        _
      %p350 = scmp.le.s32.totalorder 1, %s20
      %p351 = scmp.lt.s32.totalorder %s20, 7
      %p352 = pnand %p350, %p351
      %p353 = pneg %p352
      // Predicated region
      $region53: #{tpu_custom_call.1} parent=5 // pred_check
        _
      $region54: #{tpu_custom_call.1} parent=5 // pred_check_branch
        %355 = sbr.rel (%p352) target = $region56
      $region55: #{tpu_custom_call.1} parent=5 // pred_region
        %s356 = ssub.s32 %s20, 1
        // Predicated region
        $region57: #{tpu_custom_call.1} parent=55 // pred_check
          %p357 = pneg %p215
        $region58: #{tpu_custom_call.1} parent=55 // pred_check_branch
          %359 = sbr.rel (%p357) target = $region60
        $region59: #{tpu_custom_call.1} parent=55 // pred_region
          %360 = dma.done [#allocation5], 17408
        $region60: #{tpu_custom_call.1} parent=55 // pred_fallthru
          _
        %p361 = pneg %p53
        %p362 = pneg %p50
        %s363 = smul.u32 16, %s30
        %p364 = scmp.lt.s32.totalorder %s363, 31
        %s365 = scalar_select %p364, %s363, 31
        %s366 = smul.addr %s365, 8
        %s367 = scalar_lea.vmem %s1, %s366
        %p368 = pneg %p79
        %p369 = pneg %p76
        %s370 = smul.u32 16, %s30
        %p371 = scmp.lt.s32.totalorder %s370, 31
        %s372 = scalar_select %p371, %s370, 31
        %s373 = smul.addr %s372, 4
        %s374 = scalar_lea.vmem %s2, %s373
        %p375 = pneg %p105
        %p376 = pneg %p102
        %p377 = scmp.lt.s32.totalorder %s30, 1
        %s378 = scalar_select %p377, %s30, 1
        %s379 = smul.addr %s378, 4
        %s380 = scalar_lea.vmem %s3, %s379
        %p381 = pneg %p131
        %p382 = pneg %p128
        %p383 = pneg %p152
        %p384 = pneg %p149
        %p385 = pneg %p173
        %p386 = pneg %p170
        %p387 = pneg %p194
        %p388 = pneg %p191
        %p389 = pneg %p215
        %p390 = pneg %p212
        %p391 = pneg %p236
        %p392 = pneg %p233
        %p393 = pneg %p257
        %p394 = pneg %p254
        %p395 = pneg %p278
        %p396 = pneg %p275
        %s397 = smul.u32 16, %s30
        %p398 = scmp.lt.s32.totalorder %s397, 31
        %s399 = scalar_select %p398, %s397, 31
        %s400 = smul.addr %s399, 8
        %s401 = scalar_lea.vmem %s1, %s400
        %s402 = smul.u32 16, %s30
        %s403 = smul.u32 16, %s30
        %p404 = scmp.lt.s32.totalorder %s403, 31
        %s405 = scalar_select %p404, %s403, 31
        %s406 = smul.addr %s405, 4
        %s407 = scalar_lea.vmem %s2, %s406
        %s408 = smul.u32 16, %s30
        %p409 = scmp.lt.s32.totalorder %s30, 1
        %s410 = scalar_select %p409, %s30, 1
        %s411 = smul.addr %s410, 4
        %s412 = scalar_lea.vmem %s3, %s411
        %v414 = vld [vmem:[%s6] sm:$0xff]
        %v415 = vld [vmem:[%s6 + $0x8] sm:$0xff]
        %v416 = vld [vmem:[%s6 + $0x10] sm:$0xff]
        %v417 = vld [vmem:[%s6 + $0x18] sm:$0xff]
        %v418 = vld [vmem:[%s6 + $0x20] sm:$0xff]
        %v419 = vld [vmem:[%s6 + $0x28] sm:$0xff]
        %v420 = vld [vmem:[%s6 + $0x30] sm:$0xff]
        %v421 = vld [vmem:[%s6 + $0x38] sm:$0xff]
        %v422 = vld [vmem:[%s6 + $0x40] sm:$0xff]
        %v423 = vld [vmem:[%s6 + $0x48] sm:$0xff]
        %v424 = vld [vmem:[%s6 + $0x50] sm:$0xff]
        %v425 = vld [vmem:[%s6 + $0x58] sm:$0xff]
        %v426 = vld [vmem:[%s6 + $0x60] sm:$0xff]
        %v427 = vld [vmem:[%s6 + $0x68] sm:$0xff]
        %v428 = vld [vmem:[%s6 + $0x70] sm:$0xff]
        %v429 = vld [vmem:[%s6 + $0x78] sm:$0xff]
        %v430 = vld [vmem:[%s6 + $0x80] sm:$0xff]
        %v431 = vld [vmem:[%s6 + $0x88] sm:$0xff]
        %v432 = vld [vmem:[%s6 + $0x90] sm:$0xff]
        %v433 = vld [vmem:[%s6 + $0x98] sm:$0xff]
        %v434 = vld [vmem:[%s6 + $0xa0] sm:$0xff]
        %v435 = vld [vmem:[%s6 + $0xa8] sm:$0xff]
        %v436 = vld [vmem:[%s6 + $0xb0] sm:$0xff]
        %v437 = vld [vmem:[#allocation4] sm:$0xff]
        %v438 = vld [vmem:[#allocation4 + $0x8] sm:$0xff]
        %v439 = vld [vmem:[#allocation4 + $0x10] sm:$0xff]
        %v440 = vld [vmem:[#allocation4 + $0x18] sm:$0xff]
        %v441 = vld [vmem:[#allocation4 + $0x20] sm:$0xff]
        %v442 = vld [vmem:[#allocation4 + $0x28] sm:$0xff]
        %v443 = vld [vmem:[#allocation4 + $0x30] sm:$0xff]
        %v444 = vld [vmem:[#allocation4 + $0x38] sm:$0xff]
        %v445 = vld [vmem:[#allocation4 + $0x40] sm:$0xff]
        %v446 = vld [vmem:[#allocation4 + $0x48] sm:$0xff]
        %v447 = vld [vmem:[#allocation4 + $0x50] sm:$0xff]
        %v448 = vld [vmem:[#allocation4 + $0x58] sm:$0xff]
        %v449 = vld [vmem:[#allocation4 + $0x60] sm:$0xff]
        %v450 = vld [vmem:[#allocation4 + $0x68] sm:$0xff]
        %v451 = vld [vmem:[#allocation4 + $0x70] sm:$0xff]
        %v452 = vld [vmem:[#allocation4 + $0x78] sm:$0xff]
        %v453 = vld [vmem:[#allocation4 + $0x80] sm:$0xff]
        %v454 = vld [vmem:[#allocation4 + $0x88] sm:$0xff]
        %v455 = vld [vmem:[#allocation4 + $0x90] sm:$0xff]
        %v456 = vld [vmem:[#allocation4 + $0x98] sm:$0xff]
        %v457 = vld [vmem:[#allocation4 + $0xa0] sm:$0xff]
        %v458 = vld [vmem:[#allocation4 + $0xa8] sm:$0xff]
        %v459 = vld [vmem:[#allocation4 + $0xb0] sm:$0xff]
        %v460 = vld [vmem:[#allocation4 + $0xb8] sm:$0xff]
        %v461 = vld [vmem:[#allocation4 + $0xc0] sm:$0xff]
        %v462 = vld [vmem:[#allocation4 + $0xc8] sm:$0xff]
        %v463 = vld [vmem:[#allocation4 + $0xd0] sm:$0xff]
        %v464 = vld [vmem:[#allocation4 + $0xd8] sm:$0xff]
        %v465 = vld [vmem:[#allocation4 + $0xe0] sm:$0xff]
        %v466 = vld [vmem:[#allocation4 + $0xe8] sm:$0xff]
        %v467 = vld [vmem:[#allocation4 + $0xf0] sm:$0xff]
        %v468 = vld [vmem:[#allocation4 + $0xf8] sm:$0xff]
        %v469 = vld [vmem:[#allocation4 + $0x100] sm:$0xff]
        %v470 = vld [vmem:[#allocation4 + $0x108] sm:$0xff]
        %v471 = vld [vmem:[#allocation4 + $0x110] sm:$0xff]
        %v472 = vld [vmem:[#allocation4 + $0x118] sm:$0xff]
        %v473 = vld [vmem:[#allocation4 + $0x120] sm:$0xff]
        %v474 = vld [vmem:[#allocation4 + $0x128] sm:$0xff]
        %v475 = vld [vmem:[#allocation4 + $0x130] sm:$0xff]
        %v476 = vld [vmem:[#allocation4 + $0x138] sm:$0xff]
        %v477 = vld [vmem:[#allocation4 + $0x140] sm:$0xff]
        %v478 = vld [vmem:[#allocation4 + $0x148] sm:$0xff]
        %v479 = vld [vmem:[#allocation4 + $0x150] sm:$0xff]
        %v480 = vld [vmem:[#allocation4 + $0x158] sm:$0xff]
        %v481 = vld [vmem:[#allocation4 + $0x160] sm:$0xff]
        %v482 = vld [vmem:[#allocation4 + $0x168] sm:$0xff]
        %v483 = vld [vmem:[#allocation4 + $0x170] sm:$0xff]
        %v484 = vld [vmem:[#allocation4 + $0x178] sm:$0xff]
        %v485 = vld [vmem:[#allocation4 + $0x180] sm:$0xff]
        %v486 = vld [vmem:[#allocation4 + $0x188] sm:$0xff]
        %v487 = vld [vmem:[#allocation4 + $0x190] sm:$0xff]
        %v488 = vld [vmem:[#allocation4 + $0x198] sm:$0xff]
        %v489 = vld [vmem:[#allocation4 + $0x1a0] sm:$0xff]
        %v490 = vld [vmem:[#allocation4 + $0x1a8] sm:$0xff]
        %v491 = vld [vmem:[#allocation4 + $0x1b0] sm:$0xff]
        %v492 = vld [vmem:[#allocation4 + $0x1b8] sm:$0xff]
        %v493 = vld [vmem:[#allocation4 + $0x1c0] sm:$0xff]
        %v494 = vld [vmem:[#allocation4 + $0x1c8] sm:$0xff]
        %v495 = vld [vmem:[#allocation4 + $0x1d0] sm:$0xff]
        %v496 = vld [vmem:[#allocation4 + $0x1d8] sm:$0xff]
        %v497 = vld [vmem:[#allocation4 + $0x1e0] sm:$0xff]
        %v498 = vld [vmem:[#allocation4 + $0x1e8] sm:$0xff]
        %v499 = vld [vmem:[#allocation4 + $0x1f0] sm:$0xff]
        %v500 = vld [vmem:[#allocation4 + $0x1f8] sm:$0xff]
        %v501 = vld [vmem:[#allocation4 + $0x200] sm:$0xff]
        %v502 = vld [vmem:[#allocation4 + $0x208] sm:$0xff]
        %v503 = vld [vmem:[#allocation4 + $0x210] sm:$0xff]
        %v504 = vld [vmem:[#allocation4 + $0x218] sm:$0xff]
        %v505 = vld [vmem:[#allocation4 + $0x220] sm:$0xff]
        %v506 = vld [vmem:[#allocation4 + $0x228] sm:$0xff]
        %v507 = vld [vmem:[#allocation4 + $0x230] sm:$0xff]
        %v508 = vld [vmem:[#allocation4 + $0x238] sm:$0xff]
        %v509 = vld [vmem:[#allocation4 + $0x240] sm:$0xff]
        %v510 = vld [vmem:[#allocation4 + $0x248] sm:$0xff]
        %v511 = vld [vmem:[#allocation4 + $0x250] sm:$0xff]
        %v512 = vld [vmem:[#allocation4 + $0x258] sm:$0xff]
        %v513 = vld [vmem:[#allocation4 + $0x260] sm:$0xff]
        %v514 = vld [vmem:[#allocation4 + $0x268] sm:$0xff]
        %v515 = vld [vmem:[#allocation4 + $0x270] sm:$0xff]
        %v516 = vld [vmem:[#allocation4 + $0x278] sm:$0xff]
        %v517 = vld [vmem:[#allocation4 + $0x280] sm:$0xff]
        %v518 = vld [vmem:[#allocation4 + $0x288] sm:$0xff]
        %v519 = vld [vmem:[#allocation4 + $0x290] sm:$0xff]
        %v520 = vld [vmem:[#allocation4 + $0x298] sm:$0xff]
        %v521 = vld [vmem:[#allocation4 + $0x2a0] sm:$0xff]
        %v522 = vld [vmem:[#allocation4 + $0x2a8] sm:$0xff]
        %v523 = vld [vmem:[#allocation4 + $0x2b0] sm:$0xff]
        %v524 = vld [vmem:[#allocation4 + $0x2b8] sm:$0xff]
        %v525 = vld [vmem:[#allocation4 + $0x2c0] sm:$0xff]
        %v526 = vld [vmem:[#allocation4 + $0x2c8] sm:$0xff]
        %v527 = vld [vmem:[#allocation4 + $0x2d0] sm:$0xff]
        %v528 = vld [vmem:[#allocation4 + $0x2d8] sm:$0xff]
        %v529 = vld [vmem:[#allocation4 + $0x2e0] sm:$0xff]
        %v530 = vld [vmem:[#allocation4 + $0x2e8] sm:$0xff]
        %v531 = vld [vmem:[#allocation4 + $0x2f0] sm:$0xff]
        %v532 = vld [vmem:[#allocation4 + $0x2f8] sm:$0xff]
        %v533 = vld [vmem:[#allocation4 + $0x300] sm:$0xff]
        %v534 = vld [vmem:[#allocation4 + $0x308] sm:$0xff]
        %v535 = vld [vmem:[#allocation4 + $0x310] sm:$0xff]
        %v536 = vld [vmem:[#allocation4 + $0x318] sm:$0xff]
        %v537 = vld [vmem:[#allocation4 + $0x320] sm:$0xff]
        %v538 = vld [vmem:[#allocation4 + $0x328] sm:$0xff]
        %v539 = vld [vmem:[#allocation4 + $0x330] sm:$0xff]
        %v540 = vld [vmem:[#allocation4 + $0x338] sm:$0xff]
        %v541 = vld [vmem:[#allocation4 + $0x340] sm:$0xff]
        %v542 = vld [vmem:[#allocation4 + $0x348] sm:$0xff]
        %v543 = vld [vmem:[#allocation4 + $0x350] sm:$0xff]
        %v544 = vld [vmem:[#allocation4 + $0x358] sm:$0xff]
        %v545 = vld [vmem:[#allocation4 + $0x360] sm:$0xff]
        %v546 = vld [vmem:[#allocation4 + $0x368] sm:$0xff]
        %v547 = vld [vmem:[#allocation4 + $0x370] sm:$0xff]
        %v548 = vld [vmem:[#allocation4 + $0x378] sm:$0xff]
        %v549 = vld [vmem:[#allocation4 + $0x380] sm:$0xff]
        %v550 = vld [vmem:[#allocation4 + $0x388] sm:$0xff]
        %v551 = vld [vmem:[#allocation4 + $0x390] sm:$0xff]
        %v552 = vld [vmem:[#allocation4 + $0x398] sm:$0xff]
        %v553 = vld [vmem:[#allocation4 + $0x3a0] sm:$0xff]
        %v554 = vld [vmem:[#allocation4 + $0x3a8] sm:$0xff]
        %v555 = vld [vmem:[#allocation4 + $0x3b0] sm:$0xff]
        %v556 = vld [vmem:[#allocation4 + $0x3b8] sm:$0xff]
        %v557 = vld [vmem:[#allocation4 + $0x3c0] sm:$0xff]
        %v558 = vld [vmem:[#allocation4 + $0x3c8] sm:$0xff]
        %v559 = vld [vmem:[#allocation4 + $0x3d0] sm:$0xff]
        %v560 = vld [vmem:[#allocation4 + $0x3d8] sm:$0xff]
        %v561 = vld [vmem:[#allocation4 + $0x3e0] sm:$0xff]
        %v562 = vld [vmem:[#allocation4 + $0x3e8] sm:$0xff]
        %v563 = vld [vmem:[#allocation4 + $0x3f0] sm:$0xff]
        %v564 = vld [vmem:[#allocation4 + $0x3f8] sm:$0xff]
        %s565 = scalar_lea.vmem [#allocation4], 1024
        %v566 = vld [vmem:[%s565] ss:$8 sm:$0xf]
        %v567 = vld [vmem:[%s565] ss:$8 sm:$0xf0]
        %v568 = vor.u32 %v566, %v567
        %p569 = scmp.eq.s32.totalorder %s29, 0
        %p570 = scmp.eq.s32.totalorder %s30, 0
        %p571 = pnand %p569, %p570
        %p572 = pneg %p571
        // Predicated region
        $region61: #{tpu_custom_call.1} parent=55 // pred_check
          _
        $region62: #{tpu_custom_call.1} parent=55 // pred_check_branch
          %574 = sbr.rel (%p571) target = $region64
        $region63: #{tpu_custom_call.1} parent=55 // pred_region
          %v575 = vld [vmem:[%s0] sm:$0xff]
          %vm576 = vcmask 56320
          %v578 = vsel %vm576, %v575, 0
          %vm580 = vcmask 1046528
          %v582 = vsel %vm580, %v414, 0
          %584 = vmatprep.subr.mxu0 0.0
          %585 = vmatpush1.msra.mxu0 %v582
          %586 = vmatprep.subr.mxu0 0.0
          %587 = vmatpush1.msra.mxu0 0.0
          %588 = vmatprep.subr.mxu0 0.0
          %589 = vmatpush1.msra.mxu0 0.0
          %590 = vmatprep.subr.mxu0 0.0
          %591 = vmatpush1.msra.mxu0 0.0
          %592 = vmatprep.subr.mxu0 0.0
          %593 = vmatpush1.msra.mxu0 0.0
          %594 = vmatprep.subr.mxu0 0.0
          %595 = vmatpush1.msra.mxu0 0.0
          %596 = vmatprep.subr.mxu0 0.0
          %597 = vmatpush1.msra.mxu0 0.0
          %598 = vmatprep.subr.mxu0 0.0
          %599 = vmatpush1.msra.mxu0 0.0
          %600 = vmatprep.subr.mxu0 0.0
          %601 = vmatpush1.msra.mxu0 0.0
          %602 = vmatprep.subr.mxu0 0.0
          %603 = vmatpush1.msra.mxu0 0.0
          %604 = vmatprep.subr.mxu0 0.0
          %605 = vmatpush1.msra.mxu0 0.0
          %606 = vmatprep.subr.mxu0 0.0
          %607 = vmatpush1.msra.mxu0 0.0
          %608 = vmatprep.subr.mxu0 0.0
          %609 = vmatpush1.msra.mxu0 0.0
          %610 = vmatprep.subr.mxu0 0.0
          %611 = vmatpush1.msra.mxu0 0.0
          %612 = vmatprep.subr.mxu0 0.0
          %613 = vmatpush1.msra.mxu0 0.0
          %614 = vmatprep.subr.mxu0 0.0
          %615 = vmatpush1.msra.mxu0 0.0
          %616 = vmatprep.subr.mxu0 0.0
          %617 = vmatpush1.msra.mxu0 0.0
          %618 = vmatprep.subr.mxu0 0.0
          %619 = vmatpush1.msra.mxu0 0.0
          %620 = vmatprep.subr.mxu0 0.0
          %621 = vmatpush1.msra.mxu0 0.0
          %622 = vmatprep.subr.mxu0 0.0
          %623 = vmatpush1.msra.mxu0 0.0
          %624 = vmatprep.subr.mxu0 0.0
          %625 = vmatpush1.msra.mxu0 0.0
          %626 = vmatprep.subr.mxu0 0.0
          %627 = vmatpush1.msra.mxu0 0.0
          %628 = vmatprep.subr.mxu0 0.0
          %629 = vmatpush1.msra.mxu0 0.0
          %630 = vmatprep.subr.mxu0 0.0
          %631 = vmatpush1.msra.mxu0 0.0
          %632 = vmatprep.subr.mxu0 0.0
          %633 = vmatpush1.msra.mxu0 0.0
          %634 = vmatprep.subr.mxu0 0.0
          %635 = vmatpush1.msra.mxu0 0.0
          %636 = vmatprep.subr.mxu0 0.0
          %637 = vmatpush1.msra.mxu0 0.0
          %638 = vmatprep.subr.mxu0 0.0
          %639 = vmatpush1.msra.mxu0 0.0
          %640 = vmatprep.subr.mxu0 0.0
          %641 = vmatpush1.msra.mxu0 0.0
          %642 = vmatprep.subr.mxu0 0.0
          %643 = vmatpush1.msra.mxu0 0.0
          %644 = vmatprep.subr.mxu0 0.0
          %645 = vmatpush1.msra.mxu0 0.0
          %646 = vmatprep.subr.mxu0 0.0
          %647 = vmatpush1.msra.mxu0 0.0
          %648 = vmatprep.mubr.f32.mxu0 0.0
          %649 = vmatmul.mubr.f32.gmra.mrb[0].mxu0 %v578
          %v650 = vpop.f32.mrb[0].mxu0
          %v651 = vadd.f32 0.0, %v650
          %v652 = vpop.f32.mrb[0].mxu0
          %653 = vdwg.mxu0
          %v654 = vmax.f32 %v651, 0.0
          %vm655 = vcmask 261120
          %656 = vst.msk [vmem:[#allocation2] sm:$0xff] %vm655, %v654
        $region64: #{tpu_custom_call.1} parent=55 // pred_fallthru
          _
        // Predicated region
        $region65: #{tpu_custom_call.1} parent=55 // pred_check
          %p657 = pneg %p570
        $region66: #{tpu_custom_call.1} parent=55 // pred_check_branch
          %659 = sbr.rel (%p657) target = $region68
        $region67: #{tpu_custom_call.1} parent=55 // pred_region
          %vm660 = vcmask 261120
          %661 = vst.msk [vmem:[#allocation3] sm:$0xff] %vm660, 0.0
        $region68: #{tpu_custom_call.1} parent=55 // pred_fallthru
          _
        %v662 = vld [vmem:[%s401] sm:$0xff]
        %v663 = vld [vmem:[%s401 + $0x8] sm:$0xff]
        %v664 = vld [vmem:[%s401 + $0x10] sm:$0xff]
        %v665 = vld [vmem:[%s401 + $0x18] sm:$0xff]
        %v666 = vld [vmem:[%s401 + $0x20] sm:$0xff]
        %v667 = vld [vmem:[%s401 + $0x28] sm:$0xff]
        %v668 = vld [vmem:[%s401 + $0x30] sm:$0xff]
        %v669 = vld [vmem:[%s401 + $0x38] sm:$0xff]
        %v670 = vld [vmem:[%s401 + $0x40] sm:$0xff]
        %v671 = vld [vmem:[%s401 + $0x48] sm:$0xff]
        %v672 = vld [vmem:[%s401 + $0x50] sm:$0xff]
        %v673 = vld [vmem:[%s401 + $0x58] sm:$0xff]
        %v674 = vld [vmem:[%s401 + $0x60] sm:$0xff]
        %v675 = vld [vmem:[%s401 + $0x68] sm:$0xff]
        %v676 = vld [vmem:[%s401 + $0x70] sm:$0xff]
        %v677 = vld [vmem:[%s401 + $0x78] sm:$0xff]
        %vm678 = vcmask 48128
        %v680 = vsel %vm678, %v662, 0
        %v683 = vsel %vm678, %v663, 0
        %v686 = vsel %vm678, %v664, 0
        %v689 = vsel %vm678, %v665, 0
        %v692 = vsel %vm678, %v666, 0
        %v695 = vsel %vm678, %v667, 0
        %v698 = vsel %vm678, %v668, 0
        %v701 = vsel %vm678, %v669, 0
        %v704 = vsel %vm678, %v670, 0
        %v707 = vsel %vm678, %v671, 0
        %v710 = vsel %vm678, %v672, 0
        %v713 = vsel %vm678, %v673, 0
        %v716 = vsel %vm678, %v674, 0
        %v719 = vsel %vm678, %v675, 0
        %v722 = vsel %vm678, %v676, 0
        %v725 = vsel %vm678, %v677, 0
        %vm727 = vcmask 1045504
        %v729 = vsel %vm727, %v415, 0
        %731 = vmatprep.subr.mxu0 0.0
        %732 = vmatpush1.msra.mxu0 %v729
        %733 = vmatprep.subr.mxu0 0.0
        %734 = vmatpush1.msra.mxu0 0.0
        %735 = vmatprep.subr.mxu0 0.0
        %736 = vmatpush1.msra.mxu0 0.0
        %737 = vmatprep.subr.mxu0 0.0
        %738 = vmatpush1.msra.mxu0 0.0
        %739 = vmatprep.subr.mxu0 0.0
        %740 = vmatpush1.msra.mxu0 0.0
        %741 = vmatprep.subr.mxu0 0.0
        %742 = vmatpush1.msra.mxu0 0.0
        %743 = vmatprep.subr.mxu0 0.0
        %744 = vmatpush1.msra.mxu0 0.0
        %745 = vmatprep.subr.mxu0 0.0
        %746 = vmatpush1.msra.mxu0 0.0
        %747 = vmatprep.subr.mxu0 0.0
        %748 = vmatpush1.msra.mxu0 0.0
        %749 = vmatprep.subr.mxu0 0.0
        %750 = vmatpush1.msra.mxu0 0.0
        %751 = vmatprep.subr.mxu0 0.0
        %752 = vmatpush1.msra.mxu0 0.0
        %753 = vmatprep.subr.mxu0 0.0
        %754 = vmatpush1.msra.mxu0 0.0
        %755 = vmatprep.subr.mxu0 0.0
        %756 = vmatpush1.msra.mxu0 0.0
        %757 = vmatprep.subr.mxu0 0.0
        %758 = vmatpush1.msra.mxu0 0.0
        %759 = vmatprep.subr.mxu0 0.0
        %760 = vmatpush1.msra.mxu0 0.0
        %761 = vmatprep.subr.mxu0 0.0
        %762 = vmatpush1.msra.mxu0 0.0
        %763 = vmatprep.subr.mxu0 0.0
        %764 = vmatpush1.msra.mxu0 0.0
        %765 = vmatprep.subr.mxu0 0.0
        %766 = vmatpush1.msra.mxu0 0.0
        %767 = vmatprep.subr.mxu0 0.0
        %768 = vmatpush1.msra.mxu0 0.0
        %769 = vmatprep.subr.mxu0 0.0
        %770 = vmatpush1.msra.mxu0 0.0
        %771 = vmatprep.subr.mxu0 0.0
        %772 = vmatpush1.msra.mxu0 0.0
        %773 = vmatprep.subr.mxu0 0.0
        %774 = vmatpush1.msra.mxu0 0.0
        %775 = vmatprep.subr.mxu0 0.0
        %776 = vmatpush1.msra.mxu0 0.0
        %777 = vmatprep.subr.mxu0 0.0
        %778 = vmatpush1.msra.mxu0 0.0
        %779 = vmatprep.subr.mxu0 0.0
        %780 = vmatpush1.msra.mxu0 0.0
        %781 = vmatprep.subr.mxu0 0.0
        %782 = vmatpush1.msra.mxu0 0.0
        %783 = vmatprep.subr.mxu0 0.0
        %784 = vmatpush1.msra.mxu0 0.0
        %785 = vmatprep.subr.mxu0 0.0
        %786 = vmatpush1.msra.mxu0 0.0
        %787 = vmatprep.subr.mxu0 0.0
        %788 = vmatpush1.msra.mxu0 0.0
        %789 = vmatprep.subr.mxu0 0.0
        %790 = vmatpush1.msra.mxu0 0.0
        %791 = vmatprep.subr.mxu0 0.0
        %792 = vmatpush1.msra.mxu0 0.0
        %793 = vmatprep.subr.mxu0 0.0
        %794 = vmatpush1.msra.mxu0 0.0
        %795 = vmatprep.mubr.f32.mxu0 0.0
        %796 = vmatmul.mubr.f32.gmra.mrb[0].mxu0 %v680
        %v797 = vpop.f32.mrb[0].mxu0
        %v798 = vadd.f32 0.0, %v797
        %v799 = vpop.f32.mrb[0].mxu0
        %800 = vmatprep.mubr.f32.mxu0 0.0
        %801 = vmatmul.mubr.f32.gmra.mrb[0].mxu0 %v683
        %v802 = vpop.f32.mrb[0].mxu0
        %v803 = vadd.f32 0.0, %v802
        %v804 = vpop.f32.mrb[0].mxu0
        %805 = vmatprep.mubr.f32.mxu0 0.0
        %806 = vmatmul.mubr.f32.gmra.mrb[0].mxu0 %v686
        %v807 = vpop.f32.mrb[0].mxu0
        %v808 = vadd.f32 0.0, %v807
        %v809 = vpop.f32.mrb[0].mxu0
        %810 = vmatprep.mubr.f32.mxu0 0.0
        %811 = vmatmul.mubr.f32.gmra.mrb[0].mxu0 %v689
        %v812 = vpop.f32.mrb[0].mxu0
        %v813 = vadd.f32 0.0, %v812
        %v814 = vpop.f32.mrb[0].mxu0
        %815 = vmatprep.mubr.f32.mxu0 0.0
        %816 = vmatmul.mubr.f32.gmra.mrb[0].mxu0 %v692
        %v817 = vpop.f32.mrb[0].mxu0
        %v818 = vadd.f32 0.0, %v817
        %v819 = vpop.f32.mrb[0].mxu0
        %820 = vmatprep.mubr.f32.mxu0 0.0
        %821 = vmatmul.mubr.f32.gmra.mrb[0].mxu0 %v695
        %v822 = vpop.f32.mrb[0].mxu0
        %v823 = vadd.f32 0.0, %v822
        %v824 = vpop.f32.mrb[0].mxu0
        %825 = vmatprep.mubr.f32.mxu0 0.0
        %826 = vmatmul.mubr.f32.gmra.mrb[0].mxu0 %v698
        %v827 = vpop.f32.mrb[0].mxu0
        %v828 = vadd.f32 0.0, %v827
        %v829 = vpop.f32.mrb[0].mxu0
        %830 = vmatprep.mubr.f32.mxu0 0.0
        %831 = vmatmul.mubr.f32.gmra.mrb[0].mxu0 %v701
        %v832 = vpop.f32.mrb[0].mxu0
        %v833 = vadd.f32 0.0, %v832
        %v834 = vpop.f32.mrb[0].mxu0
        %835 = vmatprep.mubr.f32.mxu0 0.0
        %836 = vmatmul.mubr.f32.gmra.mrb[0].mxu0 %v704
        %v837 = vpop.f32.mrb[0].mxu0
        %v838 = vadd.f32 0.0, %v837
        %v839 = vpop.f32.mrb[0].mxu0
        %840 = vmatprep.mubr.f32.mxu0 0.0
        %841 = vmatmul.mubr.f32.gmra.mrb[0].mxu0 %v707
        %v842 = vpop.f32.mrb[0].mxu0
        %v843 = vadd.f32 0.0, %v842
        %v844 = vpop.f32.mrb[0].mxu0
        %845 = vmatprep.mubr.f32.mxu0 0.0
        %846 = vmatmul.mubr.f32.gmra.mrb[0].mxu0 %v710
        %v847 = vpop.f32.mrb[0].mxu0
        %v848 = vadd.f32 0.0, %v847
        %v849 = vpop.f32.mrb[0].mxu0
        %850 = vmatprep.mubr.f32.mxu0 0.0
        %851 = vmatmul.mubr.f32.gmra.mrb[0].mxu0 %v713
        %v852 = vpop.f32.mrb[0].mxu0
        %v853 = vadd.f32 0.0, %v852
        %v854 = vpop.f32.mrb[0].mxu0
        %855 = vmatprep.mubr.f32.mxu0 0.0
        %856 = vmatmul.mubr.f32.gmra.mrb[0].mxu0 %v716
        %v857 = vpop.f32.mrb[0].mxu0
        %v858 = vadd.f32 0.0, %v857
        %v859 = vpop.f32.mrb[0].mxu0
        %860 = vmatprep.mubr.f32.mxu0 0.0
        %861 = vmatmul.mubr.f32.gmra.mrb[0].mxu0 %v719
        %v862 = vpop.f32.mrb[0].mxu0
        %v863 = vadd.f32 0.0, %v862
        %v864 = vpop.f32.mrb[0].mxu0
        %865 = vmatprep.mubr.f32.mxu0 0.0
        %866 = vmatmul.mubr.f32.gmra.mrb[0].mxu0 %v722
        %v867 = vpop.f32.mrb[0].mxu0
        %v868 = vadd.f32 0.0, %v867
        %v869 = vpop.f32.mrb[0].mxu0
        %870 = vmatprep.mubr.f32.mxu0 0.0
        %871 = vmatmul.mubr.f32.gmra.mrb[0].mxu0 %v725
        %v872 = vpop.f32.mrb[0].mxu0
        %v873 = vadd.f32 0.0, %v872
        %v874 = vpop.f32.mrb[0].mxu0
        %875 = vdwg.mxu0
        %v876 = vmax.f32 %v798, 0.0
        %v877 = vmax.f32 %v803, 0.0
        %v878 = vmax.f32 %v808, 0.0
        %v879 = vmax.f32 %v813, 0.0
        %v880 = vmax.f32 %v818, 0.0
        %v881 = vmax.f32 %v823, 0.0
        %v882 = vmax.f32 %v828, 0.0
        %v883 = vmax.f32 %v833, 0.0
        %v884 = vmax.f32 %v838, 0.0
        %v885 = vmax.f32 %v843, 0.0
        %v886 = vmax.f32 %v848, 0.0
        %v887 = vmax.f32 %v853, 0.0
        %v888 = vmax.f32 %v858, 0.0
        %v889 = vmax.f32 %v863, 0.0
        %v890 = vmax.f32 %v868, 0.0
        %v891 = vmax.f32 %v873, 0.0
        %v893 = vlaneseq
        %v894 = vshrl.u32 %v893, 7
        %v895 = vsub.s32 0, %v894
        %v896 = vrot.slane %v568, %v895
        %v897 = vlaneseq
        %v898 = vshrl.u32 %v897, 7
        %v899 = vsub.s32 1, %v898
        %v900 = vrot.slane %v568, %v899
        %v901 = vlaneseq
        %v902 = vshrl.u32 %v901, 7
        %v903 = vsub.s32 2, %v902
        %v904 = vrot.slane %v568, %v903
        %v905 = vlaneseq
        %v906 = vshrl.u32 %v905, 7
        %v907 = vsub.s32 3, %v906
        %v908 = vrot.slane %v568, %v907
        %v909 = vlaneseq
        %v910 = vshrl.u32 %v909, 7
        %v911 = vsub.s32 4, %v910
        %v912 = vrot.slane %v568, %v911
        %v913 = vlaneseq
        %v914 = vshrl.u32 %v913, 7
        %v915 = vsub.s32 5, %v914
        %v916 = vrot.slane %v568, %v915
        %v917 = vlaneseq
        %v918 = vshrl.u32 %v917, 7
        %v919 = vsub.s32 6, %v918
        %v920 = vrot.slane %v568, %v919
        %v921 = vlaneseq
        %v922 = vshrl.u32 %v921, 7
        %v923 = vsub.s32 7, %v922
        %v924 = vrot.slane %v568, %v923
        %933 = vmatprep.subr.mxu0 %v438
        %934 = vmatpush1.msra.mxu0 %v437
        %935 = vmatprep.subr.mxu0 %v446
        %936 = vmatpush1.msra.mxu0 %v445
        %937 = vmatprep.subr.mxu0 %v454
        %938 = vmatpush1.msra.mxu0 %v453
        %939 = vmatprep.subr.mxu0 %v462
        %940 = vmatpush1.msra.mxu0 %v461
        %941 = vmatprep.subr.mxu0 %v470
        %942 = vmatpush1.msra.mxu0 %v469
        %943 = vmatprep.subr.mxu0 %v478
        %944 = vmatpush1.msra.mxu0 %v477
        %945 = vmatprep.subr.mxu0 %v486
        %946 = vmatpush1.msra.mxu0 %v485
        %947 = vmatprep.subr.mxu0 %v494
        %948 = vmatpush1.msra.mxu0 %v493
        %949 = vmatprep.subr.mxu0 %v502
        %950 = vmatpush1.msra.mxu0 %v501
        %951 = vmatprep.subr.mxu0 %v510
        %952 = vmatpush1.msra.mxu0 %v509
        %953 = vmatprep.subr.mxu0 %v518
        %954 = vmatpush1.msra.mxu0 %v517
        %955 = vmatprep.subr.mxu0 %v526
        %956 = vmatpush1.msra.mxu0 %v525
        %957 = vmatprep.subr.mxu0 %v534
        %958 = vmatpush1.msra.mxu0 %v533
        %959 = vmatprep.subr.mxu0 %v542
        %960 = vmatpush1.msra.mxu0 %v541
        %961 = vmatprep.subr.mxu0 %v550
        %962 = vmatpush1.msra.mxu0 %v549
        %963 = vmatprep.subr.mxu0 %v558
        %964 = vmatpush1.msra.mxu0 %v557
        %965 = vmatprep.subr.mxu0 0.0
        %966 = vmatpush1.msra.mxu0 0.0
        %967 = vmatprep.subr.mxu0 0.0
        %968 = vmatpush1.msra.mxu0 0.0
        %969 = vmatprep.subr.mxu0 0.0
        %970 = vmatpush1.msra.mxu0 0.0
        %971 = vmatprep.subr.mxu0 0.0
        %972 = vmatpush1.msra.mxu0 0.0
        %973 = vmatprep.subr.mxu0 0.0
        %974 = vmatpush1.msra.mxu0 0.0
        %975 = vmatprep.subr.mxu0 0.0
        %976 = vmatpush1.msra.mxu0 0.0
        %977 = vmatprep.subr.mxu0 0.0
        %978 = vmatpush1.msra.mxu0 0.0
        %979 = vmatprep.subr.mxu0 0.0
        %980 = vmatpush1.msra.mxu0 0.0
        %981 = vmatprep.subr.mxu0 0.0
        %982 = vmatpush1.msra.mxu0 0.0
        %983 = vmatprep.subr.mxu0 0.0
        %984 = vmatpush1.msra.mxu0 0.0
        %985 = vmatprep.subr.mxu0 0.0
        %986 = vmatpush1.msra.mxu0 0.0
        %987 = vmatprep.subr.mxu0 0.0
        %988 = vmatpush1.msra.mxu0 0.0
        %989 = vmatprep.subr.mxu0 0.0
        %990 = vmatpush1.msra.mxu0 0.0
        %991 = vmatprep.subr.mxu0 0.0
        %992 = vmatpush1.msra.mxu0 0.0
        %993 = vmatprep.subr.mxu0 0.0
        %994 = vmatpush1.msra.mxu0 0.0
        %995 = vmatprep.subr.mxu0 0.0
        %996 = vmatpush1.msra.mxu0 0.0
        %997 = vmatprep.mubr.f32.mxu0 0.0
        %998 = vmatmul.mubr.f32.gmra.mrb[0].mxu0 %v876
        %v999 = vpop.f32.mrb[0].mxu0
        %v1000 = vadd.f32 %v896, %v999
        %v1001 = vpop.f32.mrb[0].mxu0
        %v1002 = vadd.f32 %v900, %v1001
        %1003 = vmatprep.mubr.f32.mxu0 0.0
        %1004 = vmatmul.mubr.f32.gmra.mrb[0].mxu0 %v877
        %v1005 = vpop.f32.mrb[0].mxu0
        %v1006 = vadd.f32 %v896, %v1005
        %v1007 = vpop.f32.mrb[0].mxu0
        %v1008 = vadd.f32 %v900, %v1007
        %1009 = vmatprep.mubr.f32.mxu0 0.0
        %1010 = vmatmul.mubr.f32.gmra.mrb[0].mxu0 %v878
        %v1011 = vpop.f32.mrb[0].mxu0
        %v1012 = vadd.f32 %v896, %v1011
        %v1013 = vpop.f32.mrb[0].mxu0
        %v1014 = vadd.f32 %v900, %v1013
        %1015 = vmatprep.mubr.f32.mxu0 0.0
        %1016 = vmatmul.mubr.f32.gmra.mrb[0].mxu0 %v879
        %v1017 = vpop.f32.mrb[0].mxu0
        %v1018 = vadd.f32 %v896, %v1017
        %v1019 = vpop.f32.mrb[0].mxu0
        %v1020 = vadd.f32 %v900, %v1019
        %1021 = vmatprep.mubr.f32.mxu0 0.0
        %1022 = vmatmul.mubr.f32.gmra.mrb[0].mxu0 %v880
        %v1023 = vpop.f32.mrb[0].mxu0
        %v1024 = vadd.f32 %v896, %v1023
        %v1025 = vpop.f32.mrb[0].mxu0
        %v1026 = vadd.f32 %v900, %v1025
        %1027 = vmatprep.mubr.f32.mxu0 0.0
        %1028 = vmatmul.mubr.f32.gmra.mrb[0].mxu0 %v881
        %v1029 = vpop.f32.mrb[0].mxu0
        %v1030 = vadd.f32 %v896, %v1029
        %v1031 = vpop.f32.mrb[0].mxu0
        %v1032 = vadd.f32 %v900, %v1031
        %1033 = vmatprep.mubr.f32.mxu0 0.0
        %1034 = vmatmul.mubr.f32.gmra.mrb[0].mxu0 %v882
        %v1035 = vpop.f32.mrb[0].mxu0
        %v1036 = vadd.f32 %v896, %v1035
        %v1037 = vpop.f32.mrb[0].mxu0
        %v1038 = vadd.f32 %v900, %v1037
        %1039 = vmatprep.mubr.f32.mxu0 0.0
        %1040 = vmatmul.mubr.f32.gmra.mrb[0].mxu0 %v883
        %v1041 = vpop.f32.mrb[0].mxu0
        %v1042 = vadd.f32 %v896, %v1041
        %v1043 = vpop.f32.mrb[0].mxu0
        %v1044 = vadd.f32 %v900, %v1043
        %1045 = vmatprep.mubr.f32.mxu0 0.0
        %1046 = vmatmul.mubr.f32.gmra.mrb[0].mxu0 %v884
        %v1047 = vpop.f32.mrb[0].mxu0
        %v1048 = vadd.f32 %v896, %v1047
        %v1049 = vpop.f32.mrb[0].mxu0
        %v1050 = vadd.f32 %v900, %v1049
        %1051 = vmatprep.mubr.f32.mxu0 0.0
        %1052 = vmatmul.mubr.f32.gmra.mrb[0].mxu0 %v885
        %v1053 = vpop.f32.mrb[0].mxu0
        %v1054 = vadd.f32 %v896, %v1053
        %v1055 = vpop.f32.mrb[0].mxu0
        %v1056 = vadd.f32 %v900, %v1055
        %1057 = vmatprep.mubr.f32.mxu0 0.0
        %1058 = vmatmul.mubr.f32.gmra.mrb[0].mxu0 %v886
        %v1059 = vpop.f32.mrb[0].mxu0
        %v1060 = vadd.f32 %v896, %v1059
        %v1061 = vpop.f32.mrb[0].mxu0
        %v1062 = vadd.f32 %v900, %v1061
        %1063 = vmatprep.mubr.f32.mxu0 0.0
        %1064 = vmatmul.mubr.f32.gmra.mrb[0].mxu0 %v887
        %v1065 = vpop.f32.mrb[0].mxu0
        %v1066 = vadd.f32 %v896, %v1065
        %v1067 = vpop.f32.mrb[0].mxu0
        %v1068 = vadd.f32 %v900, %v1067
        %1069 = vmatprep.mubr.f32.mxu0 0.0
        %1070 = vmatmul.mubr.f32.gmra.mrb[0].mxu0 %v888
        %v1071 = vpop.f32.mrb[0].mxu0
        %v1072 = vadd.f32 %v896, %v1071
        %v1073 = vpop.f32.mrb[0].mxu0
        %v1074 = vadd.f32 %v900, %v1073
        %1075 = vmatprep.mubr.f32.mxu0 0.0
        %1076 = vmatmul.mubr.f32.gmra.mrb[0].mxu0 %v889
        %v1077 = vpop.f32.mrb[0].mxu0
        %v1078 = vadd.f32 %v896, %v1077
        %v1079 = vpop.f32.mrb[0].mxu0
        %v1080 = vadd.f32 %v900, %v1079
        %1081 = vmatprep.mubr.f32.mxu0 0.0
        %1082 = vmatmul.mubr.f32.gmra.mrb[0].mxu0 %v890
        %v1083 = vpop.f32.mrb[0].mxu0
        %v1084 = vadd.f32 %v896, %v1083
        %v1085 = vpop.f32.mrb[0].mxu0
        %v1086 = vadd.f32 %v900, %v1085
        %1087 = vmatprep.mubr.f32.mxu0 0.0
        %1088 = vmatmul.mubr.f32.gmra.mrb[0].mxu0 %v891
        %v1089 = vpop.f32.mrb[0].mxu0
        %v1090 = vadd.f32 %v896, %v1089
        %v1091 = vpop.f32.mrb[0].mxu0
        %v1092 = vadd.f32 %v900, %v1091
        %1093 = vdwg.mxu0
        %1094 = vmatprep.subr.mxu0 %v440
        %1095 = vmatpush1.msra.mxu0 %v439
        %1096 = vmatprep.subr.mxu0 %v448
        %1097 = vmatpush1.msra.mxu0 %v447
        %1098 = vmatprep.subr.mxu0 %v456
        %1099 = vmatpush1.msra.mxu0 %v455
        %1100 = vmatprep.subr.mxu0 %v464
        %1101 = vmatpush1.msra.mxu0 %v463
        %1102 = vmatprep.subr.mxu0 %v472
        %1103 = vmatpush1.msra.mxu0 %v471
        %1104 = vmatprep.subr.mxu0 %v480
        %1105 = vmatpush1.msra.mxu0 %v479
        %1106 = vmatprep.subr.mxu0 %v488
        %1107 = vmatpush1.msra.mxu0 %v487
        %1108 = vmatprep.subr.mxu0 %v496
        %1109 = vmatpush1.msra.mxu0 %v495
        %1110 = vmatprep.subr.mxu0 %v504
        %1111 = vmatpush1.msra.mxu0 %v503
        %1112 = vmatprep.subr.mxu0 %v512
        %1113 = vmatpush1.msra.mxu0 %v511
        %1114 = vmatprep.subr.mxu0 %v520
        %1115 = vmatpush1.msra.mxu0 %v519
        %1116 = vmatprep.subr.mxu0 %v528
        %1117 = vmatpush1.msra.mxu0 %v527
        %1118 = vmatprep.subr.mxu0 %v536
        %1119 = vmatpush1.msra.mxu0 %v535
        %1120 = vmatprep.subr.mxu0 %v544
        %1121 = vmatpush1.msra.mxu0 %v543
        %1122 = vmatprep.subr.mxu0 %v552
        %1123 = vmatpush1.msra.mxu0 %v551
        %1124 = vmatprep.subr.mxu0 %v560
        %1125 = vmatpush1.msra.mxu0 %v559
        %1126 = vmatprep.subr.mxu0 0.0
        %1127 = vmatpush1.msra.mxu0 0.0
        %1128 = vmatprep.subr.mxu0 0.0
        %1129 = vmatpush1.msra.mxu0 0.0
        %1130 = vmatprep.subr.mxu0 0.0
        %1131 = vmatpush1.msra.mxu0 0.0
        %1132 = vmatprep.subr.mxu0 0.0
        %1133 = vmatpush1.msra.mxu0 0.0
        %1134 = vmatprep.subr.mxu0 0.0
        %1135 = vmatpush1.msra.mxu0 0.0
        %1136 = vmatprep.subr.mxu0 0.0
        %1137 = vmatpush1.msra.mxu0 0.0
        %1138 = vmatprep.subr.mxu0 0.0
        %1139 = vmatpush1.msra.mxu0 0.0
        %1140 = vmatprep.subr.mxu0 0.0
        %1141 = vmatpush1.msra.mxu0 0.0
        %1142 = vmatprep.subr.mxu0 0.0
        %1143 = vmatpush1.msra.mxu0 0.0
        %1144 = vmatprep.subr.mxu0 0.0
        %1145 = vmatpush1.msra.mxu0 0.0
        %1146 = vmatprep.subr.mxu0 0.0
        %1147 = vmatpush1.msra.mxu0 0.0
        %1148 = vmatprep.subr.mxu0 0.0
        %1149 = vmatpush1.msra.mxu0 0.0
        %1150 = vmatprep.subr.mxu0 0.0
        %1151 = vmatpush1.msra.mxu0 0.0
        %1152 = vmatprep.subr.mxu0 0.0
        %1153 = vmatpush1.msra.mxu0 0.0
        %1154 = vmatprep.subr.mxu0 0.0
        %1155 = vmatpush1.msra.mxu0 0.0
        %1156 = vmatprep.subr.mxu0 0.0
        %1157 = vmatpush1.msra.mxu0 0.0
        %1158 = vmatprep.mubr.f32.mxu0 0.0
        %1159 = vmatmul.mubr.f32.gmra.mrb[0].mxu0 %v876
        %v1160 = vpop.f32.mrb[0].mxu0
        %v1161 = vadd.f32 %v904, %v1160
        %v1162 = vpop.f32.mrb[0].mxu0
        %v1163 = vadd.f32 %v908, %v1162
        %1164 = vmatprep.mubr.f32.mxu0 0.0
        %1165 = vmatmul.mubr.f32.gmra.mrb[0].mxu0 %v877
        %v1166 = vpop.f32.mrb[0].mxu0
        %v1167 = vadd.f32 %v904, %v1166
        %v1168 = vpop.f32.mrb[0].mxu0
        %v1169 = vadd.f32 %v908, %v1168
        %1170 = vmatprep.mubr.f32.mxu0 0.0
        %1171 = vmatmul.mubr.f32.gmra.mrb[0].mxu0 %v878
        %v1172 = vpop.f32.mrb[0].mxu0
        %v1173 = vadd.f32 %v904, %v1172
        %v1174 = vpop.f32.mrb[0].mxu0
        %v1175 = vadd.f32 %v908, %v1174
        %1176 = vmatprep.mubr.f32.mxu0 0.0
        %1177 = vmatmul.mubr.f32.gmra.mrb[0].mxu0 %v879
        %v1178 = vpop.f32.mrb[0].mxu0
        %v1179 = vadd.f32 %v904, %v1178
        %v1180 = vpop.f32.mrb[0].mxu0
        %v1181 = vadd.f32 %v908, %v1180
        %1182 = vmatprep.mubr.f32.mxu0 0.0
        %1183 = vmatmul.mubr.f32.gmra.mrb[0].mxu0 %v880
        %v1184 = vpop.f32.mrb[0].mxu0
        %v1185 = vadd.f32 %v904, %v1184
        %v1186 = vpop.f32.mrb[0].mxu0
        %v1187 = vadd.f32 %v908, %v1186
        %1188 = vmatprep.mubr.f32.mxu0 0.0
        %1189 = vmatmul.mubr.f32.gmra.mrb[0].mxu0 %v881
        %v1190 = vpop.f32.mrb[0].mxu0
        %v1191 = vadd.f32 %v904, %v1190
        %v1192 = vpop.f32.mrb[0].mxu0
        %v1193 = vadd.f32 %v908, %v1192
        %1194 = vmatprep.mubr.f32.mxu0 0.0
        %1195 = vmatmul.mubr.f32.gmra.mrb[0].mxu0 %v882
        %v1196 = vpop.f32.mrb[0].mxu0
        %v1197 = vadd.f32 %v904, %v1196
        %v1198 = vpop.f32.mrb[0].mxu0
        %v1199 = vadd.f32 %v908, %v1198
        %1200 = vmatprep.mubr.f32.mxu0 0.0
        %1201 = vmatmul.mubr.f32.gmra.mrb[0].mxu0 %v883
        %v1202 = vpop.f32.mrb[0].mxu0
        %v1203 = vadd.f32 %v904, %v1202
        %v1204 = vpop.f32.mrb[0].mxu0
        %v1205 = vadd.f32 %v908, %v1204
        %1206 = vmatprep.mubr.f32.mxu0 0.0
        %1207 = vmatmul.mubr.f32.gmra.mrb[0].mxu0 %v884
        %v1208 = vpop.f32.mrb[0].mxu0
        %v1209 = vadd.f32 %v904, %v1208
        %v1210 = vpop.f32.mrb[0].mxu0
        %v1211 = vadd.f32 %v908, %v1210
        %1212 = vmatprep.mubr.f32.mxu0 0.0
        %1213 = vmatmul.mubr.f32.gmra.mrb[0].mxu0 %v885
        %v1214 = vpop.f32.mrb[0].mxu0
        %v1215 = vadd.f32 %v904, %v1214
        %v1216 = vpop.f32.mrb[0].mxu0
        %v1217 = vadd.f32 %v908, %v1216
        %1218 = vmatprep.mubr.f32.mxu0 0.0
        %1219 = vmatmul.mubr.f32.gmra.mrb[0].mxu0 %v886
        %v1220 = vpop.f32.mrb[0].mxu0
        %v1221 = vadd.f32 %v904, %v1220
        %v1222 = vpop.f32.mrb[0].mxu0
        %v1223 = vadd.f32 %v908, %v1222
        %1224 = vmatprep.mubr.f32.mxu0 0.0
        %1225 = vmatmul.mubr.f32.gmra.mrb[0].mxu0 %v887
        %v1226 = vpop.f32.mrb[0].mxu0
        %v1227 = vadd.f32 %v904, %v1226
        %v1228 = vpop.f32.mrb[0].mxu0
        %v1229 = vadd.f32 %v908, %v1228
        %1230 = vmatprep.mubr.f32.mxu0 0.0
        %1231 = vmatmul.mubr.f32.gmra.mrb[0].mxu0 %v888
        %v1232 = vpop.f32.mrb[0].mxu0
        %v1233 = vadd.f32 %v904, %v1232
        %v1234 = vpop.f32.mrb[0].mxu0
        %v1235 = vadd.f32 %v908, %v1234
        %1236 = vmatprep.mubr.f32.mxu0 0.0
        %1237 = vmatmul.mubr.f32.gmra.mrb[0].mxu0 %v889
        %v1238 = vpop.f32.mrb[0].mxu0
        %v1239 = vadd.f32 %v904, %v1238
        %v1240 = vpop.f32.mrb[0].mxu0
        %v1241 = vadd.f32 %v908, %v1240
        %1242 = vmatprep.mubr.f32.mxu0 0.0
        %1243 = vmatmul.mubr.f32.gmra.mrb[0].mxu0 %v890
        %v1244 = vpop.f32.mrb[0].mxu0
        %v1245 = vadd.f32 %v904, %v1244
        %v1246 = vpop.f32.mrb[0].mxu0
        %v1247 = vadd.f32 %v908, %v1246
        %1248 = vmatprep.mubr.f32.mxu0 0.0
        %1249 = vmatmul.mubr.f32.gmra.mrb[0].mxu0 %v891
        %v1250 = vpop.f32.mrb[0].mxu0
        %v1251 = vadd.f32 %v904, %v1250
        %v1252 = vpop.f32.mrb[0].mxu0
        %v1253 = vadd.f32 %v908, %v1252
        %1254 = vdwg.mxu0
        %1255 = vmatprep.subr.mxu0 %v442
        %1256 = vmatpush1.msra.mxu0 %v441
        %1257 = vmatprep.subr.mxu0 %v450
        %1258 = vmatpush1.msra.mxu0 %v449
        %1259 = vmatprep.subr.mxu0 %v458
        %1260 = vmatpush1.msra.mxu0 %v457
        %1261 = vmatprep.subr.mxu0 %v466
        %1262 = vmatpush1.msra.mxu0 %v465
        %1263 = vmatprep.subr.mxu0 %v474
        %1264 = vmatpush1.msra.mxu0 %v473
        %1265 = vmatprep.subr.mxu0 %v482
        %1266 = vmatpush1.msra.mxu0 %v481
        %1267 = vmatprep.subr.mxu0 %v490
        %1268 = vmatpush1.msra.mxu0 %v489
        %1269 = vmatprep.subr.mxu0 %v498
        %1270 = vmatpush1.msra.mxu0 %v497
        %1271 = vmatprep.subr.mxu0 %v506
        %1272 = vmatpush1.msra.mxu0 %v505
        %1273 = vmatprep.subr.mxu0 %v514
        %1274 = vmatpush1.msra.mxu0 %v513
        %1275 = vmatprep.subr.mxu0 %v522
        %1276 = vmatpush1.msra.mxu0 %v521
        %1277 = vmatprep.subr.mxu0 %v530
        %1278 = vmatpush1.msra.mxu0 %v529
        %1279 = vmatprep.subr.mxu0 %v538
        %1280 = vmatpush1.msra.mxu0 %v537
        %1281 = vmatprep.subr.mxu0 %v546
        %1282 = vmatpush1.msra.mxu0 %v545
        %1283 = vmatprep.subr.mxu0 %v554
        %1284 = vmatpush1.msra.mxu0 %v553
        %1285 = vmatprep.subr.mxu0 %v562
        %1286 = vmatpush1.msra.mxu0 %v561
        %1287 = vmatprep.subr.mxu0 0.0
        %1288 = vmatpush1.msra.mxu0 0.0
        %1289 = vmatprep.subr.mxu0 0.0
        %1290 = vmatpush1.msra.mxu0 0.0
        %1291 = vmatprep.subr.mxu0 0.0
        %1292 = vmatpush1.msra.mxu0 0.0
        %1293 = vmatprep.subr.mxu0 0.0
        %1294 = vmatpush1.msra.mxu0 0.0
        %1295 = vmatprep.subr.mxu0 0.0
        %1296 = vmatpush1.msra.mxu0 0.0
        %1297 = vmatprep.subr.mxu0 0.0
        %1298 = vmatpush1.msra.mxu0 0.0
        %1299 = vmatprep.subr.mxu0 0.0
        %1300 = vmatpush1.msra.mxu0 0.0
        %1301 = vmatprep.subr.mxu0 0.0
        %1302 = vmatpush1.msra.mxu0 0.0
        %1303 = vmatprep.subr.mxu0 0.0
        %1304 = vmatpush1.msra.mxu0 0.0
        %1305 = vmatprep.subr.mxu0 0.0
        %1306 = vmatpush1.msra.mxu0 0.0
        %1307 = vmatprep.subr.mxu0 0.0
        %1308 = vmatpush1.msra.mxu0 0.0
        %1309 = vmatprep.subr.mxu0 0.0
        %1310 = vmatpush1.msra.mxu0 0.0
        %1311 = vmatprep.subr.mxu0 0.0
        %1312 = vmatpush1.msra.mxu0 0.0
        %1313 = vmatprep.subr.mxu0 0.0
        %1314 = vmatpush1.msra.mxu0 0.0
        %1315 = vmatprep.subr.mxu0 0.0
        %1316 = vmatpush1.msra.mxu0 0.0
        %1317 = vmatprep.subr.mxu0 0.0
        %1318 = vmatpush1.msra.mxu0 0.0
        %1319 = vmatprep.mubr.f32.mxu0 0.0
        %1320 = vmatmul.mubr.f32.gmra.mrb[0].mxu0 %v876
        %v1321 = vpop.f32.mrb[0].mxu0
        %v1322 = vadd.f32 %v912, %v1321
        %v1323 = vpop.f32.mrb[0].mxu0
        %v1324 = vadd.f32 %v916, %v1323
        %1325 = vmatprep.mubr.f32.mxu0 0.0
        %1326 = vmatmul.mubr.f32.gmra.mrb[0].mxu0 %v877
        %v1327 = vpop.f32.mrb[0].mxu0
        %v1328 = vadd.f32 %v912, %v1327
        %v1329 = vpop.f32.mrb[0].mxu0
        %v1330 = vadd.f32 %v916, %v1329
        %1331 = vmatprep.mubr.f32.mxu0 0.0
        %1332 = vmatmul.mubr.f32.gmra.mrb[0].mxu0 %v878
        %v1333 = vpop.f32.mrb[0].mxu0
        %v1334 = vadd.f32 %v912, %v1333
        %v1335 = vpop.f32.mrb[0].mxu0
        %v1336 = vadd.f32 %v916, %v1335
        %1337 = vmatprep.mubr.f32.mxu0 0.0
        %1338 = vmatmul.mubr.f32.gmra.mrb[0].mxu0 %v879
        %v1339 = vpop.f32.mrb[0].mxu0
        %v1340 = vadd.f32 %v912, %v1339
        %v1341 = vpop.f32.mrb[0].mxu0
        %v1342 = vadd.f32 %v916, %v1341
        %1343 = vmatprep.mubr.f32.mxu0 0.0
        %1344 = vmatmul.mubr.f32.gmra.mrb[0].mxu0 %v880
        %v1345 = vpop.f32.mrb[0].mxu0
        %v1346 = vadd.f32 %v912, %v1345
        %v1347 = vpop.f32.mrb[0].mxu0
        %v1348 = vadd.f32 %v916, %v1347
        %1349 = vmatprep.mubr.f32.mxu0 0.0
        %1350 = vmatmul.mubr.f32.gmra.mrb[0].mxu0 %v881
        %v1351 = vpop.f32.mrb[0].mxu0
        %v1352 = vadd.f32 %v912, %v1351
        %v1353 = vpop.f32.mrb[0].mxu0
        %v1354 = vadd.f32 %v916, %v1353
        %1355 = vmatprep.mubr.f32.mxu0 0.0
        %1356 = vmatmul.mubr.f32.gmra.mrb[0].mxu0 %v882
        %v1357 = vpop.f32.mrb[0].mxu0
        %v1358 = vadd.f32 %v912, %v1357
        %v1359 = vpop.f32.mrb[0].mxu0
        %v1360 = vadd.f32 %v916, %v1359
        %1361 = vmatprep.mubr.f32.mxu0 0.0
        %1362 = vmatmul.mubr.f32.gmra.mrb[0].mxu0 %v883
        %v1363 = vpop.f32.mrb[0].mxu0
        %v1364 = vadd.f32 %v912, %v1363
        %v1365 = vpop.f32.mrb[0].mxu0
        %v1366 = vadd.f32 %v916, %v1365
        %1367 = vmatprep.mubr.f32.mxu0 0.0
        %1368 = vmatmul.mubr.f32.gmra.mrb[0].mxu0 %v884
        %v1369 = vpop.f32.mrb[0].mxu0
        %v1370 = vadd.f32 %v912, %v1369
        %v1371 = vpop.f32.mrb[0].mxu0
        %v1372 = vadd.f32 %v916, %v1371
        %1373 = vmatprep.mubr.f32.mxu0 0.0
        %1374 = vmatmul.mubr.f32.gmra.mrb[0].mxu0 %v885
        %v1375 = vpop.f32.mrb[0].mxu0
        %v1376 = vadd.f32 %v912, %v1375
        %v1377 = vpop.f32.mrb[0].mxu0
        %v1378 = vadd.f32 %v916, %v1377
        %1379 = vmatprep.mubr.f32.mxu0 0.0
        %1380 = vmatmul.mubr.f32.gmra.mrb[0].mxu0 %v886
        %v1381 = vpop.f32.mrb[0].mxu0
        %v1382 = vadd.f32 %v912, %v1381
        %v1383 = vpop.f32.mrb[0].mxu0
        %v1384 = vadd.f32 %v916, %v1383
        %1385 = vmatprep.mubr.f32.mxu0 0.0
        %1386 = vmatmul.mubr.f32.gmra.mrb[0].mxu0 %v887
        %v1387 = vpop.f32.mrb[0].mxu0
        %v1388 = vadd.f32 %v912, %v1387
        %v1389 = vpop.f32.mrb[0].mxu0
        %v1390 = vadd.f32 %v916, %v1389
        %1391 = vmatprep.mubr.f32.mxu0 0.0
        %1392 = vmatmul.mubr.f32.gmra.mrb[0].mxu0 %v888
        %v1393 = vpop.f32.mrb[0].mxu0
        %v1394 = vadd.f32 %v912, %v1393
        %v1395 = vpop.f32.mrb[0].mxu0
        %v1396 = vadd.f32 %v916, %v1395
        %1397 = vmatprep.mubr.f32.mxu0 0.0
        %1398 = vmatmul.mubr.f32.gmra.mrb[0].mxu0 %v889
        %v1399 = vpop.f32.mrb[0].mxu0
        %v1400 = vadd.f32 %v912, %v1399
        %v1401 = vpop.f32.mrb[0].mxu0
        %v1402 = vadd.f32 %v916, %v1401
        %1403 = vmatprep.mubr.f32.mxu0 0.0
        %1404 = vmatmul.mubr.f32.gmra.mrb[0].mxu0 %v890
        %v1405 = vpop.f32.mrb[0].mxu0
        %v1406 = vadd.f32 %v912, %v1405
        %v1407 = vpop.f32.mrb[0].mxu0
        %v1408 = vadd.f32 %v916, %v1407
        %1409 = vmatprep.mubr.f32.mxu0 0.0
        %1410 = vmatmul.mubr.f32.gmra.mrb[0].mxu0 %v891
        %v1411 = vpop.f32.mrb[0].mxu0
        %v1412 = vadd.f32 %v912, %v1411
        %v1413 = vpop.f32.mrb[0].mxu0
        %v1414 = vadd.f32 %v916, %v1413
        %1415 = vdwg.mxu0
        %1416 = vmatprep.subr.mxu0 %v444
        %1417 = vmatpush1.msra.mxu0 %v443
        %1418 = vmatprep.subr.mxu0 %v452
        %1419 = vmatpush1.msra.mxu0 %v451
        %1420 = vmatprep.subr.mxu0 %v460
        %1421 = vmatpush1.msra.mxu0 %v459
        %1422 = vmatprep.subr.mxu0 %v468
        %1423 = vmatpush1.msra.mxu0 %v467
        %1424 = vmatprep.subr.mxu0 %v476
        %1425 = vmatpush1.msra.mxu0 %v475
        %1426 = vmatprep.subr.mxu0 %v484
        %1427 = vmatpush1.msra.mxu0 %v483
        %1428 = vmatprep.subr.mxu0 %v492
        %1429 = vmatpush1.msra.mxu0 %v491
        %1430 = vmatprep.subr.mxu0 %v500
        %1431 = vmatpush1.msra.mxu0 %v499
        %1432 = vmatprep.subr.mxu0 %v508
        %1433 = vmatpush1.msra.mxu0 %v507
        %1434 = vmatprep.subr.mxu0 %v516
        %1435 = vmatpush1.msra.mxu0 %v515
        %1436 = vmatprep.subr.mxu0 %v524
        %1437 = vmatpush1.msra.mxu0 %v523
        %1438 = vmatprep.subr.mxu0 %v532
        %1439 = vmatpush1.msra.mxu0 %v531
        %1440 = vmatprep.subr.mxu0 %v540
        %1441 = vmatpush1.msra.mxu0 %v539
        %1442 = vmatprep.subr.mxu0 %v548
        %1443 = vmatpush1.msra.mxu0 %v547
        %1444 = vmatprep.subr.mxu0 %v556
        %1445 = vmatpush1.msra.mxu0 %v555
        %1446 = vmatprep.subr.mxu0 %v564
        %1447 = vmatpush1.msra.mxu0 %v563
        %1448 = vmatprep.subr.mxu0 0.0
        %1449 = vmatpush1.msra.mxu0 0.0
        %1450 = vmatprep.subr.mxu0 0.0
        %1451 = vmatpush1.msra.mxu0 0.0
        %1452 = vmatprep.subr.mxu0 0.0
        %1453 = vmatpush1.msra.mxu0 0.0
        %1454 = vmatprep.subr.mxu0 0.0
        %1455 = vmatpush1.msra.mxu0 0.0
        %1456 = vmatprep.subr.mxu0 0.0
        %1457 = vmatpush1.msra.mxu0 0.0
        %1458 = vmatprep.subr.mxu0 0.0
        %1459 = vmatpush1.msra.mxu0 0.0
        %1460 = vmatprep.subr.mxu0 0.0
        %1461 = vmatpush1.msra.mxu0 0.0
        %1462 = vmatprep.subr.mxu0 0.0
        %1463 = vmatpush1.msra.mxu0 0.0
        %1464 = vmatprep.subr.mxu0 0.0
        %1465 = vmatpush1.msra.mxu0 0.0
        %1466 = vmatprep.subr.mxu0 0.0
        %1467 = vmatpush1.msra.mxu0 0.0
        %1468 = vmatprep.subr.mxu0 0.0
        %1469 = vmatpush1.msra.mxu0 0.0
        %1470 = vmatprep.subr.mxu0 0.0
        %1471 = vmatpush1.msra.mxu0 0.0
        %1472 = vmatprep.subr.mxu0 0.0
        %1473 = vmatpush1.msra.mxu0 0.0
        %1474 = vmatprep.subr.mxu0 0.0
        %1475 = vmatpush1.msra.mxu0 0.0
        %1476 = vmatprep.subr.mxu0 0.0
        %1477 = vmatpush1.msra.mxu0 0.0
        %1478 = vmatprep.subr.mxu0 0.0
        %1479 = vmatpush1.msra.mxu0 0.0
        %1480 = vmatprep.mubr.f32.mxu0 0.0
        %1481 = vmatmul.mubr.f32.gmra.mrb[0].mxu0 %v876
        %v1482 = vpop.f32.mrb[0].mxu0
        %v1483 = vadd.f32 %v920, %v1482
        %v1484 = vpop.f32.mrb[0].mxu0
        %v1485 = vadd.f32 %v924, %v1484
        %1486 = vmatprep.mubr.f32.mxu0 0.0
        %1487 = vmatmul.mubr.f32.gmra.mrb[0].mxu0 %v877
        %v1488 = vpop.f32.mrb[0].mxu0
        %v1489 = vadd.f32 %v920, %v1488
        %v1490 = vpop.f32.mrb[0].mxu0
        %v1491 = vadd.f32 %v924, %v1490
        %1492 = vmatprep.mubr.f32.mxu0 0.0
        %1493 = vmatmul.mubr.f32.gmra.mrb[0].mxu0 %v878
        %v1494 = vpop.f32.mrb[0].mxu0
        %v1495 = vadd.f32 %v920, %v1494
        %v1496 = vpop.f32.mrb[0].mxu0
        %v1497 = vadd.f32 %v924, %v1496
        %1498 = vmatprep.mubr.f32.mxu0 0.0
        %1499 = vmatmul.mubr.f32.gmra.mrb[0].mxu0 %v879
        %v1500 = vpop.f32.mrb[0].mxu0
        %v1501 = vadd.f32 %v920, %v1500
        %v1502 = vpop.f32.mrb[0].mxu0
        %v1503 = vadd.f32 %v924, %v1502
        %1504 = vmatprep.mubr.f32.mxu0 0.0
        %1505 = vmatmul.mubr.f32.gmra.mrb[0].mxu0 %v880
        %v1506 = vpop.f32.mrb[0].mxu0
        %v1507 = vadd.f32 %v920, %v1506
        %v1508 = vpop.f32.mrb[0].mxu0
        %v1509 = vadd.f32 %v924, %v1508
        %1510 = vmatprep.mubr.f32.mxu0 0.0
        %1511 = vmatmul.mubr.f32.gmra.mrb[0].mxu0 %v881
        %v1512 = vpop.f32.mrb[0].mxu0
        %v1513 = vadd.f32 %v920, %v1512
        %v1514 = vpop.f32.mrb[0].mxu0
        %v1515 = vadd.f32 %v924, %v1514
        %1516 = vmatprep.mubr.f32.mxu0 0.0
        %1517 = vmatmul.mubr.f32.gmra.mrb[0].mxu0 %v882
        %v1518 = vpop.f32.mrb[0].mxu0
        %v1519 = vadd.f32 %v920, %v1518
        %v1520 = vpop.f32.mrb[0].mxu0
        %v1521 = vadd.f32 %v924, %v1520
        %1522 = vmatprep.mubr.f32.mxu0 0.0
        %1523 = vmatmul.mubr.f32.gmra.mrb[0].mxu0 %v883
        %v1524 = vpop.f32.mrb[0].mxu0
        %v1525 = vadd.f32 %v920, %v1524
        %v1526 = vpop.f32.mrb[0].mxu0
        %v1527 = vadd.f32 %v924, %v1526
        %1528 = vmatprep.mubr.f32.mxu0 0.0
        %1529 = vmatmul.mubr.f32.gmra.mrb[0].mxu0 %v884
        %v1530 = vpop.f32.mrb[0].mxu0
        %v1531 = vadd.f32 %v920, %v1530
        %v1532 = vpop.f32.mrb[0].mxu0
        %v1533 = vadd.f32 %v924, %v1532
        %1534 = vmatprep.mubr.f32.mxu0 0.0
        %1535 = vmatmul.mubr.f32.gmra.mrb[0].mxu0 %v885
        %v1536 = vpop.f32.mrb[0].mxu0
        %v1537 = vadd.f32 %v920, %v1536
        %v1538 = vpop.f32.mrb[0].mxu0
        %v1539 = vadd.f32 %v924, %v1538
        %1540 = vmatprep.mubr.f32.mxu0 0.0
        %1541 = vmatmul.mubr.f32.gmra.mrb[0].mxu0 %v886
        %v1542 = vpop.f32.mrb[0].mxu0
        %v1543 = vadd.f32 %v920, %v1542
        %v1544 = vpop.f32.mrb[0].mxu0
        %v1545 = vadd.f32 %v924, %v1544
        %1546 = vmatprep.mubr.f32.mxu0 0.0
        %1547 = vmatmul.mubr.f32.gmra.mrb[0].mxu0 %v887
        %v1548 = vpop.f32.mrb[0].mxu0
        %v1549 = vadd.f32 %v920, %v1548
        %v1550 = vpop.f32.mrb[0].mxu0
        %v1551 = vadd.f32 %v924, %v1550
        %1552 = vmatprep.mubr.f32.mxu0 0.0
        %1553 = vmatmul.mubr.f32.gmra.mrb[0].mxu0 %v888
        %v1554 = vpop.f32.mrb[0].mxu0
        %v1555 = vadd.f32 %v920, %v1554
        %v1556 = vpop.f32.mrb[0].mxu0
        %v1557 = vadd.f32 %v924, %v1556
        %1558 = vmatprep.mubr.f32.mxu0 0.0
        %1559 = vmatmul.mubr.f32.gmra.mrb[0].mxu0 %v889
        %v1560 = vpop.f32.mrb[0].mxu0
        %v1561 = vadd.f32 %v920, %v1560
        %v1562 = vpop.f32.mrb[0].mxu0
        %v1563 = vadd.f32 %v924, %v1562
        %1564 = vmatprep.mubr.f32.mxu0 0.0
        %1565 = vmatmul.mubr.f32.gmra.mrb[0].mxu0 %v890
        %v1566 = vpop.f32.mrb[0].mxu0
        %v1567 = vadd.f32 %v920, %v1566
        %v1568 = vpop.f32.mrb[0].mxu0
        %v1569 = vadd.f32 %v924, %v1568
        %1570 = vmatprep.mubr.f32.mxu0 0.0
        %1571 = vmatmul.mubr.f32.gmra.mrb[0].mxu0 %v891
        %v1572 = vpop.f32.mrb[0].mxu0
        %v1573 = vadd.f32 %v920, %v1572
        %v1574 = vpop.f32.mrb[0].mxu0
        %v1575 = vadd.f32 %v924, %v1574
        %1576 = vdwg.mxu0
        %v1577 = vld [vmem:[#allocation2] sm:$0xff]
        %v1578 = vld [vmem:[%s407] sm:$0xf]
        %v1579 = vld [vmem:[%s407 + $0x4] sm:$0xf]
        %v1580 = vld [vmem:[%s407 + $0x8] sm:$0xf]
        %v1581 = vld [vmem:[%s407 + $0xc] sm:$0xf]
        %v1582 = vld [vmem:[%s407 + $0x10] sm:$0xf]
        %v1583 = vld [vmem:[%s407 + $0x14] sm:$0xf]
        %v1584 = vld [vmem:[%s407 + $0x18] sm:$0xf]
        %v1585 = vld [vmem:[%s407 + $0x1c] sm:$0xf]
        %v1586 = vld [vmem:[%s407 + $0x20] sm:$0xf]
        %v1587 = vld [vmem:[%s407 + $0x24] sm:$0xf]
        %v1588 = vld [vmem:[%s407 + $0x28] sm:$0xf]
        %v1589 = vld [vmem:[%s407 + $0x2c] sm:$0xf]
        %v1590 = vld [vmem:[%s407 + $0x30] sm:$0xf]
        %v1591 = vld [vmem:[%s407 + $0x34] sm:$0xf]
        %v1592 = vld [vmem:[%s407 + $0x38] sm:$0xf]
        %v1593 = vld [vmem:[%s407 + $0x3c] sm:$0xf]
        %v1594 = vpack.c.bf16 %v1577, %v1577
        %v1611 = vunpack.c.l.b16 %v1578
        %v1612 = vunpack.c.l.b16 %v1579
        %v1613 = vunpack.c.l.b16 %v1580
        %v1614 = vunpack.c.l.b16 %v1581
        %v1615 = vunpack.c.l.b16 %v1582
        %v1616 = vunpack.c.l.b16 %v1583
        %v1617 = vunpack.c.l.b16 %v1584
        %v1618 = vunpack.c.l.b16 %v1585
        %v1619 = vunpack.c.l.b16 %v1586
        %v1620 = vunpack.c.l.b16 %v1587
        %v1621 = vunpack.c.l.b16 %v1588
        %v1622 = vunpack.c.l.b16 %v1589
        %v1623 = vunpack.c.l.b16 %v1590
        %v1624 = vunpack.c.l.b16 %v1591
        %v1625 = vunpack.c.l.b16 %v1592
        %v1626 = vunpack.c.l.b16 %v1593
        %v1627 = vpack.c.b16 %v1612, %v1611
        %v1628 = vpack.c.b16 %v1614, %v1613
        %v1629 = vpack.c.b16 %v1616, %v1615
        %v1630 = vpack.c.b16 %v1618, %v1617
        %v1631 = vpack.c.b16 %v1620, %v1619
        %v1632 = vpack.c.b16 %v1622, %v1621
        %v1633 = vpack.c.b16 %v1624, %v1623
        %v1634 = vpack.c.b16 %v1626, %v1625
        %vm1635 = vcmask 64512
        %v1637 = vsel %vm1635, %v1627, 0
        %v1640 = vsel %vm1635, %v1628, 0
        %v1643 = vsel %vm1635, %v1629, 0
        %v1646 = vsel %vm1635, %v1630, 0
        %v1649 = vsel %vm1635, %v1631, 0
        %v1652 = vsel %vm1635, %v1632, 0
        %v1655 = vsel %vm1635, %v1633, 0
        %v1658 = vsel %vm1635, %v1634, 0
        %vm1660 = vcmask 1043456
        %v1662 = vsel %vm1660, %v1594, 0
        %1664 = vmatprep.subr.bf16.mxu0 0
        %1665 = vmatpush1.bf16.msra.mxu0 %v1662
        %1666 = vmatprep.subr.bf16.mxu0 0
        %1667 = vmatpush1.bf16.msra.mxu0 0
        %1668 = vmatprep.subr.bf16.mxu0 0
        %1669 = vmatpush1.bf16.msra.mxu0 0
        %1670 = vmatprep.subr.bf16.mxu0 0
        %1671 = vmatpush1.bf16.msra.mxu0 0
        %1672 = vmatprep.subr.bf16.mxu0 0
        %1673 = vmatpush1.bf16.msra.mxu0 0
        %1674 = vmatprep.subr.bf16.mxu0 0
        %1675 = vmatpush1.bf16.msra.mxu0 0
        %1676 = vmatprep.subr.bf16.mxu0 0
        %1677 = vmatpush1.bf16.msra.mxu0 0
        %1678 = vmatprep.subr.bf16.mxu0 0
        %1679 = vmatpush1.bf16.msra.mxu0 0
        %1680 = vmatprep.subr.bf16.mxu0 0
        %1681 = vmatpush1.bf16.msra.mxu0 0
        %1682 = vmatprep.subr.bf16.mxu0 0
        %1683 = vmatpush1.bf16.msra.mxu0 0
        %1684 = vmatprep.subr.bf16.mxu0 0
        %1685 = vmatpush1.bf16.msra.mxu0 0
        %1686 = vmatprep.subr.bf16.mxu0 0
        %1687 = vmatpush1.bf16.msra.mxu0 0
        %1688 = vmatprep.subr.bf16.mxu0 0
        %1689 = vmatpush1.bf16.msra.mxu0 0
        %1690 = vmatprep.subr.bf16.mxu0 0
        %1691 = vmatpush1.bf16.msra.mxu0 0
        %1692 = vmatprep.subr.bf16.mxu0 0
        %1693 = vmatpush1.bf16.msra.mxu0 0
        %1694 = vmatprep.subr.bf16.mxu0 0
        %1695 = vmatpush1.bf16.msra.mxu0 0
        %1696 = vmatprep.mubr.bf16.mxu0 0
        %1697 = vmatmul.mubr.bf16.gmra.mrb[0].mxu0 %v1637
        %v1698 = vpop.f32.mrb[0].mxu0
        %v1699 = vadd.f32 0.0, %v1698
        %v1700 = vpop.f32.mrb[0].mxu0
        %v1701 = vpop.f32.mrb[0].mxu0
        %v1702 = vadd.f32 0.0, %v1701
        %v1703 = vpop.f32.mrb[0].mxu0
        %1704 = vmatprep.mubr.bf16.mxu0 0
        %1705 = vmatmul.mubr.bf16.gmra.mrb[0].mxu0 %v1640
        %v1706 = vpop.f32.mrb[0].mxu0
        %v1707 = vadd.f32 0.0, %v1706
        %v1708 = vpop.f32.mrb[0].mxu0
        %v1709 = vpop.f32.mrb[0].mxu0
        %v1710 = vadd.f32 0.0, %v1709
        %v1711 = vpop.f32.mrb[0].mxu0
        %1712 = vmatprep.mubr.bf16.mxu0 0
        %1713 = vmatmul.mubr.bf16.gmra.mrb[0].mxu0 %v1643
        %v1714 = vpop.f32.mrb[0].mxu0
        %v1715 = vadd.f32 0.0, %v1714
        %v1716 = vpop.f32.mrb[0].mxu0
        %v1717 = vpop.f32.mrb[0].mxu0
        %v1718 = vadd.f32 0.0, %v1717
        %v1719 = vpop.f32.mrb[0].mxu0
        %1720 = vmatprep.mubr.bf16.mxu0 0
        %1721 = vmatmul.mubr.bf16.gmra.mrb[0].mxu0 %v1646
        %v1722 = vpop.f32.mrb[0].mxu0
        %v1723 = vadd.f32 0.0, %v1722
        %v1724 = vpop.f32.mrb[0].mxu0
        %v1725 = vpop.f32.mrb[0].mxu0
        %v1726 = vadd.f32 0.0, %v1725
        %v1727 = vpop.f32.mrb[0].mxu0
        %1728 = vmatprep.mubr.bf16.mxu0 0
        %1729 = vmatmul.mubr.bf16.gmra.mrb[0].mxu0 %v1649
        %v1730 = vpop.f32.mrb[0].mxu0
        %v1731 = vadd.f32 0.0, %v1730
        %v1732 = vpop.f32.mrb[0].mxu0
        %v1733 = vpop.f32.mrb[0].mxu0
        %v1734 = vadd.f32 0.0, %v1733
        %v1735 = vpop.f32.mrb[0].mxu0
        %1736 = vmatprep.mubr.bf16.mxu0 0
        %1737 = vmatmul.mubr.bf16.gmra.mrb[0].mxu0 %v1652
        %v1738 = vpop.f32.mrb[0].mxu0
        %v1739 = vadd.f32 0.0, %v1738
        %v1740 = vpop.f32.mrb[0].mxu0
        %v1741 = vpop.f32.mrb[0].mxu0
        %v1742 = vadd.f32 0.0, %v1741
        %v1743 = vpop.f32.mrb[0].mxu0
        %1744 = vmatprep.mubr.bf16.mxu0 0
        %1745 = vmatmul.mubr.bf16.gmra.mrb[0].mxu0 %v1655
        %v1746 = vpop.f32.mrb[0].mxu0
        %v1747 = vadd.f32 0.0, %v1746
        %v1748 = vpop.f32.mrb[0].mxu0
        %v1749 = vpop.f32.mrb[0].mxu0
        %v1750 = vadd.f32 0.0, %v1749
        %v1751 = vpop.f32.mrb[0].mxu0
        %1752 = vmatprep.mubr.bf16.mxu0 0
        %1753 = vmatmul.mubr.bf16.gmra.mrb[0].mxu0 %v1658
        %v1754 = vpop.f32.mrb[0].mxu0
        %v1755 = vadd.f32 0.0, %v1754
        %v1756 = vpop.f32.mrb[0].mxu0
        %v1757 = vpop.f32.mrb[0].mxu0
        %v1758 = vadd.f32 0.0, %v1757
        %v1759 = vpop.f32.mrb[0].mxu0
        %1760 = vdwg.mxu0
        %v1761 = vld [vmem:[%s8] sm:$0xff]
        %v1762 = vld [vmem:[%s8 + $0x8] sm:$0xff]
        %v1763 = vld [vmem:[%s8 + $0x10] sm:$0xff]
        %v1764 = vld [vmem:[%s8 + $0x18] sm:$0xff]
        %v1765 = vld [vmem:[%s8 + $0x20] sm:$0xff]
        %v1766 = vld [vmem:[%s8 + $0x28] sm:$0xff]
        %v1767 = vld [vmem:[%s8 + $0x30] sm:$0xff]
        %v1768 = vld [vmem:[%s8 + $0x38] sm:$0xff]
        %v1769 = vld [vmem:[%s8 + $0x40] sm:$0xff]
        %v1770 = vld [vmem:[%s8 + $0x48] sm:$0xff]
        %v1771 = vld [vmem:[%s8 + $0x50] sm:$0xff]
        %v1772 = vld [vmem:[%s8 + $0x58] sm:$0xff]
        %v1773 = vld [vmem:[%s8 + $0x60] sm:$0xff]
        %v1774 = vld [vmem:[%s8 + $0x68] sm:$0xff]
        %v1775 = vld [vmem:[%s8 + $0x70] sm:$0xff]
        %v1776 = vld [vmem:[%s8 + $0x78] sm:$0xff]
        %v1777 = vpack.c.bf16 %v1702, %v1699
        %v1778 = vpack.c.bf16 %v1710, %v1707
        %v1779 = vpack.c.bf16 %v1718, %v1715
        %v1780 = vpack.c.bf16 %v1726, %v1723
        %v1781 = vpack.c.bf16 %v1734, %v1731
        %v1782 = vpack.c.bf16 %v1742, %v1739
        %v1783 = vpack.c.bf16 %v1750, %v1747
        %v1784 = vpack.c.bf16 %v1758, %v1755
        %v1801 = vunpack.c.l.b16 %v1761
        %v1802 = vunpack.c.h.b16 %v1761
        %v1803 = vunpack.c.l.b16 %v1762
        %v1804 = vunpack.c.h.b16 %v1762
        %v1805 = vunpack.c.l.b16 %v1763
        %v1806 = vunpack.c.h.b16 %v1763
        %v1807 = vunpack.c.l.b16 %v1764
        %v1808 = vunpack.c.h.b16 %v1764
        %v1809 = vunpack.c.l.b16 %v1765
        %v1810 = vunpack.c.h.b16 %v1765
        %v1811 = vunpack.c.l.b16 %v1766
        %v1812 = vunpack.c.h.b16 %v1766
        %v1813 = vunpack.c.l.b16 %v1767
        %v1814 = vunpack.c.h.b16 %v1767
        %v1815 = vunpack.c.l.b16 %v1768
        %v1816 = vunpack.c.h.b16 %v1768
        %v1817 = vunpack.c.l.b16 %v1769
        %v1818 = vunpack.c.h.b16 %v1769
        %v1819 = vunpack.c.l.b16 %v1770
        %v1820 = vunpack.c.h.b16 %v1770
        %v1821 = vunpack.c.l.b16 %v1771
        %v1822 = vunpack.c.h.b16 %v1771
        %v1823 = vunpack.c.l.b16 %v1772
        %v1824 = vunpack.c.h.b16 %v1772
        %v1825 = vunpack.c.l.b16 %v1773
        %v1826 = vunpack.c.h.b16 %v1773
        %v1827 = vunpack.c.l.b16 %v1774
        %v1828 = vunpack.c.h.b16 %v1774
        %v1829 = vunpack.c.l.b16 %v1775
        %v1830 = vunpack.c.h.b16 %v1775
        %v1831 = vunpack.c.l.b16 %v1776
        %v1832 = vunpack.c.h.b16 %v1776
        %v1833 = vpack.c.b16 %v1809, %v1801
        %v1834 = vpack.c.b16 %v1810, %v1802
        %v1835 = vpack.c.b16 %v1811, %v1803
        %v1836 = vpack.c.b16 %v1812, %v1804
        %v1837 = vpack.c.b16 %v1813, %v1805
        %v1838 = vpack.c.b16 %v1814, %v1806
        %v1839 = vpack.c.b16 %v1815, %v1807
        %v1840 = vpack.c.b16 %v1816, %v1808
        %v1841 = vpack.c.b16 %v1825, %v1817
        %v1842 = vpack.c.b16 %v1826, %v1818
        %v1843 = vpack.c.b16 %v1827, %v1819
        %v1844 = vpack.c.b16 %v1828, %v1820
        %v1845 = vpack.c.b16 %v1829, %v1821
        %v1846 = vpack.c.b16 %v1830, %v1822
        %v1847 = vpack.c.b16 %v1831, %v1823
        %v1848 = vpack.c.b16 %v1832, %v1824
        %vm1865 = vcmask 261120
        %v1867 = vsel %vm1865, %v1777, 0
        %v1870 = vsel %vm1865, %v1778, 0
        %v1873 = vsel %vm1865, %v1779, 0
        %v1876 = vsel %vm1865, %v1780, 0
        %v1879 = vsel %vm1865, %v1781, 0
        %v1882 = vsel %vm1865, %v1782, 0
        %v1885 = vsel %vm1865, %v1783, 0
        %v1888 = vsel %vm1865, %v1784, 0
        %1890 = vmatprep.subr.bf16.mxu0 %v1834
        %1891 = vmatpush1.bf16.msra.mxu0 %v1833
        %1892 = vmatprep.subr.bf16.mxu0 %v1842
        %1893 = vmatpush1.bf16.msra.mxu0 %v1841
        %1894 = vmatprep.subr.bf16.mxu0 0
        %1895 = vmatpush1.bf16.msra.mxu0 0
        %1896 = vmatprep.subr.bf16.mxu0 0
        %1897 = vmatpush1.bf16.msra.mxu0 0
        %1898 = vmatprep.subr.bf16.mxu0 0
        %1899 = vmatpush1.bf16.msra.mxu0 0
        %1900 = vmatprep.subr.bf16.mxu0 0
        %1901 = vmatpush1.bf16.msra.mxu0 0
        %1902 = vmatprep.subr.bf16.mxu0 0
        %1903 = vmatpush1.bf16.msra.mxu0 0
        %1904 = vmatprep.subr.bf16.mxu0 0
        %1905 = vmatpush1.bf16.msra.mxu0 0
        %1906 = vmatprep.subr.bf16.mxu0 0
        %1907 = vmatpush1.bf16.msra.mxu0 0
        %1908 = vmatprep.subr.bf16.mxu0 0
        %1909 = vmatpush1.bf16.msra.mxu0 0
        %1910 = vmatprep.subr.bf16.mxu0 0
        %1911 = vmatpush1.bf16.msra.mxu0 0
        %1912 = vmatprep.subr.bf16.mxu0 0
        %1913 = vmatpush1.bf16.msra.mxu0 0
        %1914 = vmatprep.subr.bf16.mxu0 0
        %1915 = vmatpush1.bf16.msra.mxu0 0
        %1916 = vmatprep.subr.bf16.mxu0 0
        %1917 = vmatpush1.bf16.msra.mxu0 0
        %1918 = vmatprep.subr.bf16.mxu0 0
        %1919 = vmatpush1.bf16.msra.mxu0 0
        %1920 = vmatprep.subr.bf16.mxu0 0
        %1921 = vmatpush1.bf16.msra.mxu0 0
        %1922 = vmatprep.mubr.bf16.mxu0 0
        %1923 = vmatmul.mubr.bf16.gmra.mrb[0].mxu0 %v1867
        %v1924 = vpop.f32.mrb[0].mxu0
        %v1925 = vadd.f32 0.0, %v1924
        %v1926 = vpop.f32.mrb[0].mxu0
        %v1927 = vadd.f32 0.0, %v1926
        %v1928 = vpop.f32.mrb[0].mxu0
        %v1929 = vadd.f32 0.0, %v1928
        %v1930 = vpop.f32.mrb[0].mxu0
        %v1931 = vadd.f32 0.0, %v1930
        %1932 = vmatprep.mubr.bf16.mxu0 0
        %1933 = vmatmul.mubr.bf16.gmra.mrb[0].mxu0 %v1870
        %v1934 = vpop.f32.mrb[0].mxu0
        %v1935 = vadd.f32 0.0, %v1934
        %v1936 = vpop.f32.mrb[0].mxu0
        %v1937 = vadd.f32 0.0, %v1936
        %v1938 = vpop.f32.mrb[0].mxu0
        %v1939 = vadd.f32 0.0, %v1938
        %v1940 = vpop.f32.mrb[0].mxu0
        %v1941 = vadd.f32 0.0, %v1940
        %1942 = vmatprep.mubr.bf16.mxu0 0
        %1943 = vmatmul.mubr.bf16.gmra.mrb[0].mxu0 %v1873
        %v1944 = vpop.f32.mrb[0].mxu0
        %v1945 = vadd.f32 0.0, %v1944
        %v1946 = vpop.f32.mrb[0].mxu0
        %v1947 = vadd.f32 0.0, %v1946
        %v1948 = vpop.f32.mrb[0].mxu0
        %v1949 = vadd.f32 0.0, %v1948
        %v1950 = vpop.f32.mrb[0].mxu0
        %v1951 = vadd.f32 0.0, %v1950
        %1952 = vmatprep.mubr.bf16.mxu0 0
        %1953 = vmatmul.mubr.bf16.gmra.mrb[0].mxu0 %v1876
        %v1954 = vpop.f32.mrb[0].mxu0
        %v1955 = vadd.f32 0.0, %v1954
        %v1956 = vpop.f32.mrb[0].mxu0
        %v1957 = vadd.f32 0.0, %v1956
        %v1958 = vpop.f32.mrb[0].mxu0
        %v1959 = vadd.f32 0.0, %v1958
        %v1960 = vpop.f32.mrb[0].mxu0
        %v1961 = vadd.f32 0.0, %v1960
        %1962 = vmatprep.mubr.bf16.mxu0 0
        %1963 = vmatmul.mubr.bf16.gmra.mrb[0].mxu0 %v1879
        %v1964 = vpop.f32.mrb[0].mxu0
        %v1965 = vadd.f32 0.0, %v1964
        %v1966 = vpop.f32.mrb[0].mxu0
        %v1967 = vadd.f32 0.0, %v1966
        %v1968 = vpop.f32.mrb[0].mxu0
        %v1969 = vadd.f32 0.0, %v1968
        %v1970 = vpop.f32.mrb[0].mxu0
        %v1971 = vadd.f32 0.0, %v1970
        %1972 = vmatprep.mubr.bf16.mxu0 0
        %1973 = vmatmul.mubr.bf16.gmra.mrb[0].mxu0 %v1882
        %v1974 = vpop.f32.mrb[0].mxu0
        %v1975 = vadd.f32 0.0, %v1974
        %v1976 = vpop.f32.mrb[0].mxu0
        %v1977 = vadd.f32 0.0, %v1976
        %v1978 = vpop.f32.mrb[0].mxu0
        %v1979 = vadd.f32 0.0, %v1978
        %v1980 = vpop.f32.mrb[0].mxu0
        %v1981 = vadd.f32 0.0, %v1980
        %1982 = vmatprep.mubr.bf16.mxu0 0
        %1983 = vmatmul.mubr.bf16.gmra.mrb[0].mxu0 %v1885
        %v1984 = vpop.f32.mrb[0].mxu0
        %v1985 = vadd.f32 0.0, %v1984
        %v1986 = vpop.f32.mrb[0].mxu0
        %v1987 = vadd.f32 0.0, %v1986
        %v1988 = vpop.f32.mrb[0].mxu0
        %v1989 = vadd.f32 0.0, %v1988
        %v1990 = vpop.f32.mrb[0].mxu0
        %v1991 = vadd.f32 0.0, %v1990
        %1992 = vmatprep.mubr.bf16.mxu0 0
        %1993 = vmatmul.mubr.bf16.gmra.mrb[0].mxu0 %v1888
        %v1994 = vpop.f32.mrb[0].mxu0
        %v1995 = vadd.f32 0.0, %v1994
        %v1996 = vpop.f32.mrb[0].mxu0
        %v1997 = vadd.f32 0.0, %v1996
        %v1998 = vpop.f32.mrb[0].mxu0
        %v1999 = vadd.f32 0.0, %v1998
        %v2000 = vpop.f32.mrb[0].mxu0
        %v2001 = vadd.f32 0.0, %v2000
        %2002 = vdwg.mxu0
        %2003 = vmatprep.subr.bf16.mxu0 %v1836
        %2004 = vmatpush1.bf16.msra.mxu0 %v1835
        %2005 = vmatprep.subr.bf16.mxu0 %v1844
        %2006 = vmatpush1.bf16.msra.mxu0 %v1843
        %2007 = vmatprep.subr.bf16.mxu0 0
        %2008 = vmatpush1.bf16.msra.mxu0 0
        %2009 = vmatprep.subr.bf16.mxu0 0
        %2010 = vmatpush1.bf16.msra.mxu0 0
        %2011 = vmatprep.subr.bf16.mxu0 0
        %2012 = vmatpush1.bf16.msra.mxu0 0
        %2013 = vmatprep.subr.bf16.mxu0 0
        %2014 = vmatpush1.bf16.msra.mxu0 0
        %2015 = vmatprep.subr.bf16.mxu0 0
        %2016 = vmatpush1.bf16.msra.mxu0 0
        %2017 = vmatprep.subr.bf16.mxu0 0
        %2018 = vmatpush1.bf16.msra.mxu0 0
        %2019 = vmatprep.subr.bf16.mxu0 0
        %2020 = vmatpush1.bf16.msra.mxu0 0
        %2021 = vmatprep.subr.bf16.mxu0 0
        %2022 = vmatpush1.bf16.msra.mxu0 0
        %2023 = vmatprep.subr.bf16.mxu0 0
        %2024 = vmatpush1.bf16.msra.mxu0 0
        %2025 = vmatprep.subr.bf16.mxu0 0
        %2026 = vmatpush1.bf16.msra.mxu0 0
        %2027 = vmatprep.subr.bf16.mxu0 0
        %2028 = vmatpush1.bf16.msra.mxu0 0
        %2029 = vmatprep.subr.bf16.mxu0 0
        %2030 = vmatpush1.bf16.msra.mxu0 0
        %2031 = vmatprep.subr.bf16.mxu0 0
        %2032 = vmatpush1.bf16.msra.mxu0 0
        %2033 = vmatprep.subr.bf16.mxu0 0
        %2034 = vmatpush1.bf16.msra.mxu0 0
        %2035 = vmatprep.mubr.bf16.mxu0 0
        %2036 = vmatmul.mubr.bf16.gmra.mrb[0].mxu0 %v1867
        %v2037 = vpop.f32.mrb[0].mxu0
        %v2038 = vadd.f32 0.0, %v2037
        %v2039 = vpop.f32.mrb[0].mxu0
        %v2040 = vadd.f32 0.0, %v2039
        %v2041 = vpop.f32.mrb[0].mxu0
        %v2042 = vadd.f32 0.0, %v2041
        %v2043 = vpop.f32.mrb[0].mxu0
        %v2044 = vadd.f32 0.0, %v2043
        %2045 = vmatprep.mubr.bf16.mxu0 0
        %2046 = vmatmul.mubr.bf16.gmra.mrb[0].mxu0 %v1870
        %v2047 = vpop.f32.mrb[0].mxu0
        %v2048 = vadd.f32 0.0, %v2047
        %v2049 = vpop.f32.mrb[0].mxu0
        %v2050 = vadd.f32 0.0, %v2049
        %v2051 = vpop.f32.mrb[0].mxu0
        %v2052 = vadd.f32 0.0, %v2051
        %v2053 = vpop.f32.mrb[0].mxu0
        %v2054 = vadd.f32 0.0, %v2053
        %2055 = vmatprep.mubr.bf16.mxu0 0
        %2056 = vmatmul.mubr.bf16.gmra.mrb[0].mxu0 %v1873
        %v2057 = vpop.f32.mrb[0].mxu0
        %v2058 = vadd.f32 0.0, %v2057
        %v2059 = vpop.f32.mrb[0].mxu0
        %v2060 = vadd.f32 0.0, %v2059
        %v2061 = vpop.f32.mrb[0].mxu0
        %v2062 = vadd.f32 0.0, %v2061
        %v2063 = vpop.f32.mrb[0].mxu0
        %v2064 = vadd.f32 0.0, %v2063
        %2065 = vmatprep.mubr.bf16.mxu0 0
        %2066 = vmatmul.mubr.bf16.gmra.mrb[0].mxu0 %v1876
        %v2067 = vpop.f32.mrb[0].mxu0
        %v2068 = vadd.f32 0.0, %v2067
        %v2069 = vpop.f32.mrb[0].mxu0
        %v2070 = vadd.f32 0.0, %v2069
        %v2071 = vpop.f32.mrb[0].mxu0
        %v2072 = vadd.f32 0.0, %v2071
        %v2073 = vpop.f32.mrb[0].mxu0
        %v2074 = vadd.f32 0.0, %v2073
        %2075 = vmatprep.mubr.bf16.mxu0 0
        %2076 = vmatmul.mubr.bf16.gmra.mrb[0].mxu0 %v1879
        %v2077 = vpop.f32.mrb[0].mxu0
        %v2078 = vadd.f32 0.0, %v2077
        %v2079 = vpop.f32.mrb[0].mxu0
        %v2080 = vadd.f32 0.0, %v2079
        %v2081 = vpop.f32.mrb[0].mxu0
        %v2082 = vadd.f32 0.0, %v2081
        %v2083 = vpop.f32.mrb[0].mxu0
        %v2084 = vadd.f32 0.0, %v2083
        %2085 = vmatprep.mubr.bf16.mxu0 0
        %2086 = vmatmul.mubr.bf16.gmra.mrb[0].mxu0 %v1882
        %v2087 = vpop.f32.mrb[0].mxu0
        %v2088 = vadd.f32 0.0, %v2087
        %v2089 = vpop.f32.mrb[0].mxu0
        %v2090 = vadd.f32 0.0, %v2089
        %v2091 = vpop.f32.mrb[0].mxu0
        %v2092 = vadd.f32 0.0, %v2091
        %v2093 = vpop.f32.mrb[0].mxu0
        %v2094 = vadd.f32 0.0, %v2093
        %2095 = vmatprep.mubr.bf16.mxu0 0
        %2096 = vmatmul.mubr.bf16.gmra.mrb[0].mxu0 %v1885
        %v2097 = vpop.f32.mrb[0].mxu0
        %v2098 = vadd.f32 0.0, %v2097
        %v2099 = vpop.f32.mrb[0].mxu0
        %v2100 = vadd.f32 0.0, %v2099
        %v2101 = vpop.f32.mrb[0].mxu0
        %v2102 = vadd.f32 0.0, %v2101
        %v2103 = vpop.f32.mrb[0].mxu0
        %v2104 = vadd.f32 0.0, %v2103
        %2105 = vmatprep.mubr.bf16.mxu0 0
        %2106 = vmatmul.mubr.bf16.gmra.mrb[0].mxu0 %v1888
        %v2107 = vpop.f32.mrb[0].mxu0
        %v2108 = vadd.f32 0.0, %v2107
        %v2109 = vpop.f32.mrb[0].mxu0
        %v2110 = vadd.f32 0.0, %v2109
        %v2111 = vpop.f32.mrb[0].mxu0
        %v2112 = vadd.f32 0.0, %v2111
        %v2113 = vpop.f32.mrb[0].mxu0
        %v2114 = vadd.f32 0.0, %v2113
        %2115 = vdwg.mxu0
        %2116 = vmatprep.subr.bf16.mxu0 %v1838
        %2117 = vmatpush1.bf16.msra.mxu0 %v1837
        %2118 = vmatprep.subr.bf16.mxu0 %v1846
        %2119 = vmatpush1.bf16.msra.mxu0 %v1845
        %2120 = vmatprep.subr.bf16.mxu0 0
        %2121 = vmatpush1.bf16.msra.mxu0 0
        %2122 = vmatprep.subr.bf16.mxu0 0
        %2123 = vmatpush1.bf16.msra.mxu0 0
        %2124 = vmatprep.subr.bf16.mxu0 0
        %2125 = vmatpush1.bf16.msra.mxu0 0
        %2126 = vmatprep.subr.bf16.mxu0 0
        %2127 = vmatpush1.bf16.msra.mxu0 0
        %2128 = vmatprep.subr.bf16.mxu0 0
        %2129 = vmatpush1.bf16.msra.mxu0 0
        %2130 = vmatprep.subr.bf16.mxu0 0
        %2131 = vmatpush1.bf16.msra.mxu0 0
        %2132 = vmatprep.subr.bf16.mxu0 0
        %2133 = vmatpush1.bf16.msra.mxu0 0
        %2134 = vmatprep.subr.bf16.mxu0 0
        %2135 = vmatpush1.bf16.msra.mxu0 0
        %2136 = vmatprep.subr.bf16.mxu0 0
        %2137 = vmatpush1.bf16.msra.mxu0 0
        %2138 = vmatprep.subr.bf16.mxu0 0
        %2139 = vmatpush1.bf16.msra.mxu0 0
        %2140 = vmatprep.subr.bf16.mxu0 0
        %2141 = vmatpush1.bf16.msra.mxu0 0
        %2142 = vmatprep.subr.bf16.mxu0 0
        %2143 = vmatpush1.bf16.msra.mxu0 0
        %2144 = vmatprep.subr.bf16.mxu0 0
        %2145 = vmatpush1.bf16.msra.mxu0 0
        %2146 = vmatprep.subr.bf16.mxu0 0
        %2147 = vmatpush1.bf16.msra.mxu0 0
        %2148 = vmatprep.mubr.bf16.mxu0 0
        %2149 = vmatmul.mubr.bf16.gmra.mrb[0].mxu0 %v1867
        %v2150 = vpop.f32.mrb[0].mxu0
        %v2151 = vadd.f32 0.0, %v2150
        %v2152 = vpop.f32.mrb[0].mxu0
        %v2153 = vadd.f32 0.0, %v2152
        %v2154 = vpop.f32.mrb[0].mxu0
        %v2155 = vadd.f32 0.0, %v2154
        %v2156 = vpop.f32.mrb[0].mxu0
        %v2157 = vadd.f32 0.0, %v2156
        %2158 = vmatprep.mubr.bf16.mxu0 0
        %2159 = vmatmul.mubr.bf16.gmra.mrb[0].mxu0 %v1870
        %v2160 = vpop.f32.mrb[0].mxu0
        %v2161 = vadd.f32 0.0, %v2160
        %v2162 = vpop.f32.mrb[0].mxu0
        %v2163 = vadd.f32 0.0, %v2162
        %v2164 = vpop.f32.mrb[0].mxu0
        %v2165 = vadd.f32 0.0, %v2164
        %v2166 = vpop.f32.mrb[0].mxu0
        %v2167 = vadd.f32 0.0, %v2166
        %2168 = vmatprep.mubr.bf16.mxu0 0
        %2169 = vmatmul.mubr.bf16.gmra.mrb[0].mxu0 %v1873
        %v2170 = vpop.f32.mrb[0].mxu0
        %v2171 = vadd.f32 0.0, %v2170
        %v2172 = vpop.f32.mrb[0].mxu0
        %v2173 = vadd.f32 0.0, %v2172
        %v2174 = vpop.f32.mrb[0].mxu0
        %v2175 = vadd.f32 0.0, %v2174
        %v2176 = vpop.f32.mrb[0].mxu0
        %v2177 = vadd.f32 0.0, %v2176
        %2178 = vmatprep.mubr.bf16.mxu0 0
        %2179 = vmatmul.mubr.bf16.gmra.mrb[0].mxu0 %v1876
        %v2180 = vpop.f32.mrb[0].mxu0
        %v2181 = vadd.f32 0.0, %v2180
        %v2182 = vpop.f32.mrb[0].mxu0
        %v2183 = vadd.f32 0.0, %v2182
        %v2184 = vpop.f32.mrb[0].mxu0
        %v2185 = vadd.f32 0.0, %v2184
        %v2186 = vpop.f32.mrb[0].mxu0
        %v2187 = vadd.f32 0.0, %v2186
        %2188 = vmatprep.mubr.bf16.mxu0 0
        %2189 = vmatmul.mubr.bf16.gmra.mrb[0].mxu0 %v1879
        %v2190 = vpop.f32.mrb[0].mxu0
        %v2191 = vadd.f32 0.0, %v2190
        %v2192 = vpop.f32.mrb[0].mxu0
        %v2193 = vadd.f32 0.0, %v2192
        %v2194 = vpop.f32.mrb[0].mxu0
        %v2195 = vadd.f32 0.0, %v2194
        %v2196 = vpop.f32.mrb[0].mxu0
        %v2197 = vadd.f32 0.0, %v2196
        %2198 = vmatprep.mubr.bf16.mxu0 0
        %2199 = vmatmul.mubr.bf16.gmra.mrb[0].mxu0 %v1882
        %v2200 = vpop.f32.mrb[0].mxu0
        %v2201 = vadd.f32 0.0, %v2200
        %v2202 = vpop.f32.mrb[0].mxu0
        %v2203 = vadd.f32 0.0, %v2202
        %v2204 = vpop.f32.mrb[0].mxu0
        %v2205 = vadd.f32 0.0, %v2204
        %v2206 = vpop.f32.mrb[0].mxu0
        %v2207 = vadd.f32 0.0, %v2206
        %2208 = vmatprep.mubr.bf16.mxu0 0
        %2209 = vmatmul.mubr.bf16.gmra.mrb[0].mxu0 %v1885
        %v2210 = vpop.f32.mrb[0].mxu0
        %v2211 = vadd.f32 0.0, %v2210
        %v2212 = vpop.f32.mrb[0].mxu0
        %v2213 = vadd.f32 0.0, %v2212
        %v2214 = vpop.f32.mrb[0].mxu0
        %v2215 = vadd.f32 0.0, %v2214
        %v2216 = vpop.f32.mrb[0].mxu0
        %v2217 = vadd.f32 0.0, %v2216
        %2218 = vmatprep.mubr.bf16.mxu0 0
        %2219 = vmatmul.mubr.bf16.gmra.mrb[0].mxu0 %v1888
        %v2220 = vpop.f32.mrb[0].mxu0
        %v2221 = vadd.f32 0.0, %v2220
        %v2222 = vpop.f32.mrb[0].mxu0
        %v2223 = vadd.f32 0.0, %v2222
        %v2224 = vpop.f32.mrb[0].mxu0
        %v2225 = vadd.f32 0.0, %v2224
        %v2226 = vpop.f32.mrb[0].mxu0
        %v2227 = vadd.f32 0.0, %v2226
        %2228 = vdwg.mxu0
        %2229 = vmatprep.subr.bf16.mxu0 %v1840
        %2230 = vmatpush1.bf16.msra.mxu0 %v1839
        %2231 = vmatprep.subr.bf16.mxu0 %v1848
        %2232 = vmatpush1.bf16.msra.mxu0 %v1847
        %2233 = vmatprep.subr.bf16.mxu0 0
        %2234 = vmatpush1.bf16.msra.mxu0 0
        %2235 = vmatprep.subr.bf16.mxu0 0
        %2236 = vmatpush1.bf16.msra.mxu0 0
        %2237 = vmatprep.subr.bf16.mxu0 0
        %2238 = vmatpush1.bf16.msra.mxu0 0
        %2239 = vmatprep.subr.bf16.mxu0 0
        %2240 = vmatpush1.bf16.msra.mxu0 0
        %2241 = vmatprep.subr.bf16.mxu0 0
        %2242 = vmatpush1.bf16.msra.mxu0 0
        %2243 = vmatprep.subr.bf16.mxu0 0
        %2244 = vmatpush1.bf16.msra.mxu0 0
        %2245 = vmatprep.subr.bf16.mxu0 0
        %2246 = vmatpush1.bf16.msra.mxu0 0
        %2247 = vmatprep.subr.bf16.mxu0 0
        %2248 = vmatpush1.bf16.msra.mxu0 0
        %2249 = vmatprep.subr.bf16.mxu0 0
        %2250 = vmatpush1.bf16.msra.mxu0 0
        %2251 = vmatprep.subr.bf16.mxu0 0
        %2252 = vmatpush1.bf16.msra.mxu0 0
        %2253 = vmatprep.subr.bf16.mxu0 0
        %2254 = vmatpush1.bf16.msra.mxu0 0
        %2255 = vmatprep.subr.bf16.mxu0 0
        %2256 = vmatpush1.bf16.msra.mxu0 0
        %2257 = vmatprep.subr.bf16.mxu0 0
        %2258 = vmatpush1.bf16.msra.mxu0 0
        %2259 = vmatprep.subr.bf16.mxu0 0
        %2260 = vmatpush1.bf16.msra.mxu0 0
        %2261 = vmatprep.mubr.bf16.mxu0 0
        %2262 = vmatmul.mubr.bf16.gmra.mrb[0].mxu0 %v1867
        %v2263 = vpop.f32.mrb[0].mxu0
        %v2264 = vadd.f32 0.0, %v2263
        %v2265 = vpop.f32.mrb[0].mxu0
        %v2266 = vadd.f32 0.0, %v2265
        %v2267 = vpop.f32.mrb[0].mxu0
        %v2268 = vadd.f32 0.0, %v2267
        %v2269 = vpop.f32.mrb[0].mxu0
        %v2270 = vadd.f32 0.0, %v2269
        %2271 = vmatprep.mubr.bf16.mxu0 0
        %2272 = vmatmul.mubr.bf16.gmra.mrb[0].mxu0 %v1870
        %v2273 = vpop.f32.mrb[0].mxu0
        %v2274 = vadd.f32 0.0, %v2273
        %v2275 = vpop.f32.mrb[0].mxu0
        %v2276 = vadd.f32 0.0, %v2275
        %v2277 = vpop.f32.mrb[0].mxu0
        %v2278 = vadd.f32 0.0, %v2277
        %v2279 = vpop.f32.mrb[0].mxu0
        %v2280 = vadd.f32 0.0, %v2279
        %2281 = vmatprep.mubr.bf16.mxu0 0
        %2282 = vmatmul.mubr.bf16.gmra.mrb[0].mxu0 %v1873
        %v2283 = vpop.f32.mrb[0].mxu0
        %v2284 = vadd.f32 0.0, %v2283
        %v2285 = vpop.f32.mrb[0].mxu0
        %v2286 = vadd.f32 0.0, %v2285
        %v2287 = vpop.f32.mrb[0].mxu0
        %v2288 = vadd.f32 0.0, %v2287
        %v2289 = vpop.f32.mrb[0].mxu0
        %v2290 = vadd.f32 0.0, %v2289
        %2291 = vmatprep.mubr.bf16.mxu0 0
        %2292 = vmatmul.mubr.bf16.gmra.mrb[0].mxu0 %v1876
        %v2293 = vpop.f32.mrb[0].mxu0
        %v2294 = vadd.f32 0.0, %v2293
        %v2295 = vpop.f32.mrb[0].mxu0
        %v2296 = vadd.f32 0.0, %v2295
        %v2297 = vpop.f32.mrb[0].mxu0
        %v2298 = vadd.f32 0.0, %v2297
        %v2299 = vpop.f32.mrb[0].mxu0
        %v2300 = vadd.f32 0.0, %v2299
        %2301 = vmatprep.mubr.bf16.mxu0 0
        %2302 = vmatmul.mubr.bf16.gmra.mrb[0].mxu0 %v1879
        %v2303 = vpop.f32.mrb[0].mxu0
        %v2304 = vadd.f32 0.0, %v2303
        %v2305 = vpop.f32.mrb[0].mxu0
        %v2306 = vadd.f32 0.0, %v2305
        %v2307 = vpop.f32.mrb[0].mxu0
        %v2308 = vadd.f32 0.0, %v2307
        %v2309 = vpop.f32.mrb[0].mxu0
        %v2310 = vadd.f32 0.0, %v2309
        %2311 = vmatprep.mubr.bf16.mxu0 0
        %2312 = vmatmul.mubr.bf16.gmra.mrb[0].mxu0 %v1882
        %v2313 = vpop.f32.mrb[0].mxu0
        %v2314 = vadd.f32 0.0, %v2313
        %v2315 = vpop.f32.mrb[0].mxu0
        %v2316 = vadd.f32 0.0, %v2315
        %v2317 = vpop.f32.mrb[0].mxu0
        %v2318 = vadd.f32 0.0, %v2317
        %v2319 = vpop.f32.mrb[0].mxu0
        %v2320 = vadd.f32 0.0, %v2319
        %2321 = vmatprep.mubr.bf16.mxu0 0
        %2322 = vmatmul.mubr.bf16.gmra.mrb[0].mxu0 %v1885
        %v2323 = vpop.f32.mrb[0].mxu0
        %v2324 = vadd.f32 0.0, %v2323
        %v2325 = vpop.f32.mrb[0].mxu0
        %v2326 = vadd.f32 0.0, %v2325
        %v2327 = vpop.f32.mrb[0].mxu0
        %v2328 = vadd.f32 0.0, %v2327
        %v2329 = vpop.f32.mrb[0].mxu0
        %v2330 = vadd.f32 0.0, %v2329
        %2331 = vmatprep.mubr.bf16.mxu0 0
        %2332 = vmatmul.mubr.bf16.gmra.mrb[0].mxu0 %v1888
        %v2333 = vpop.f32.mrb[0].mxu0
        %v2334 = vadd.f32 0.0, %v2333
        %v2335 = vpop.f32.mrb[0].mxu0
        %v2336 = vadd.f32 0.0, %v2335
        %v2337 = vpop.f32.mrb[0].mxu0
        %v2338 = vadd.f32 0.0, %v2337
        %v2339 = vpop.f32.mrb[0].mxu0
        %v2340 = vadd.f32 0.0, %v2339
        %2341 = vdwg.mxu0
        %v2342 = vmul.f32 %v1925, %v1000
        %v2343 = vmul.f32 %v1927, %v1002
        %v2344 = vmul.f32 %v2038, %v1161
        %v2345 = vmul.f32 %v2040, %v1163
        %v2346 = vmul.f32 %v2151, %v1322
        %v2347 = vmul.f32 %v2153, %v1324
        %v2348 = vmul.f32 %v2264, %v1483
        %v2349 = vmul.f32 %v2266, %v1485
        %v2350 = vmul.f32 %v1929, %v1006
        %v2351 = vmul.f32 %v1931, %v1008
        %v2352 = vmul.f32 %v2042, %v1167
        %v2353 = vmul.f32 %v2044, %v1169
        %v2354 = vmul.f32 %v2155, %v1328
        %v2355 = vmul.f32 %v2157, %v1330
        %v2356 = vmul.f32 %v2268, %v1489
        %v2357 = vmul.f32 %v2270, %v1491
        %v2358 = vmul.f32 %v1935, %v1012
        %v2359 = vmul.f32 %v1937, %v1014
        %v2360 = vmul.f32 %v2048, %v1173
        %v2361 = vmul.f32 %v2050, %v1175
        %v2362 = vmul.f32 %v2161, %v1334
        %v2363 = vmul.f32 %v2163, %v1336
        %v2364 = vmul.f32 %v2274, %v1495
        %v2365 = vmul.f32 %v2276, %v1497
        %v2366 = vmul.f32 %v1939, %v1018
        %v2367 = vmul.f32 %v1941, %v1020
        %v2368 = vmul.f32 %v2052, %v1179
        %v2369 = vmul.f32 %v2054, %v1181
        %v2370 = vmul.f32 %v2165, %v1340
        %v2371 = vmul.f32 %v2167, %v1342
        %v2372 = vmul.f32 %v2278, %v1501
        %v2373 = vmul.f32 %v2280, %v1503
        %v2374 = vmul.f32 %v1945, %v1024
        %v2375 = vmul.f32 %v1947, %v1026
        %v2376 = vmul.f32 %v2058, %v1185
        %v2377 = vmul.f32 %v2060, %v1187
        %v2378 = vmul.f32 %v2171, %v1346
        %v2379 = vmul.f32 %v2173, %v1348
        %v2380 = vmul.f32 %v2284, %v1507
        %v2381 = vmul.f32 %v2286, %v1509
        %v2382 = vmul.f32 %v1949, %v1030
        %v2383 = vmul.f32 %v1951, %v1032
        %v2384 = vmul.f32 %v2062, %v1191
        %v2385 = vmul.f32 %v2064, %v1193
        %v2386 = vmul.f32 %v2175, %v1352
        %v2387 = vmul.f32 %v2177, %v1354
        %v2388 = vmul.f32 %v2288, %v1513
        %v2389 = vmul.f32 %v2290, %v1515
        %v2390 = vmul.f32 %v1955, %v1036
        %v2391 = vmul.f32 %v1957, %v1038
        %v2392 = vmul.f32 %v2068, %v1197
        %v2393 = vmul.f32 %v2070, %v1199
        %v2394 = vmul.f32 %v2181, %v1358
        %v2395 = vmul.f32 %v2183, %v1360
        %v2396 = vmul.f32 %v2294, %v1519
        %v2397 = vmul.f32 %v2296, %v1521
        %v2398 = vmul.f32 %v1959, %v1042
        %v2399 = vmul.f32 %v1961, %v1044
        %v2400 = vmul.f32 %v2072, %v1203
        %v2401 = vmul.f32 %v2074, %v1205
        %v2402 = vmul.f32 %v2185, %v1364
        %v2403 = vmul.f32 %v2187, %v1366
        %v2404 = vmul.f32 %v2298, %v1525
        %v2405 = vmul.f32 %v2300, %v1527
        %v2406 = vmul.f32 %v1965, %v1048
        %v2407 = vmul.f32 %v1967, %v1050
        %v2408 = vmul.f32 %v2078, %v1209
        %v2409 = vmul.f32 %v2080, %v1211
        %v2410 = vmul.f32 %v2191, %v1370
        %v2411 = vmul.f32 %v2193, %v1372
        %v2412 = vmul.f32 %v2304, %v1531
        %v2413 = vmul.f32 %v2306, %v1533
        %v2414 = vmul.f32 %v1969, %v1054
        %v2415 = vmul.f32 %v1971, %v1056
        %v2416 = vmul.f32 %v2082, %v1215
        %v2417 = vmul.f32 %v2084, %v1217
        %v2418 = vmul.f32 %v2195, %v1376
        %v2419 = vmul.f32 %v2197, %v1378
        %v2420 = vmul.f32 %v2308, %v1537
        %v2421 = vmul.f32 %v2310, %v1539
        %v2422 = vmul.f32 %v1975, %v1060
        %v2423 = vmul.f32 %v1977, %v1062
        %v2424 = vmul.f32 %v2088, %v1221
        %v2425 = vmul.f32 %v2090, %v1223
        %v2426 = vmul.f32 %v2201, %v1382
        %v2427 = vmul.f32 %v2203, %v1384
        %v2428 = vmul.f32 %v2314, %v1543
        %v2429 = vmul.f32 %v2316, %v1545
        %v2430 = vmul.f32 %v1979, %v1066
        %v2431 = vmul.f32 %v1981, %v1068
        %v2432 = vmul.f32 %v2092, %v1227
        %v2433 = vmul.f32 %v2094, %v1229
        %v2434 = vmul.f32 %v2205, %v1388
        %v2435 = vmul.f32 %v2207, %v1390
        %v2436 = vmul.f32 %v2318, %v1549
        %v2437 = vmul.f32 %v2320, %v1551
        %v2438 = vmul.f32 %v1985, %v1072
        %v2439 = vmul.f32 %v1987, %v1074
        %v2440 = vmul.f32 %v2098, %v1233
        %v2441 = vmul.f32 %v2100, %v1235
        %v2442 = vmul.f32 %v2211, %v1394
        %v2443 = vmul.f32 %v2213, %v1396
        %v2444 = vmul.f32 %v2324, %v1555
        %v2445 = vmul.f32 %v2326, %v1557
        %v2446 = vmul.f32 %v1989, %v1078
        %v2447 = vmul.f32 %v1991, %v1080
        %v2448 = vmul.f32 %v2102, %v1239
        %v2449 = vmul.f32 %v2104, %v1241
        %v2450 = vmul.f32 %v2215, %v1400
        %v2451 = vmul.f32 %v2217, %v1402
        %v2452 = vmul.f32 %v2328, %v1561
        %v2453 = vmul.f32 %v2330, %v1563
        %v2454 = vmul.f32 %v1995, %v1084
        %v2455 = vmul.f32 %v1997, %v1086
        %v2456 = vmul.f32 %v2108, %v1245
        %v2457 = vmul.f32 %v2110, %v1247
        %v2458 = vmul.f32 %v2221, %v1406
        %v2459 = vmul.f32 %v2223, %v1408
        %v2460 = vmul.f32 %v2334, %v1567
        %v2461 = vmul.f32 %v2336, %v1569
        %v2462 = vmul.f32 %v1999, %v1090
        %v2463 = vmul.f32 %v2001, %v1092
        %v2464 = vmul.f32 %v2112, %v1251
        %v2465 = vmul.f32 %v2114, %v1253
        %v2466 = vmul.f32 %v2225, %v1412
        %v2467 = vmul.f32 %v2227, %v1414
        %v2468 = vmul.f32 %v2338, %v1573
        %v2469 = vmul.f32 %v2340, %v1575
        %v2470 = vadd.f32 %v2342, %v2346
        %v2471 = vadd.f32 %v2343, %v2347
        %v2472 = vadd.f32 %v2344, %v2348
        %v2473 = vadd.f32 %v2345, %v2349
        %v2474 = vadd.f32 %v2350, %v2354
        %v2475 = vadd.f32 %v2351, %v2355
        %v2476 = vadd.f32 %v2352, %v2356
        %v2477 = vadd.f32 %v2353, %v2357
        %v2478 = vadd.f32 %v2358, %v2362
        %v2479 = vadd.f32 %v2359, %v2363
        %v2480 = vadd.f32 %v2360, %v2364
        %v2481 = vadd.f32 %v2361, %v2365
        %v2482 = vadd.f32 %v2366, %v2370
        %v2483 = vadd.f32 %v2367, %v2371
        %v2484 = vadd.f32 %v2368, %v2372
        %v2485 = vadd.f32 %v2369, %v2373
        %v2486 = vadd.f32 %v2374, %v2378
        %v2487 = vadd.f32 %v2375, %v2379
        %v2488 = vadd.f32 %v2376, %v2380
        %v2489 = vadd.f32 %v2377, %v2381
        %v2490 = vadd.f32 %v2382, %v2386
        %v2491 = vadd.f32 %v2383, %v2387
        %v2492 = vadd.f32 %v2384, %v2388
        %v2493 = vadd.f32 %v2385, %v2389
        %v2494 = vadd.f32 %v2390, %v2394
        %v2495 = vadd.f32 %v2391, %v2395
        %v2496 = vadd.f32 %v2392, %v2396
        %v2497 = vadd.f32 %v2393, %v2397
        %v2498 = vadd.f32 %v2398, %v2402
        %v2499 = vadd.f32 %v2399, %v2403
        %v2500 = vadd.f32 %v2400, %v2404
        %v2501 = vadd.f32 %v2401, %v2405
        %v2502 = vadd.f32 %v2406, %v2410
        %v2503 = vadd.f32 %v2407, %v2411
        %v2504 = vadd.f32 %v2408, %v2412
        %v2505 = vadd.f32 %v2409, %v2413
        %v2506 = vadd.f32 %v2414, %v2418
        %v2507 = vadd.f32 %v2415, %v2419
        %v2508 = vadd.f32 %v2416, %v2420
        %v2509 = vadd.f32 %v2417, %v2421
        %v2510 = vadd.f32 %v2422, %v2426
        %v2511 = vadd.f32 %v2423, %v2427
        %v2512 = vadd.f32 %v2424, %v2428
        %v2513 = vadd.f32 %v2425, %v2429
        %v2514 = vadd.f32 %v2430, %v2434
        %v2515 = vadd.f32 %v2431, %v2435
        %v2516 = vadd.f32 %v2432, %v2436
        %v2517 = vadd.f32 %v2433, %v2437
        %v2518 = vadd.f32 %v2438, %v2442
        %v2519 = vadd.f32 %v2439, %v2443
        %v2520 = vadd.f32 %v2440, %v2444
        %v2521 = vadd.f32 %v2441, %v2445
        %v2522 = vadd.f32 %v2446, %v2450
        %v2523 = vadd.f32 %v2447, %v2451
        %v2524 = vadd.f32 %v2448, %v2452
        %v2525 = vadd.f32 %v2449, %v2453
        %v2526 = vadd.f32 %v2454, %v2458
        %v2527 = vadd.f32 %v2455, %v2459
        %v2528 = vadd.f32 %v2456, %v2460
        %v2529 = vadd.f32 %v2457, %v2461
        %v2530 = vadd.f32 %v2462, %v2466
        %v2531 = vadd.f32 %v2463, %v2467
        %v2532 = vadd.f32 %v2464, %v2468
        %v2533 = vadd.f32 %v2465, %v2469
        %v2534 = vadd.f32 %v2470, %v2472
        %v2535 = vadd.f32 %v2471, %v2473
        %v2536 = vadd.f32 %v2474, %v2476
        %v2537 = vadd.f32 %v2475, %v2477
        %v2538 = vadd.f32 %v2478, %v2480
        %v2539 = vadd.f32 %v2479, %v2481
        %v2540 = vadd.f32 %v2482, %v2484
        %v2541 = vadd.f32 %v2483, %v2485
        %v2542 = vadd.f32 %v2486, %v2488
        %v2543 = vadd.f32 %v2487, %v2489
        %v2544 = vadd.f32 %v2490, %v2492
        %v2545 = vadd.f32 %v2491, %v2493
        %v2546 = vadd.f32 %v2494, %v2496
        %v2547 = vadd.f32 %v2495, %v2497
        %v2548 = vadd.f32 %v2498, %v2500
        %v2549 = vadd.f32 %v2499, %v2501
        %v2550 = vadd.f32 %v2502, %v2504
        %v2551 = vadd.f32 %v2503, %v2505
        %v2552 = vadd.f32 %v2506, %v2508
        %v2553 = vadd.f32 %v2507, %v2509
        %v2554 = vadd.f32 %v2510, %v2512
        %v2555 = vadd.f32 %v2511, %v2513
        %v2556 = vadd.f32 %v2514, %v2516
        %v2557 = vadd.f32 %v2515, %v2517
        %v2558 = vadd.f32 %v2518, %v2520
        %v2559 = vadd.f32 %v2519, %v2521
        %v2560 = vadd.f32 %v2522, %v2524
        %v2561 = vadd.f32 %v2523, %v2525
        %v2562 = vadd.f32 %v2526, %v2528
        %v2563 = vadd.f32 %v2527, %v2529
        %v2564 = vadd.f32 %v2530, %v2532
        %v2565 = vadd.f32 %v2531, %v2533
        %v2566 = vadd.f32 %v2534, %v2535
        %v2567 = vadd.f32 %v2536, %v2537
        %v2568 = vadd.f32 %v2538, %v2539
        %v2569 = vadd.f32 %v2540, %v2541
        %v2570 = vadd.f32 %v2542, %v2543
        %v2571 = vadd.f32 %v2544, %v2545
        %v2572 = vadd.f32 %v2546, %v2547
        %v2573 = vadd.f32 %v2548, %v2549
        %v2574 = vadd.f32 %v2550, %v2551
        %v2575 = vadd.f32 %v2552, %v2553
        %v2576 = vadd.f32 %v2554, %v2555
        %v2577 = vadd.f32 %v2556, %v2557
        %v2578 = vadd.f32 %v2558, %v2559
        %v2579 = vadd.f32 %v2560, %v2561
        %v2580 = vadd.f32 %v2562, %v2563
        %v2581 = vadd.f32 %v2564, %v2565
        %2598 = vrot.lane.b32.xlu0 %v2566, 64
        %v2599 = vpop.permute.xlu0 %2598
        %2600 = vrot.lane.b32.xlu0 %v2567, 64
        %v2601 = vpop.permute.xlu0 %2600
        %2602 = vrot.lane.b32.xlu0 %v2568, 64
        %v2603 = vpop.permute.xlu0 %2602
        %2604 = vrot.lane.b32.xlu0 %v2569, 64
        %v2605 = vpop.permute.xlu0 %2604
        %2606 = vrot.lane.b32.xlu0 %v2570, 64
        %v2607 = vpop.permute.xlu0 %2606
        %2608 = vrot.lane.b32.xlu0 %v2571, 64
        %v2609 = vpop.permute.xlu0 %2608
        %2610 = vrot.lane.b32.xlu0 %v2572, 64
        %v2611 = vpop.permute.xlu0 %2610
        %2612 = vrot.lane.b32.xlu0 %v2573, 64
        %v2613 = vpop.permute.xlu0 %2612
        %2614 = vrot.lane.b32.xlu0 %v2574, 64
        %v2615 = vpop.permute.xlu0 %2614
        %2616 = vrot.lane.b32.xlu0 %v2575, 64
        %v2617 = vpop.permute.xlu0 %2616
        %2618 = vrot.lane.b32.xlu0 %v2576, 64
        %v2619 = vpop.permute.xlu0 %2618
        %2620 = vrot.lane.b32.xlu0 %v2577, 64
        %v2621 = vpop.permute.xlu0 %2620
        %2622 = vrot.lane.b32.xlu0 %v2578, 64
        %v2623 = vpop.permute.xlu0 %2622
        %2624 = vrot.lane.b32.xlu0 %v2579, 64
        %v2625 = vpop.permute.xlu0 %2624
        %2626 = vrot.lane.b32.xlu0 %v2580, 64
        %v2627 = vpop.permute.xlu0 %2626
        %2628 = vrot.lane.b32.xlu0 %v2581, 64
        %v2629 = vpop.permute.xlu0 %2628
        %v2646 = vadd.f32 %v2566, %v2599
        %v2647 = vadd.f32 %v2567, %v2601
        %v2648 = vadd.f32 %v2568, %v2603
        %v2649 = vadd.f32 %v2569, %v2605
        %v2650 = vadd.f32 %v2570, %v2607
        %v2651 = vadd.f32 %v2571, %v2609
        %v2652 = vadd.f32 %v2572, %v2611
        %v2653 = vadd.f32 %v2573, %v2613
        %v2654 = vadd.f32 %v2574, %v2615
        %v2655 = vadd.f32 %v2575, %v2617
        %v2656 = vadd.f32 %v2576, %v2619
        %v2657 = vadd.f32 %v2577, %v2621
        %v2658 = vadd.f32 %v2578, %v2623
        %v2659 = vadd.f32 %v2579, %v2625
        %v2660 = vadd.f32 %v2580, %v2627
        %v2661 = vadd.f32 %v2581, %v2629
        %2678 = vrot.lane.b32.xlu0 %v2646, 96
        %v2679 = vpop.permute.xlu0 %2678
        %2680 = vrot.lane.b32.xlu0 %v2647, 96
        %v2681 = vpop.permute.xlu0 %2680
        %2682 = vrot.lane.b32.xlu0 %v2648, 96
        %v2683 = vpop.permute.xlu0 %2682
        %2684 = vrot.lane.b32.xlu0 %v2649, 96
        %v2685 = vpop.permute.xlu0 %2684
        %2686 = vrot.lane.b32.xlu0 %v2650, 96
        %v2687 = vpop.permute.xlu0 %2686
        %2688 = vrot.lane.b32.xlu0 %v2651, 96
        %v2689 = vpop.permute.xlu0 %2688
        %2690 = vrot.lane.b32.xlu0 %v2652, 96
        %v2691 = vpop.permute.xlu0 %2690
        %2692 = vrot.lane.b32.xlu0 %v2653, 96
        %v2693 = vpop.permute.xlu0 %2692
        %2694 = vrot.lane.b32.xlu0 %v2654, 96
        %v2695 = vpop.permute.xlu0 %2694
        %2696 = vrot.lane.b32.xlu0 %v2655, 96
        %v2697 = vpop.permute.xlu0 %2696
        %2698 = vrot.lane.b32.xlu0 %v2656, 96
        %v2699 = vpop.permute.xlu0 %2698
        %2700 = vrot.lane.b32.xlu0 %v2657, 96
        %v2701 = vpop.permute.xlu0 %2700
        %2702 = vrot.lane.b32.xlu0 %v2658, 96
        %v2703 = vpop.permute.xlu0 %2702
        %2704 = vrot.lane.b32.xlu0 %v2659, 96
        %v2705 = vpop.permute.xlu0 %2704
        %2706 = vrot.lane.b32.xlu0 %v2660, 96
        %v2707 = vpop.permute.xlu0 %2706
        %2708 = vrot.lane.b32.xlu0 %v2661, 96
        %v2709 = vpop.permute.xlu0 %2708
        %v2726 = vadd.f32 %v2646, %v2679
        %v2727 = vadd.f32 %v2647, %v2681
        %v2728 = vadd.f32 %v2648, %v2683
        %v2729 = vadd.f32 %v2649, %v2685
        %v2730 = vadd.f32 %v2650, %v2687
        %v2731 = vadd.f32 %v2651, %v2689
        %v2732 = vadd.f32 %v2652, %v2691
        %v2733 = vadd.f32 %v2653, %v2693
        %v2734 = vadd.f32 %v2654, %v2695
        %v2735 = vadd.f32 %v2655, %v2697
        %v2736 = vadd.f32 %v2656, %v2699
        %v2737 = vadd.f32 %v2657, %v2701
        %v2738 = vadd.f32 %v2658, %v2703
        %v2739 = vadd.f32 %v2659, %v2705
        %v2740 = vadd.f32 %v2660, %v2707
        %v2741 = vadd.f32 %v2661, %v2709
        %v2742 = vld [vmem:[#allocation3] sm:$0xff]
        %v2743 = vld [vmem:[%s412] sm:$0xf]
        %v2744 = vpack.c.bf16 %v2727, %v2726
        %v2745 = vpack.c.bf16 %v2729, %v2728
        %v2746 = vpack.c.bf16 %v2731, %v2730
        %v2747 = vpack.c.bf16 %v2733, %v2732
        %v2748 = vpack.c.bf16 %v2735, %v2734
        %v2749 = vpack.c.bf16 %v2737, %v2736
        %v2750 = vpack.c.bf16 %v2739, %v2738
        %v2751 = vpack.c.bf16 %v2741, %v2740
        %2752 = vmatprep.subr.bf16.mxu0 0
        %2753 = vmatpush1.bf16.msra.mxu0 %v2744
        %2754 = vmatprep.subr.bf16.mxu0 0
        %2755 = vmatpush1.bf16.msra.mxu0 %v2745
        %2756 = vmatprep.subr.bf16.mxu0 0
        %2757 = vmatpush1.bf16.msra.mxu0 %v2746
        %2758 = vmatprep.subr.bf16.mxu0 0
        %2759 = vmatpush1.bf16.msra.mxu0 %v2747
        %2760 = vmatprep.subr.bf16.mxu0 0
        %2761 = vmatpush1.bf16.msra.mxu0 %v2748
        %2762 = vmatprep.subr.bf16.mxu0 0
        %2763 = vmatpush1.bf16.msra.mxu0 %v2749
        %2764 = vmatprep.subr.bf16.mxu0 0
        %2765 = vmatpush1.bf16.msra.mxu0 %v2750
        %2766 = vmatprep.subr.bf16.mxu0 0
        %2767 = vmatpush1.bf16.msra.mxu0 %v2751
        %2768 = vmatprep.subr.bf16.mxu0 0
        %2769 = vmatpush1.bf16.msra.mxu0 0
        %2770 = vmatprep.subr.bf16.mxu0 0
        %2771 = vmatpush1.bf16.msra.mxu0 0
        %2772 = vmatprep.subr.bf16.mxu0 0
        %2773 = vmatpush1.bf16.msra.mxu0 0
        %2774 = vmatprep.subr.bf16.mxu0 0
        %2775 = vmatpush1.bf16.msra.mxu0 0
        %2776 = vmatprep.subr.bf16.mxu0 0
        %2777 = vmatpush1.bf16.msra.mxu0 0
        %2778 = vmatprep.subr.bf16.mxu0 0
        %2779 = vmatpush1.bf16.msra.mxu0 0
        %2780 = vmatprep.subr.bf16.mxu0 0
        %2781 = vmatpush1.bf16.msra.mxu0 0
        %2782 = vmatprep.subr.bf16.mxu0 0
        %2783 = vmatpush1.bf16.msra.mxu0 0
        %2784 = vmatprep.mubr.bf16.mxu0 0
        %2785 = vmatmul.mubr.bf16.gmra.mrb[0].mxu0 %v2743
        %v2786 = vpop.f32.mrb[0].mxu0
        %v2787 = vadd.f32 0.0, %v2786
        %v2788 = vpop.f32.mrb[0].mxu0
        %v2789 = vpop.f32.mrb[0].mxu0
        %v2790 = vpop.f32.mrb[0].mxu0
        %2791 = vdwg.mxu0
        %v2792 = vadd.f32 %v2742, %v2787
        %2793 = vst.msk [vmem:[#allocation3] sm:$0xff] %vm1865, %v2792
        %p2794 = scmp.eq.s32.totalorder %s30, 1
        // Predicated region
        $region69: #{tpu_custom_call.1} parent=55 // pred_check
          %p2795 = pneg %p2794
        $region70: #{tpu_custom_call.1} parent=55 // pred_check_branch
          %2797 = sbr.rel (%p2795) target = $region72
        $region71: #{tpu_custom_call.1} parent=55 // pred_region
          %v2798 = vld [vmem:[#allocation3] sm:$0xff]
          %v2799 = vlaneseq
          %v2800 = vshrl.u32 %v2799, 7
          %v2801 = vsub.s32 2, %v2800
          %v2802 = vrot.slane %v436, %v2801
          %v2803 = vadd.f32 %v2798, %v2802
          %v2804 = vmax.f32 %v2803, 0.0
          %v2805 = vld [vmem:[#allocation2] sm:$0xff]
          %2807 = vrot.lane.b32.xlu0 %v2805, 32
          %v2808 = vpop.permute.xlu0 %2807
          %v2810 = vsel %vm1865, %v2804, %v2808
          %v2811 = vlaneseq
          %v2812 = vshrl.u32 %v2811, 7
          %v2813 = vsub.s32 0, %v2812
          %v2814 = vrot.slane %v436, %v2813
          %vm2815 = vcmask 523264
          %v2817 = vsel %vm2815, %v2810, 0
          %2819 = vmatprep.subr.mxu0 0.0
          %2820 = vmatpush1.msra.mxu0 %v416
          %2821 = vmatprep.subr.mxu0 0.0
          %2822 = vmatpush1.msra.mxu0 %v417
          %2823 = vmatprep.subr.mxu0 0.0
          %2824 = vmatpush1.msra.mxu0 %v418
          %2825 = vmatprep.subr.mxu0 0.0
          %2826 = vmatpush1.msra.mxu0 %v419
          %2827 = vmatprep.subr.mxu0 0.0
          %2828 = vmatpush1.msra.mxu0 %v420
          %2829 = vmatprep.subr.mxu0 0.0
          %2830 = vmatpush1.msra.mxu0 %v421
          %2831 = vmatprep.subr.mxu0 0.0
          %2832 = vmatpush1.msra.mxu0 %v422
          %2833 = vmatprep.subr.mxu0 0.0
          %2834 = vmatpush1.msra.mxu0 %v423
          %2835 = vmatprep.subr.mxu0 0.0
          %2836 = vmatpush1.msra.mxu0 0.0
          %2837 = vmatprep.subr.mxu0 0.0
          %2838 = vmatpush1.msra.mxu0 0.0
          %2839 = vmatprep.subr.mxu0 0.0
          %2840 = vmatpush1.msra.mxu0 0.0
          %2841 = vmatprep.subr.mxu0 0.0
          %2842 = vmatpush1.msra.mxu0 0.0
          %2843 = vmatprep.subr.mxu0 0.0
          %2844 = vmatpush1.msra.mxu0 0.0
          %2845 = vmatprep.subr.mxu0 0.0
          %2846 = vmatpush1.msra.mxu0 0.0
          %2847 = vmatprep.subr.mxu0 0.0
          %2848 = vmatpush1.msra.mxu0 0.0
          %2849 = vmatprep.subr.mxu0 0.0
          %2850 = vmatpush1.msra.mxu0 0.0
          %2851 = vmatprep.subr.mxu0 0.0
          %2852 = vmatpush1.msra.mxu0 0.0
          %2853 = vmatprep.subr.mxu0 0.0
          %2854 = vmatpush1.msra.mxu0 0.0
          %2855 = vmatprep.subr.mxu0 0.0
          %2856 = vmatpush1.msra.mxu0 0.0
          %2857 = vmatprep.subr.mxu0 0.0
          %2858 = vmatpush1.msra.mxu0 0.0
          %2859 = vmatprep.subr.mxu0 0.0
          %2860 = vmatpush1.msra.mxu0 0.0
          %2861 = vmatprep.subr.mxu0 0.0
          %2862 = vmatpush1.msra.mxu0 0.0
          %2863 = vmatprep.subr.mxu0 0.0
          %2864 = vmatpush1.msra.mxu0 0.0
          %2865 = vmatprep.subr.mxu0 0.0
          %2866 = vmatpush1.msra.mxu0 0.0
          %2867 = vmatprep.subr.mxu0 0.0
          %2868 = vmatpush1.msra.mxu0 0.0
          %2869 = vmatprep.subr.mxu0 0.0
          %2870 = vmatpush1.msra.mxu0 0.0
          %2871 = vmatprep.subr.mxu0 0.0
          %2872 = vmatpush1.msra.mxu0 0.0
          %2873 = vmatprep.subr.mxu0 0.0
          %2874 = vmatpush1.msra.mxu0 0.0
          %2875 = vmatprep.subr.mxu0 0.0
          %2876 = vmatpush1.msra.mxu0 0.0
          %2877 = vmatprep.subr.mxu0 0.0
          %2878 = vmatpush1.msra.mxu0 0.0
          %2879 = vmatprep.subr.mxu0 0.0
          %2880 = vmatpush1.msra.mxu0 0.0
          %2881 = vmatprep.subr.mxu0 0.0
          %2882 = vmatpush1.msra.mxu0 0.0
          %2883 = vmatprep.mubr.f32.mxu0 0.0
          %2884 = vmatmul.mubr.f32.gmra.mrb[0].mxu0 %v2817
          %v2885 = vpop.f32.mrb[0].mxu0
          %v2886 = vadd.f32 %v2814, %v2885
          %v2887 = vpop.f32.mrb[0].mxu0
          %2888 = vdwg.mxu0
          %v2889 = vxor.u32 %v2886, 2147483648
          %v2890 = vmul.f32 %v2889, 1.442695
          %v2891 = vpow.pop %v2890
          %v2892 = vadd.f32 %v2891, 1.0
          %v2893 = vrcp.pop %v2892
          %v2894 = vmul.f32 1.0, %v2893
          %2896 = vrot.lane.b32.xlu0 %v2886, 32
          %v2897 = vpop.permute.xlu0 %2896
          %v2899 = vmul.f32 %v2894, %v2897
          %2901 = vrot.lane.b32.xlu0 %v2899, 64
          %v2902 = vpop.permute.xlu0 %2901
          %v2904 = vadd.f32 %v2886, %v2902
          %v2905 = vtanh.pop %v2904
          %v2906 = vsub.f32 1.0, %v2894
          %2908 = vrot.lane.b32.xlu0 %v2905, 96
          %v2909 = vpop.permute.xlu0 %2908
          %v2911 = vmul.f32 %v2906, %v2909
          %v2912 = vmul.f32 %v2894, %v2808
          %v2913 = vadd.f32 %v2911, %v2912
          %2915 = vrot.lane.b32.xlu0 %v2913, 96
          %v2916 = vpop.permute.xlu0 %2915
          %2918 = vst.msk [vmem:[#allocation2] sm:$0xff] %vm1865, %v2916
        $region72: #{tpu_custom_call.1} parent=55 // pred_fallthru
          _
        %p2919 = scmp.eq.s32.totalorder %s29, 2
        %p2920 = pnand %p2919, %p2794
        %p2921 = pneg %p2920
        // Predicated region
        $region73: #{tpu_custom_call.1} parent=55 // pred_check
          _
        $region74: #{tpu_custom_call.1} parent=55 // pred_check_branch
          %2923 = sbr.rel (%p2920) target = $region76
        $region75: #{tpu_custom_call.1} parent=55 // pred_region
          %v2924 = vld [vmem:[#allocation2] sm:$0xff]
          %2925 = vst.msk [vmem:[#allocation8] sm:$0xff] %vm1865, %v2924
          %v2926 = vld [vmem:[%s4] sm:$0xff]
          %v2927 = vlaneseq
          %v2928 = vshrl.u32 %v2927, 7
          %v2929 = vsub.s32 1, %v2928
          %v2930 = vrot.slane %v436, %v2929
          %v2931 = vxor.u32 %v2930, 2147483648
          %v2932 = vmul.f32 %v2931, 1.442695
          %v2933 = vpow.pop %v2932
          %v2934 = vadd.f32 %v2933, 1.0
          %v2935 = vrcp.pop %v2934
          %v2936 = vmul.f32 1.0, %v2935
          %v2937 = vtanh.pop %v2930
          %v2938 = vmul.f32 %v2936, 0.0
          %2940 = vrot.lane.b32.xlu0 %v2937, 64
          %v2941 = vpop.permute.xlu0 %2940
          %v2943 = vmul.f32 %v2936, %v2941
          %2945 = vrot.lane.b32.xlu0 %v2943, 32
          %v2946 = vpop.permute.xlu0 %2945
          %v2948 = vadd.f32 %v2938, %v2946
          %v2949 = vtanh.pop %v2948
          %2951 = vrot.lane.b32.xlu0 %v2949, 64
          %v2952 = vpop.permute.xlu0 %2951
          %v2954 = vmul.f32 %v2936, %v2952
          %2956 = vrot.lane.b32.xlu0 %v2954, 32
          %v2957 = vpop.permute.xlu0 %2956
          %vm2958 = vcmask 15360
          %v2960 = vsel %vm2958, %v2926, 0
          %vm2962 = vcmask 1041408
          %v2963 = vsel %vm2962, %v2957, 0
          %2965 = vmatprep.subr.mxu0 0.0
          %2966 = vmatpush1.msra.mxu0 %v2963
          %2967 = vmatprep.subr.mxu0 0.0
          %2968 = vmatpush1.msra.mxu0 0.0
          %2969 = vmatprep.subr.mxu0 0.0
          %2970 = vmatpush1.msra.mxu0 0.0
          %2971 = vmatprep.subr.mxu0 0.0
          %2972 = vmatpush1.msra.mxu0 0.0
          %2973 = vmatprep.subr.mxu0 0.0
          %2974 = vmatpush1.msra.mxu0 0.0
          %2975 = vmatprep.subr.mxu0 0.0
          %2976 = vmatpush1.msra.mxu0 0.0
          %2977 = vmatprep.subr.mxu0 0.0
          %2978 = vmatpush1.msra.mxu0 0.0
          %2979 = vmatprep.subr.mxu0 0.0
          %2980 = vmatpush1.msra.mxu0 0.0
          %2981 = vmatprep.subr.mxu0 0.0
          %2982 = vmatpush1.msra.mxu0 0.0
          %2983 = vmatprep.subr.mxu0 0.0
          %2984 = vmatpush1.msra.mxu0 0.0
          %2985 = vmatprep.subr.mxu0 0.0
          %2986 = vmatpush1.msra.mxu0 0.0
          %2987 = vmatprep.subr.mxu0 0.0
          %2988 = vmatpush1.msra.mxu0 0.0
          %2989 = vmatprep.subr.mxu0 0.0
          %2990 = vmatpush1.msra.mxu0 0.0
          %2991 = vmatprep.subr.mxu0 0.0
          %2992 = vmatpush1.msra.mxu0 0.0
          %2993 = vmatprep.subr.mxu0 0.0
          %2994 = vmatpush1.msra.mxu0 0.0
          %2995 = vmatprep.subr.mxu0 0.0
          %2996 = vmatpush1.msra.mxu0 0.0
          %2997 = vmatprep.subr.mxu0 0.0
          %2998 = vmatpush1.msra.mxu0 0.0
          %2999 = vmatprep.subr.mxu0 0.0
          %3000 = vmatpush1.msra.mxu0 0.0
          %3001 = vmatprep.subr.mxu0 0.0
          %3002 = vmatpush1.msra.mxu0 0.0
          %3003 = vmatprep.subr.mxu0 0.0
          %3004 = vmatpush1.msra.mxu0 0.0
          %3005 = vmatprep.subr.mxu0 0.0
          %3006 = vmatpush1.msra.mxu0 0.0
          %3007 = vmatprep.subr.mxu0 0.0
          %3008 = vmatpush1.msra.mxu0 0.0
          %3009 = vmatprep.subr.mxu0 0.0
          %3010 = vmatpush1.msra.mxu0 0.0
          %3011 = vmatprep.subr.mxu0 0.0
          %3012 = vmatpush1.msra.mxu0 0.0
          %3013 = vmatprep.subr.mxu0 0.0
          %3014 = vmatpush1.msra.mxu0 0.0
          %3015 = vmatprep.subr.mxu0 0.0
          %3016 = vmatpush1.msra.mxu0 0.0
          %3017 = vmatprep.subr.mxu0 0.0
          %3018 = vmatpush1.msra.mxu0 0.0
          %3019 = vmatprep.subr.mxu0 0.0
          %3020 = vmatpush1.msra.mxu0 0.0
          %3021 = vmatprep.subr.mxu0 0.0
          %3022 = vmatpush1.msra.mxu0 0.0
          %3023 = vmatprep.subr.mxu0 0.0
          %3024 = vmatpush1.msra.mxu0 0.0
          %3025 = vmatprep.subr.mxu0 0.0
          %3026 = vmatpush1.msra.mxu0 0.0
          %3027 = vmatprep.subr.mxu0 0.0
          %3028 = vmatpush1.msra.mxu0 0.0
          %3029 = vmatprep.mubr.f32.mxu0 0.0
          %3030 = vmatmul.mubr.f32.gmra.mrb[0].mxu0 %v2960
          %v3031 = vpop.f32.mrb[0].mxu0
          %v3032 = vadd.f32 0.0, %v3031
          %v3033 = vpop.f32.mrb[0].mxu0
          %3034 = vdwg.mxu0
          %v3035 = vmul.f32 %v2924, %v3032
          %v3036 = vsel %vm1865, %v3035, 0.0
          %3037 = vadd.xlane.f32.xlu0 %v3036
          %v3038 = vpop.xlane.xlu0 %3037
          %vm3039 = vcmp.gt.f32.partialorder %v2926, 0.0
          %v3040 = vsel %vm3039, %v3038, -1e+30
          %v3041 = vsel %vm2958, %v3040, -inf
          %v3042 = vrot.slane %v3041, 4
          %v3043 = vmax.f32 %v3041, %v3042
          %v3044 = vrot.slane %v3043, 2
          %v3045 = vmax.f32 %v3043, %v3044
          %v3046 = vrot.slane %v3045, 1
          %v3047 = vmax.f32 %v3045, %v3046
          %v3048 = vmul.f32 %v2926, %v3047
          %v3049 = vsel %vm2958, %v3048, 0.0
          %3050 = vadd.xlane.f32.xlu0 %v3049
          %v3051 = vpop.xlane.xlu0 %3050
          %v3052 = vsub.f32 %v3038, %v3051
          %v3053 = vmul.f32 %v3052, 1.442695
          %v3054 = vpow.pop %v3053
          %v3055 = vmul.f32 %v2926, %v3054
          %v3056 = vsel %vm2958, %v3055, 0.0
          %v3057 = vrot.slane %v3056, 4
          %v3058 = vadd.f32 %v3056, %v3057
          %v3059 = vrot.slane %v3058, 2
          %v3060 = vadd.f32 %v3058, %v3059
          %v3061 = vrot.slane %v3060, 1
          %v3062 = vadd.f32 %v3060, %v3061
          %v3063 = vmul.f32 %v2926, %v3062
          %v3064 = vsel %vm2958, %v3063, 0.0
          %3065 = vadd.xlane.f32.xlu0 %v3064
          %v3066 = vpop.xlane.xlu0 %3065
          %v3067 = vrcp.pop %v3066
          %v3068 = vmul.f32 %v3054, %v3067
          %v3069 = vld [vmem:[%s5] sm:$0x1]
          %v3070 = vmul.f32 %v3068, %v2924
          %v3071 = vpack.c.bf16 %v3070, %v3070
          %v3073 = vsel %vm1635, %v3069, 0
          %v3076 = vsel %vm1660, %v3071, 0
          %3078 = vmatprep.subr.bf16.mxu0 0
          %3079 = vmatpush1.bf16.msra.mxu0 %v3076
          %3080 = vmatprep.subr.bf16.mxu0 0
          %3081 = vmatpush1.bf16.msra.mxu0 0
          %3082 = vmatprep.subr.bf16.mxu0 0
          %3083 = vmatpush1.bf16.msra.mxu0 0
          %3084 = vmatprep.subr.bf16.mxu0 0
          %3085 = vmatpush1.bf16.msra.mxu0 0
          %3086 = vmatprep.subr.bf16.mxu0 0
          %3087 = vmatpush1.bf16.msra.mxu0 0
          %3088 = vmatprep.subr.bf16.mxu0 0
          %3089 = vmatpush1.bf16.msra.mxu0 0
          %3090 = vmatprep.subr.bf16.mxu0 0
          %3091 = vmatpush1.bf16.msra.mxu0 0
          %3092 = vmatprep.subr.bf16.mxu0 0
          %3093 = vmatpush1.bf16.msra.mxu0 0
          %3094 = vmatprep.subr.bf16.mxu0 0
          %3095 = vmatpush1.bf16.msra.mxu0 0
          %3096 = vmatprep.subr.bf16.mxu0 0
          %3097 = vmatpush1.bf16.msra.mxu0 0
          %3098 = vmatprep.subr.bf16.mxu0 0
          %3099 = vmatpush1.bf16.msra.mxu0 0
          %3100 = vmatprep.subr.bf16.mxu0 0
          %3101 = vmatpush1.bf16.msra.mxu0 0
          %3102 = vmatprep.subr.bf16.mxu0 0
          %3103 = vmatpush1.bf16.msra.mxu0 0
          %3104 = vmatprep.subr.bf16.mxu0 0
          %3105 = vmatpush1.bf16.msra.mxu0 0
          %3106 = vmatprep.subr.bf16.mxu0 0
          %3107 = vmatpush1.bf16.msra.mxu0 0
          %3108 = vmatprep.subr.bf16.mxu0 0
          %3109 = vmatpush1.bf16.msra.mxu0 0
          %3110 = vmatprep.mubr.bf16.mxu0 0
          %3111 = vmatmul.mubr.bf16.gmra.mrb[0].mxu0 %v3073
          %v3112 = vpop.f32.mrb[0].mxu0
          %v3113 = vadd.f32 0.0, %v3112
          %v3114 = vpop.f32.mrb[0].mxu0
          %v3115 = vpop.f32.mrb[0].mxu0
          %v3116 = vpop.f32.mrb[0].mxu0
          %3117 = vdwg.mxu0
          %3120 = vrot.lane.b32.xlu0 %v3113, 32
          %v3121 = vpop.permute.xlu0 %3120
          %3123 = vrot.lane.b32.xlu0 %v2954, 96
          %v3124 = vpop.permute.xlu0 %3123
          %v3126 = vsel %vm1865, %v2957, %v3121
          %vm3127 = vcmask 523264
          %v3128 = vsel %vm3127, %v3126, %v3124
          %vm3129 = vcmask 785408
          %v3131 = vsel %vm3129, %v3128, 0
          %3133 = vmatprep.subr.mxu0 0.0
          %3134 = vmatpush1.msra.mxu0 %v424
          %3135 = vmatprep.subr.mxu0 0.0
          %3136 = vmatpush1.msra.mxu0 %v425
          %3137 = vmatprep.subr.mxu0 0.0
          %3138 = vmatpush1.msra.mxu0 %v426
          %3139 = vmatprep.subr.mxu0 0.0
          %3140 = vmatpush1.msra.mxu0 %v427
          %3141 = vmatprep.subr.mxu0 0.0
          %3142 = vmatpush1.msra.mxu0 %v428
          %3143 = vmatprep.subr.mxu0 0.0
          %3144 = vmatpush1.msra.mxu0 %v429
          %3145 = vmatprep.subr.mxu0 0.0
          %3146 = vmatpush1.msra.mxu0 %v430
          %3147 = vmatprep.subr.mxu0 0.0
          %3148 = vmatpush1.msra.mxu0 %v431
          %3149 = vmatprep.subr.mxu0 0.0
          %3150 = vmatpush1.msra.mxu0 %v432
          %3151 = vmatprep.subr.mxu0 0.0
          %3152 = vmatpush1.msra.mxu0 %v433
          %3153 = vmatprep.subr.mxu0 0.0
          %3154 = vmatpush1.msra.mxu0 %v434
          %3155 = vmatprep.subr.mxu0 0.0
          %3156 = vmatpush1.msra.mxu0 %v435
          %3157 = vmatprep.subr.mxu0 0.0
          %3158 = vmatpush1.msra.mxu0 0.0
          %3159 = vmatprep.subr.mxu0 0.0
          %3160 = vmatpush1.msra.mxu0 0.0
          %3161 = vmatprep.subr.mxu0 0.0
          %3162 = vmatpush1.msra.mxu0 0.0
          %3163 = vmatprep.subr.mxu0 0.0
          %3164 = vmatpush1.msra.mxu0 0.0
          %3165 = vmatprep.subr.mxu0 0.0
          %3166 = vmatpush1.msra.mxu0 0.0
          %3167 = vmatprep.subr.mxu0 0.0
          %3168 = vmatpush1.msra.mxu0 0.0
          %3169 = vmatprep.subr.mxu0 0.0
          %3170 = vmatpush1.msra.mxu0 0.0
          %3171 = vmatprep.subr.mxu0 0.0
          %3172 = vmatpush1.msra.mxu0 0.0
          %3173 = vmatprep.subr.mxu0 0.0
          %3174 = vmatpush1.msra.mxu0 0.0
          %3175 = vmatprep.subr.mxu0 0.0
          %3176 = vmatpush1.msra.mxu0 0.0
          %3177 = vmatprep.subr.mxu0 0.0
          %3178 = vmatpush1.msra.mxu0 0.0
          %3179 = vmatprep.subr.mxu0 0.0
          %3180 = vmatpush1.msra.mxu0 0.0
          %3181 = vmatprep.subr.mxu0 0.0
          %3182 = vmatpush1.msra.mxu0 0.0
          %3183 = vmatprep.subr.mxu0 0.0
          %3184 = vmatpush1.msra.mxu0 0.0
          %3185 = vmatprep.subr.mxu0 0.0
          %3186 = vmatpush1.msra.mxu0 0.0
          %3187 = vmatprep.subr.mxu0 0.0
          %3188 = vmatpush1.msra.mxu0 0.0
          %3189 = vmatprep.subr.mxu0 0.0
          %3190 = vmatpush1.msra.mxu0 0.0
          %3191 = vmatprep.subr.mxu0 0.0
          %3192 = vmatpush1.msra.mxu0 0.0
          %3193 = vmatprep.subr.mxu0 0.0
          %3194 = vmatpush1.msra.mxu0 0.0
          %3195 = vmatprep.subr.mxu0 0.0
          %3196 = vmatpush1.msra.mxu0 0.0
          %3197 = vmatprep.mubr.f32.mxu0 0.0
          %3198 = vmatmul.mubr.f32.gmra.mrb[0].mxu0 %v3131
          %v3199 = vpop.f32.mrb[0].mxu0
          %v3200 = vadd.f32 %v2930, %v3199
          %v3201 = vpop.f32.mrb[0].mxu0
          %3202 = vdwg.mxu0
          %v3203 = vxor.u32 %v3200, 2147483648
          %v3204 = vmul.f32 %v3203, 1.442695
          %v3205 = vpow.pop %v3204
          %v3206 = vadd.f32 %v3205, 1.0
          %v3207 = vrcp.pop %v3206
          %v3208 = vmul.f32 1.0, %v3207
          %v3209 = vtanh.pop %v3200
          %v3210 = vmul.f32 %v3208, %v2948
          %3212 = vrot.lane.b32.xlu0 %v3209, 64
          %v3213 = vpop.permute.xlu0 %3212
          %v3215 = vmul.f32 %v3208, %v3213
          %3217 = vrot.lane.b32.xlu0 %v3215, 32
          %v3218 = vpop.permute.xlu0 %3217
          %v3220 = vadd.f32 %v3210, %v3218
          %v3221 = vtanh.pop %v3220
          %3223 = vrot.lane.b32.xlu0 %v3221, 64
          %v3224 = vpop.permute.xlu0 %3223
          %v3226 = vmul.f32 %v3208, %v3224
          %3228 = vrot.lane.b32.xlu0 %v3226, 32
          %v3229 = vpop.permute.xlu0 %3228
          %v3230 = vsel %vm2962, %v3229, 0
          %3232 = vmatprep.subr.mxu0 0.0
          %3233 = vmatpush1.msra.mxu0 %v3230
          %3234 = vmatprep.subr.mxu0 0.0
          %3235 = vmatpush1.msra.mxu0 0.0
          %3236 = vmatprep.subr.mxu0 0.0
          %3237 = vmatpush1.msra.mxu0 0.0
          %3238 = vmatprep.subr.mxu0 0.0
          %3239 = vmatpush1.msra.mxu0 0.0
          %3240 = vmatprep.subr.mxu0 0.0
          %3241 = vmatpush1.msra.mxu0 0.0
          %3242 = vmatprep.subr.mxu0 0.0
          %3243 = vmatpush1.msra.mxu0 0.0
          %3244 = vmatprep.subr.mxu0 0.0
          %3245 = vmatpush1.msra.mxu0 0.0
          %3246 = vmatprep.subr.mxu0 0.0
          %3247 = vmatpush1.msra.mxu0 0.0
          %3248 = vmatprep.subr.mxu0 0.0
          %3249 = vmatpush1.msra.mxu0 0.0
          %3250 = vmatprep.subr.mxu0 0.0
          %3251 = vmatpush1.msra.mxu0 0.0
          %3252 = vmatprep.subr.mxu0 0.0
          %3253 = vmatpush1.msra.mxu0 0.0
          %3254 = vmatprep.subr.mxu0 0.0
          %3255 = vmatpush1.msra.mxu0 0.0
          %3256 = vmatprep.subr.mxu0 0.0
          %3257 = vmatpush1.msra.mxu0 0.0
          %3258 = vmatprep.subr.mxu0 0.0
          %3259 = vmatpush1.msra.mxu0 0.0
          %3260 = vmatprep.subr.mxu0 0.0
          %3261 = vmatpush1.msra.mxu0 0.0
          %3262 = vmatprep.subr.mxu0 0.0
          %3263 = vmatpush1.msra.mxu0 0.0
          %3264 = vmatprep.subr.mxu0 0.0
          %3265 = vmatpush1.msra.mxu0 0.0
          %3266 = vmatprep.subr.mxu0 0.0
          %3267 = vmatpush1.msra.mxu0 0.0
          %3268 = vmatprep.subr.mxu0 0.0
          %3269 = vmatpush1.msra.mxu0 0.0
          %3270 = vmatprep.subr.mxu0 0.0
          %3271 = vmatpush1.msra.mxu0 0.0
          %3272 = vmatprep.subr.mxu0 0.0
          %3273 = vmatpush1.msra.mxu0 0.0
          %3274 = vmatprep.subr.mxu0 0.0
          %3275 = vmatpush1.msra.mxu0 0.0
          %3276 = vmatprep.subr.mxu0 0.0
          %3277 = vmatpush1.msra.mxu0 0.0
          %3278 = vmatprep.subr.mxu0 0.0
          %3279 = vmatpush1.msra.mxu0 0.0
          %3280 = vmatprep.subr.mxu0 0.0
          %3281 = vmatpush1.msra.mxu0 0.0
          %3282 = vmatprep.subr.mxu0 0.0
          %3283 = vmatpush1.msra.mxu0 0.0
          %3284 = vmatprep.subr.mxu0 0.0
          %3285 = vmatpush1.msra.mxu0 0.0
          %3286 = vmatprep.subr.mxu0 0.0
          %3287 = vmatpush1.msra.mxu0 0.0
          %3288 = vmatprep.subr.mxu0 0.0
          %3289 = vmatpush1.msra.mxu0 0.0
          %3290 = vmatprep.subr.mxu0 0.0
          %3291 = vmatpush1.msra.mxu0 0.0
          %3292 = vmatprep.subr.mxu0 0.0
          %3293 = vmatpush1.msra.mxu0 0.0
          %3294 = vmatprep.subr.mxu0 0.0
          %3295 = vmatpush1.msra.mxu0 0.0
          %3296 = vmatprep.mubr.f32.mxu0 0.0
          %3297 = vmatmul.mubr.f32.gmra.mrb[0].mxu0 %v2960
          %v3298 = vpop.f32.mrb[0].mxu0
          %v3299 = vadd.f32 0.0, %v3298
          %v3300 = vpop.f32.mrb[0].mxu0
          %3301 = vdwg.mxu0
          %v3302 = vmul.f32 %v2924, %v3299
          %v3303 = vsel %vm1865, %v3302, 0.0
          %3304 = vadd.xlane.f32.xlu0 %v3303
          %v3305 = vpop.xlane.xlu0 %3304
          %v3306 = vsel %vm3039, %v3305, -1e+30
          %v3307 = vsel %vm2958, %v3306, -inf
          %v3308 = vrot.slane %v3307, 4
          %v3309 = vmax.f32 %v3307, %v3308
          %v3310 = vrot.slane %v3309, 2
          %v3311 = vmax.f32 %v3309, %v3310
          %v3312 = vrot.slane %v3311, 1
          %v3313 = vmax.f32 %v3311, %v3312
          %v3314 = vmul.f32 %v2926, %v3313
          %v3315 = vsel %vm2958, %v3314, 0.0
          %3316 = vadd.xlane.f32.xlu0 %v3315
          %v3317 = vpop.xlane.xlu0 %3316
          %v3318 = vsub.f32 %v3305, %v3317
          %v3319 = vmul.f32 %v3318, 1.442695
          %v3320 = vpow.pop %v3319
          %v3321 = vmul.f32 %v2926, %v3320
          %v3322 = vsel %vm2958, %v3321, 0.0
          %v3323 = vrot.slane %v3322, 4
          %v3324 = vadd.f32 %v3322, %v3323
          %v3325 = vrot.slane %v3324, 2
          %v3326 = vadd.f32 %v3324, %v3325
          %v3327 = vrot.slane %v3326, 1
          %v3328 = vadd.f32 %v3326, %v3327
          %v3329 = vmul.f32 %v2926, %v3328
          %v3330 = vsel %vm2958, %v3329, 0.0
          %3331 = vadd.xlane.f32.xlu0 %v3330
          %v3332 = vpop.xlane.xlu0 %3331
          %v3333 = vrcp.pop %v3332
          %v3334 = vmul.f32 %v3320, %v3333
          %v3335 = vmul.f32 %v3334, %v2924
          %v3336 = vpack.c.bf16 %v3335, %v3335
          %v3338 = vsel %vm1660, %v3336, 0
          %3340 = vmatprep.subr.bf16.mxu0 0
          %3341 = vmatpush1.bf16.msra.mxu0 %v3338
          %3342 = vmatprep.subr.bf16.mxu0 0
          %3343 = vmatpush1.bf16.msra.mxu0 0
          %3344 = vmatprep.subr.bf16.mxu0 0
          %3345 = vmatpush1.bf16.msra.mxu0 0
          %3346 = vmatprep.subr.bf16.mxu0 0
          %3347 = vmatpush1.bf16.msra.mxu0 0
          %3348 = vmatprep.subr.bf16.mxu0 0
          %3349 = vmatpush1.bf16.msra.mxu0 0
          %3350 = vmatprep.subr.bf16.mxu0 0
          %3351 = vmatpush1.bf16.msra.mxu0 0
          %3352 = vmatprep.subr.bf16.mxu0 0
          %3353 = vmatpush1.bf16.msra.mxu0 0
          %3354 = vmatprep.subr.bf16.mxu0 0
          %3355 = vmatpush1.bf16.msra.mxu0 0
          %3356 = vmatprep.subr.bf16.mxu0 0
          %3357 = vmatpush1.bf16.msra.mxu0 0
          %3358 = vmatprep.subr.bf16.mxu0 0
          %3359 = vmatpush1.bf16.msra.mxu0 0
          %3360 = vmatprep.subr.bf16.mxu0 0
          %3361 = vmatpush1.bf16.msra.mxu0 0
          %3362 = vmatprep.subr.bf16.mxu0 0
          %3363 = vmatpush1.bf16.msra.mxu0 0
          %3364 = vmatprep.subr.bf16.mxu0 0
          %3365 = vmatpush1.bf16.msra.mxu0 0
          %3366 = vmatprep.subr.bf16.mxu0 0
          %3367 = vmatpush1.bf16.msra.mxu0 0
          %3368 = vmatprep.subr.bf16.mxu0 0
          %3369 = vmatpush1.bf16.msra.mxu0 0
          %3370 = vmatprep.subr.bf16.mxu0 0
          %3371 = vmatpush1.bf16.msra.mxu0 0
          %3372 = vmatprep.mubr.bf16.mxu0 0
          %3373 = vmatmul.mubr.bf16.gmra.mrb[0].mxu0 %v3073
          %v3374 = vpop.f32.mrb[0].mxu0
          %v3375 = vadd.f32 0.0, %v3374
          %v3376 = vpop.f32.mrb[0].mxu0
          %v3377 = vpop.f32.mrb[0].mxu0
          %v3378 = vpop.f32.mrb[0].mxu0
          %3379 = vdwg.mxu0
          %3382 = vrot.lane.b32.xlu0 %v3375, 32
          %v3383 = vpop.permute.xlu0 %3382
          %3385 = vrot.lane.b32.xlu0 %v3226, 96
          %v3386 = vpop.permute.xlu0 %3385
          %v3388 = vsel %vm1865, %v3229, %v3383
          %v3389 = vsel %vm3127, %v3388, %v3386
          %v3391 = vsel %vm3129, %v3389, 0
          %3393 = vmatprep.subr.mxu0 0.0
          %3394 = vmatpush1.msra.mxu0 %v424
          %3395 = vmatprep.subr.mxu0 0.0
          %3396 = vmatpush1.msra.mxu0 %v425
          %3397 = vmatprep.subr.mxu0 0.0
          %3398 = vmatpush1.msra.mxu0 %v426
          %3399 = vmatprep.subr.mxu0 0.0
          %3400 = vmatpush1.msra.mxu0 %v427
          %3401 = vmatprep.subr.mxu0 0.0
          %3402 = vmatpush1.msra.mxu0 %v428
          %3403 = vmatprep.subr.mxu0 0.0
          %3404 = vmatpush1.msra.mxu0 %v429
          %3405 = vmatprep.subr.mxu0 0.0
          %3406 = vmatpush1.msra.mxu0 %v430
          %3407 = vmatprep.subr.mxu0 0.0
          %3408 = vmatpush1.msra.mxu0 %v431
          %3409 = vmatprep.subr.mxu0 0.0
          %3410 = vmatpush1.msra.mxu0 %v432
          %3411 = vmatprep.subr.mxu0 0.0
          %3412 = vmatpush1.msra.mxu0 %v433
          %3413 = vmatprep.subr.mxu0 0.0
          %3414 = vmatpush1.msra.mxu0 %v434
          %3415 = vmatprep.subr.mxu0 0.0
          %3416 = vmatpush1.msra.mxu0 %v435
          %3417 = vmatprep.subr.mxu0 0.0
          %3418 = vmatpush1.msra.mxu0 0.0
          %3419 = vmatprep.subr.mxu0 0.0
          %3420 = vmatpush1.msra.mxu0 0.0
          %3421 = vmatprep.subr.mxu0 0.0
          %3422 = vmatpush1.msra.mxu0 0.0
          %3423 = vmatprep.subr.mxu0 0.0
          %3424 = vmatpush1.msra.mxu0 0.0
          %3425 = vmatprep.subr.mxu0 0.0
          %3426 = vmatpush1.msra.mxu0 0.0
          %3427 = vmatprep.subr.mxu0 0.0
          %3428 = vmatpush1.msra.mxu0 0.0
          %3429 = vmatprep.subr.mxu0 0.0
          %3430 = vmatpush1.msra.mxu0 0.0
          %3431 = vmatprep.subr.mxu0 0.0
          %3432 = vmatpush1.msra.mxu0 0.0
          %3433 = vmatprep.subr.mxu0 0.0
          %3434 = vmatpush1.msra.mxu0 0.0
          %3435 = vmatprep.subr.mxu0 0.0
          %3436 = vmatpush1.msra.mxu0 0.0
          %3437 = vmatprep.subr.mxu0 0.0
          %3438 = vmatpush1.msra.mxu0 0.0
          %3439 = vmatprep.subr.mxu0 0.0
          %3440 = vmatpush1.msra.mxu0 0.0
          %3441 = vmatprep.subr.mxu0 0.0
          %3442 = vmatpush1.msra.mxu0 0.0
          %3443 = vmatprep.subr.mxu0 0.0
          %3444 = vmatpush1.msra.mxu0 0.0
          %3445 = vmatprep.subr.mxu0 0.0
          %3446 = vmatpush1.msra.mxu0 0.0
          %3447 = vmatprep.subr.mxu0 0.0
          %3448 = vmatpush1.msra.mxu0 0.0
          %3449 = vmatprep.subr.mxu0 0.0
          %3450 = vmatpush1.msra.mxu0 0.0
          %3451 = vmatprep.subr.mxu0 0.0
          %3452 = vmatpush1.msra.mxu0 0.0
          %3453 = vmatprep.subr.mxu0 0.0
          %3454 = vmatpush1.msra.mxu0 0.0
          %3455 = vmatprep.subr.mxu0 0.0
          %3456 = vmatpush1.msra.mxu0 0.0
          %3457 = vmatprep.mubr.f32.mxu0 0.0
          %3458 = vmatmul.mubr.f32.gmra.mrb[0].mxu0 %v3391
          %v3459 = vpop.f32.mrb[0].mxu0
          %v3460 = vadd.f32 %v2930, %v3459
          %v3461 = vpop.f32.mrb[0].mxu0
          %3462 = vdwg.mxu0
          %v3463 = vxor.u32 %v3460, 2147483648
          %v3464 = vmul.f32 %v3463, 1.442695
          %v3465 = vpow.pop %v3464
          %v3466 = vadd.f32 %v3465, 1.0
          %v3467 = vrcp.pop %v3466
          %v3468 = vmul.f32 1.0, %v3467
          %v3469 = vtanh.pop %v3460
          %v3470 = vmul.f32 %v3468, %v3220
          %3472 = vrot.lane.b32.xlu0 %v3469, 64
          %v3473 = vpop.permute.xlu0 %3472
          %v3475 = vmul.f32 %v3468, %v3473
          %3477 = vrot.lane.b32.xlu0 %v3475, 32
          %v3478 = vpop.permute.xlu0 %3477
          %v3480 = vadd.f32 %v3470, %v3478
          %v3481 = vtanh.pop %v3480
          %3483 = vrot.lane.b32.xlu0 %v3481, 64
          %v3484 = vpop.permute.xlu0 %3483
          %v3486 = vmul.f32 %v3468, %v3484
          %3488 = vrot.lane.b32.xlu0 %v3486, 32
          %v3489 = vpop.permute.xlu0 %3488
          %v3490 = vsel %vm2962, %v3489, 0
          %3492 = vmatprep.subr.mxu0 0.0
          %3493 = vmatpush1.msra.mxu0 %v3490
          %3494 = vmatprep.subr.mxu0 0.0
          %3495 = vmatpush1.msra.mxu0 0.0
          %3496 = vmatprep.subr.mxu0 0.0
          %3497 = vmatpush1.msra.mxu0 0.0
          %3498 = vmatprep.subr.mxu0 0.0
          %3499 = vmatpush1.msra.mxu0 0.0
          %3500 = vmatprep.subr.mxu0 0.0
          %3501 = vmatpush1.msra.mxu0 0.0
          %3502 = vmatprep.subr.mxu0 0.0
          %3503 = vmatpush1.msra.mxu0 0.0
          %3504 = vmatprep.subr.mxu0 0.0
          %3505 = vmatpush1.msra.mxu0 0.0
          %3506 = vmatprep.subr.mxu0 0.0
          %3507 = vmatpush1.msra.mxu0 0.0
          %3508 = vmatprep.subr.mxu0 0.0
          %3509 = vmatpush1.msra.mxu0 0.0
          %3510 = vmatprep.subr.mxu0 0.0
          %3511 = vmatpush1.msra.mxu0 0.0
          %3512 = vmatprep.subr.mxu0 0.0
          %3513 = vmatpush1.msra.mxu0 0.0
          %3514 = vmatprep.subr.mxu0 0.0
          %3515 = vmatpush1.msra.mxu0 0.0
          %3516 = vmatprep.subr.mxu0 0.0
          %3517 = vmatpush1.msra.mxu0 0.0
          %3518 = vmatprep.subr.mxu0 0.0
          %3519 = vmatpush1.msra.mxu0 0.0
          %3520 = vmatprep.subr.mxu0 0.0
          %3521 = vmatpush1.msra.mxu0 0.0
          %3522 = vmatprep.subr.mxu0 0.0
          %3523 = vmatpush1.msra.mxu0 0.0
          %3524 = vmatprep.subr.mxu0 0.0
          %3525 = vmatpush1.msra.mxu0 0.0
          %3526 = vmatprep.subr.mxu0 0.0
          %3527 = vmatpush1.msra.mxu0 0.0
          %3528 = vmatprep.subr.mxu0 0.0
          %3529 = vmatpush1.msra.mxu0 0.0
          %3530 = vmatprep.subr.mxu0 0.0
          %3531 = vmatpush1.msra.mxu0 0.0
          %3532 = vmatprep.subr.mxu0 0.0
          %3533 = vmatpush1.msra.mxu0 0.0
          %3534 = vmatprep.subr.mxu0 0.0
          %3535 = vmatpush1.msra.mxu0 0.0
          %3536 = vmatprep.subr.mxu0 0.0
          %3537 = vmatpush1.msra.mxu0 0.0
          %3538 = vmatprep.subr.mxu0 0.0
          %3539 = vmatpush1.msra.mxu0 0.0
          %3540 = vmatprep.subr.mxu0 0.0
          %3541 = vmatpush1.msra.mxu0 0.0
          %3542 = vmatprep.subr.mxu0 0.0
          %3543 = vmatpush1.msra.mxu0 0.0
          %3544 = vmatprep.subr.mxu0 0.0
          %3545 = vmatpush1.msra.mxu0 0.0
          %3546 = vmatprep.subr.mxu0 0.0
          %3547 = vmatpush1.msra.mxu0 0.0
          %3548 = vmatprep.subr.mxu0 0.0
          %3549 = vmatpush1.msra.mxu0 0.0
          %3550 = vmatprep.subr.mxu0 0.0
          %3551 = vmatpush1.msra.mxu0 0.0
          %3552 = vmatprep.subr.mxu0 0.0
          %3553 = vmatpush1.msra.mxu0 0.0
          %3554 = vmatprep.subr.mxu0 0.0
          %3555 = vmatpush1.msra.mxu0 0.0
          %3556 = vmatprep.mubr.f32.mxu0 0.0
          %3557 = vmatmul.mubr.f32.gmra.mrb[0].mxu0 %v2960
          %v3558 = vpop.f32.mrb[0].mxu0
          %v3559 = vadd.f32 0.0, %v3558
          %v3560 = vpop.f32.mrb[0].mxu0
          %3561 = vdwg.mxu0
          %v3562 = vmul.f32 %v2924, %v3559
          %v3563 = vsel %vm1865, %v3562, 0.0
          %3564 = vadd.xlane.f32.xlu0 %v3563
          %v3565 = vpop.xlane.xlu0 %3564
          %v3566 = vsel %vm3039, %v3565, -1e+30
          %v3567 = vsel %vm2958, %v3566, -inf
          %v3568 = vrot.slane %v3567, 4
          %v3569 = vmax.f32 %v3567, %v3568
          %v3570 = vrot.slane %v3569, 2
          %v3571 = vmax.f32 %v3569, %v3570
          %v3572 = vrot.slane %v3571, 1
          %v3573 = vmax.f32 %v3571, %v3572
          %v3574 = vmul.f32 %v2926, %v3573
          %v3575 = vsel %vm2958, %v3574, 0.0
          %3576 = vadd.xlane.f32.xlu0 %v3575
          %v3577 = vpop.xlane.xlu0 %3576
          %v3578 = vsub.f32 %v3565, %v3577
          %v3579 = vmul.f32 %v3578, 1.442695
          %v3580 = vpow.pop %v3579
          %v3581 = vmul.f32 %v2926, %v3580
          %v3582 = vsel %vm2958, %v3581, 0.0
          %v3583 = vrot.slane %v3582, 4
          %v3584 = vadd.f32 %v3582, %v3583
          %v3585 = vrot.slane %v3584, 2
          %v3586 = vadd.f32 %v3584, %v3585
          %v3587 = vrot.slane %v3586, 1
          %v3588 = vadd.f32 %v3586, %v3587
          %v3589 = vmul.f32 %v2926, %v3588
          %v3590 = vsel %vm2958, %v3589, 0.0
          %3591 = vadd.xlane.f32.xlu0 %v3590
          %v3592 = vpop.xlane.xlu0 %3591
          %v3593 = vrcp.pop %v3592
          %v3594 = vmul.f32 %v3580, %v3593
          %v3595 = vmul.f32 %v3594, %v2924
          %v3596 = vpack.c.bf16 %v3595, %v3595
          %v3598 = vsel %vm1660, %v3596, 0
          %3600 = vmatprep.subr.bf16.mxu0 0
          %3601 = vmatpush1.bf16.msra.mxu0 %v3598
          %3602 = vmatprep.subr.bf16.mxu0 0
          %3603 = vmatpush1.bf16.msra.mxu0 0
          %3604 = vmatprep.subr.bf16.mxu0 0
          %3605 = vmatpush1.bf16.msra.mxu0 0
          %3606 = vmatprep.subr.bf16.mxu0 0
          %3607 = vmatpush1.bf16.msra.mxu0 0
          %3608 = vmatprep.subr.bf16.mxu0 0
          %3609 = vmatpush1.bf16.msra.mxu0 0
          %3610 = vmatprep.subr.bf16.mxu0 0
          %3611 = vmatpush1.bf16.msra.mxu0 0
          %3612 = vmatprep.subr.bf16.mxu0 0
          %3613 = vmatpush1.bf16.msra.mxu0 0
          %3614 = vmatprep.subr.bf16.mxu0 0
          %3615 = vmatpush1.bf16.msra.mxu0 0
          %3616 = vmatprep.subr.bf16.mxu0 0
          %3617 = vmatpush1.bf16.msra.mxu0 0
          %3618 = vmatprep.subr.bf16.mxu0 0
          %3619 = vmatpush1.bf16.msra.mxu0 0
          %3620 = vmatprep.subr.bf16.mxu0 0
          %3621 = vmatpush1.bf16.msra.mxu0 0
          %3622 = vmatprep.subr.bf16.mxu0 0
          %3623 = vmatpush1.bf16.msra.mxu0 0
          %3624 = vmatprep.subr.bf16.mxu0 0
          %3625 = vmatpush1.bf16.msra.mxu0 0
          %3626 = vmatprep.subr.bf16.mxu0 0
          %3627 = vmatpush1.bf16.msra.mxu0 0
          %3628 = vmatprep.subr.bf16.mxu0 0
          %3629 = vmatpush1.bf16.msra.mxu0 0
          %3630 = vmatprep.subr.bf16.mxu0 0
          %3631 = vmatpush1.bf16.msra.mxu0 0
          %3632 = vmatprep.mubr.bf16.mxu0 0
          %3633 = vmatmul.mubr.bf16.gmra.mrb[0].mxu0 %v3073
          %v3634 = vpop.f32.mrb[0].mxu0
          %v3635 = vadd.f32 0.0, %v3634
          %v3636 = vpop.f32.mrb[0].mxu0
          %v3637 = vpop.f32.mrb[0].mxu0
          %v3638 = vpop.f32.mrb[0].mxu0
          %3639 = vdwg.mxu0
          %3642 = vrot.lane.b32.xlu0 %v3635, 32
          %v3643 = vpop.permute.xlu0 %3642
          %v3645 = vsel %vm1865, %v3489, %v3643
          %vm3646 = vcmask 517120
          %3647 = vst.msk [vmem:[#allocation7] sm:$0x3] %vm3646, %v3645
        $region76: #{tpu_custom_call.1} parent=55 // pred_fallthru
          _
        // Predicated region
        $region77: #{tpu_custom_call.1} parent=55 // pred_check
          %p3648 = pneg %p254
        $region78: #{tpu_custom_call.1} parent=55 // pred_check_branch
          %3650 = sbr.rel (%p3648) target = $region80
        $region79: #{tpu_custom_call.1} parent=55 // pred_region
          %s3652 = ssub.s32 32, 32
          %3653 = vsyncadd [#allocation6], %s3652
          %s3655 = sshll.u32 [#allocation7], 4
          %s3656 = int_to_ptr.vmem [resolvable:$true] %s3655
          %3658 = dma.vmem_to_hbm [thread:$0]  %s3656, 32, %s9, [#allocation6]
        $region80: #{tpu_custom_call.1} parent=55 // pred_fallthru
          _
        // Predicated region
        $region81: #{tpu_custom_call.1} parent=55 // pred_check
          %p3659 = pneg %p275
        $region82: #{tpu_custom_call.1} parent=55 // pred_check_branch
          %3661 = sbr.rel (%p3659) target = $region84
        $region83: #{tpu_custom_call.1} parent=55 // pred_region
          %s3663 = ssub.s32 128, 128
          %3664 = vsyncadd [#allocation9], %s3663
          %s3666 = sshll.u32 [#allocation8], 4
          %s3667 = int_to_ptr.vmem [resolvable:$true] %s3666
          %3669 = dma.vmem_to_hbm [thread:$0]  %s3667, 128, %s10, [#allocation9]
        $region84: #{tpu_custom_call.1} parent=55 // pred_fallthru
          _
        // Predicated region
        $region85: #{tpu_custom_call.1} parent=55 // pred_check
          %p3670 = pneg %p254
        $region86: #{tpu_custom_call.1} parent=55 // pred_check_branch
          %3672 = sbr.rel (%p3670) target = $region88
        $region87: #{tpu_custom_call.1} parent=55 // pred_region
          %3673 = dma.done [#allocation6], 32
        $region88: #{tpu_custom_call.1} parent=55 // pred_fallthru
          _
        // Predicated region
        $region89: #{tpu_custom_call.1} parent=55 // pred_check
          %p3674 = pneg %p275
        $region90: #{tpu_custom_call.1} parent=55 // pred_check_branch
          %3676 = sbr.rel (%p3674) target = $region92
        $region91: #{tpu_custom_call.1} parent=55 // pred_region
          %3677 = dma.done [#allocation9], 128
        $region92: #{tpu_custom_call.1} parent=55 // pred_fallthru
          _
      $region56: #{tpu_custom_call.1} parent=5 // pred_fallthru
        _
      %p3678 = scmp.le.s32.totalorder 2, %s20
      // Predicated region
      $region93: #{tpu_custom_call.1} parent=5 // pred_check
        %p3679 = pneg %p3678
      $region94: #{tpu_custom_call.1} parent=5 // pred_check_branch
        %3681 = sbr.rel (%p3679) target = $region96
      $region95: #{tpu_custom_call.1} parent=5 // pred_region
        %s3682 = ssub.s32 %s20, 2
      $region96: #{tpu_custom_call.1} parent=5 // pred_fallthru
        _
    $region6: #{tpu_custom_call.1} parent=1 // loop_footer
      %s24 = sadd.s32 1, %s20
    $region7: #{tpu_custom_call.1} parent=1 // loop_footer_branch
      %19 = sbr.rel target = $region3
    $region8: #{tpu_custom_call.1} parent=1 // loop_exit
      _
    %3683 = vsyncpa [#allocation5], 1
    %s3684 = scalar_lea.sflag [#allocation5], 1
    %3685 = vsyncpa %s3684, 1
    %3686 = vsyncpa [#allocation6], 1
    %s3687 = scalar_lea.sflag [#allocation6], 1
    %3688 = vsyncpa %s3687, 1
    %3689 = vsyncpa [#allocation9], 1

</llo_original>
